<compile_context>
chip_gen: v7x
topology: tpu7x:2x2x1
jax: 0.10.0
libtpu: 0.0.40
codegen_flags: <defaults>
</compile_context>

<pallas_src>
import jax
import jax.numpy as jnp
from jax import lax
from jax.experimental import pallas as pl
from jax.experimental.pallas import tpu as pltpu


def _round_up(x, m):
    return (x + m - 1) // m * m


# ----------------------------------------------------------------------------
# Fused decoder kernel: multi-layer LSTM recurrence + final Linear.
# Grid: (num_time_chunks,) -- sequential ("arbitrary") because state carries.
#
#   x_ref   : (tt, Bp, Pd)      padded input chunk (time-major)
#   w_ref   : (L, 2*Pd, 4*Pd)   fused [w_ih ; w_hh] per layer, pre-transposed,
#                               gates padded so each of i|f|g|o is Pd wide and
#                               starts on a 128-lane boundary
#   b_ref   : (L, 1, 4*Pd)      combined bias (b_ih + b_hh), same gate padding
#   fcw_ref : (Pd, Vp)          fc weight, pre-transposed + padded
#   fcb_ref : (1, Vp)           fc bias, padded
#   out_ref : (tt, Bp, Vp)      vocabulary scores for this chunk
#   cur     : (tt, Bp, Pd) VMEM current layer's input/output sequence
#   h_scr   : (L, Bp, Pd)  VMEM per-layer hidden state (persists across grid)
#   c_scr   : (L, Bp, Pd)  VMEM per-layer cell state   (persists across grid)
# Gate order follows PyTorch: i, f, g, o.
# ----------------------------------------------------------------------------
def decoder_kernel(x_ref, w_ref, b_ref, fcw_ref, fcb_ref, out_ref,
                   cur, h_scr, c_scr):
    tt, Bp, Pd = cur.shape
    L = w_ref.shape[0]
    Vp = out_ref.shape[2]

    @pl.when(pl.program_id(0) == 0)
    def _init():
        h_scr[...] = jnp.zeros_like(h_scr)
        c_scr[...] = jnp.zeros_like(c_scr)

    cur[...] = x_ref[...]

    for l in range(L):                                   # static unroll over layers
        w_l = w_ref[l]                                   # hoisted out of time loop
        b_l = jnp.broadcast_to(b_ref[l], (Bp, 4 * Pd))   # hoisted bias broadcast

        def step(t, carry, l=l, w_l=w_l, b_l=b_l):
            x_t = cur[t]                                           # (Bp, Pd)
            xh = jnp.concatenate([x_t, h_scr[l]], axis=1)          # (Bp, 2*Pd)
            # One fused MXU matmul for all 4 gates of this time step.
            gates = jnp.dot(xh, w_l, preferred_element_type=jnp.float32) + b_l
            i_g = jax.nn.sigmoid(gates[:, 0 * Pd:1 * Pd])          # 128-aligned
            f_g = jax.nn.sigmoid(gates[:, 1 * Pd:2 * Pd])
            g_g = jnp.tanh(gates[:, 2 * Pd:3 * Pd])
            o_g = jax.nn.sigmoid(gates[:, 3 * Pd:4 * Pd])
            c_new = f_g * c_scr[l] + i_g * g_g
            h_new = o_g * jnp.tanh(c_new)
            c_scr[l] = c_new
            h_scr[l] = h_new
            cur[t] = h_new                       # becomes next layer's input
            return carry

        lax.fori_loop(0, tt, step, 0, unroll=True)

    # Final Linear on the whole lane-dense hidden slab of this chunk.
    h_slab = cur[...].reshape(tt * Bp, Pd)
    logits = jnp.dot(h_slab, fcw_ref[...],
                     preferred_element_type=jnp.float32) + fcb_ref[...]
    out_ref[...] = logits.reshape(tt, Bp, Vp)


# ----------------------------------------------------------------------------
# Parameter packing: raw PyTorch-layout weights -> padded / fused / stacked.
# ----------------------------------------------------------------------------
def pack_params(raw, *, lane=128):
    E = raw["embed"].shape[1]
    H = raw["H"]
    V = raw["fc_w"].shape[0]
    L = len(raw["lstm"])
    Pd = _round_up(max(E, H), lane)     # shared, lane-aligned feature dim
    Vp = _round_up(V, lane)

    w_stack = jnp.zeros((L, 2 * Pd, 4 * Pd), jnp.float32)
    b_stack = jnp.zeros((L, 1, 4 * Pd), jnp.float32)
    for l, lay in enumerate(raw["lstm"]):
        din = E if l == 0 else H
        w_ih_t = lay["w_ih"].T                  # (Din, 4H)
        w_hh_t = lay["w_hh"].T                  # (H,  4H)
        b = lay["b_ih"] + lay["b_hh"]           # (4H,)
        for g in range(4):                      # place each gate on a 128 boundary
            w_stack = w_stack.at[l, 0:din, g * Pd:g * Pd + H].set(
                w_ih_t[:, g * H:(g + 1) * H])
            w_stack = w_stack.at[l, Pd:Pd + H, g * Pd:g * Pd + H].set(
                w_hh_t[:, g * H:(g + 1) * H])
            b_stack = b_stack.at[l, 0, g * Pd:g * Pd + H].set(b[g * H:(g + 1) * H])

    fc_w = jnp.zeros((Pd, Vp), jnp.float32).at[:H, :V].set(raw["fc_w"].T)
    fc_b = jnp.zeros((1, Vp), jnp.float32).at[0, :V].set(raw["fc_b"])

    return {"embed": raw["embed"], "w_stack": w_stack, "b_stack": b_stack,
            "fc_w": fc_w, "fc_b": fc_b,
            "E": E, "H": H, "V": V, "Pd": Pd, "Vp": Vp}


# ----------------------------------------------------------------------------
# Full Decoder forward (Pallas path).
# ----------------------------------------------------------------------------
def decoder_forward(packed, encoder_out, captions, *, time_tile=8):
    E, H, V = packed["E"], packed["H"], packed["V"]
    Pd, Vp = packed["Pd"], packed["Vp"]
    L = packed["w_stack"].shape[0]

    # Embedding lookup (plain JAX gather) + identity dropout (eval semantics).
    embeds = jnp.take(packed["embed"], captions, axis=0)            # (T, B, E)
    x = jnp.concatenate([encoder_out[None, :, :], embeds], axis=0)  # (T+1, B, E)
    Tp1, B, _ = x.shape

    Bp = _round_up(B, 8)
    tt = min(time_tile, _round_up(Tp1, 8))       # time-chunk length
    Tpad = _round_up(Tp1, tt)

    # Zero-padded, lane-dense input slab (padded rows/cols stay exactly zero).
    xp = jnp.zeros((Tpad, Bp, Pd), jnp.float32).at[:Tp1, :B, :E].set(x)

    out_padded = pl.pallas_call(
        decoder_kernel,
        out_shape=jax.ShapeDtypeStruct((Tpad, Bp, Vp), jnp.float32),
        grid=(Tpad // tt,),
        in_specs=[
            pl.BlockSpec((tt, Bp, Pd), lambda i: (i, 0, 0)),
            pl.BlockSpec((L, 2 * Pd, 4 * Pd), lambda i: (0, 0, 0)),
            pl.BlockSpec((L, 1, 4 * Pd), lambda i: (0, 0, 0)),
            pl.BlockSpec((Pd, Vp), lambda i: (0, 0)),
            pl.BlockSpec((1, Vp), lambda i: (0, 0)),
        ],
        out_specs=pl.BlockSpec((tt, Bp, Vp), lambda i: (i, 0, 0)),
        scratch_shapes=[
            pltpu.VMEM((tt, Bp, Pd), jnp.float32),   # cur (layer I/O sequence)
            pltpu.VMEM((L, Bp, Pd), jnp.float32),    # h state per layer
            pltpu.VMEM((L, Bp, Pd), jnp.float32),    # c state per layer
        ],
        compiler_params=pltpu.CompilerParams(
            # Time axis carries recurrent state -> must remain sequential.
            dimension_semantics=("arbitrary",),
            vmem_limit_bytes=32 * 1024 * 1024,
        ),
    )(xp, packed["w_stack"], packed["b_stack"], packed["fc_w"], packed["fc_b"])

    return out_padded[:Tp1, :B, :V]


# ----------------------------------------------------------------------------
# Pure-JAX reference (PyTorch semantics) for correctness checking.
# ----------------------------------------------------------------------------
def decoder_reference(raw, encoder_out, captions):
    H = raw["H"]
    embeds = jnp.take(raw["embed"], captions, axis=0)
    x = jnp.concatenate([encoder_out[None, :, :], embeds], axis=0)
    for lay in raw["lstm"]:
        T, B, _ = x.shape
        h = jnp.zeros((B, H), jnp.float32)
        c = jnp.zeros((B, H), jnp.float32)
        outs = []
        for t in range(T):
            gates = x[t] @ lay["w_ih"].T + h @ lay["w_hh"].T + lay["b_ih"] + lay["b_hh"]
            i_g = jax.nn.sigmoid(gates[:, 0 * H:1 * H])
            f_g = jax.nn.sigmoid(gates[:, 1 * H:2 * H])
            g_g = jnp.tanh(gates[:, 2 * H:3 * H])
            o_g = jax.nn.sigmoid(gates[:, 3 * H:4 * H])
            c = f_g * c + i_g * g_g
            h = o_g * jnp.tanh(c)
            outs.append(h)
        x = jnp.stack(outs, axis=0)
    return x @ raw["fc_w"].T + raw["fc_b"]


def init_raw_params(key, voc_size, embed_dim, decoder_dim, num_layers):
    ks = jax.random.split(key, 3 + 4 * num_layers)
    scale = 0.1
    raw = {
        "embed": scale * jax.random.normal(ks[0], (voc_size, embed_dim), jnp.float32),
        "lstm": [],
        "fc_w": scale * jax.random.normal(ks[1], (voc_size, decoder_dim), jnp.float32),
        "fc_b": scale * jax.random.normal(ks[2], (voc_size,), jnp.float32),
        "H": decoder_dim,
    }
    for l in range(num_layers):
        din = embed_dim if l == 0 else decoder_dim
        k0, k1, k2, k3 = ks[3 + 4 * l: 7 + 4 * l]
        raw["lstm"].append({
            "w_ih": scale * jax.random.normal(k0, (4 * decoder_dim, din), jnp.float32),
            "w_hh": scale * jax.random.normal(k1, (4 * decoder_dim, decoder_dim), jnp.float32),
            "b_ih": scale * jax.random.normal(k2, (4 * decoder_dim,), jnp.float32),
            "b_hh": scale * jax.random.normal(k3, (4 * decoder_dim,), jnp.float32),
        })
    return raw


if __name__ == "__main__":
    decoder_dim = 32
    embed_dim = 32
    voc_size = 50
    num_layers = 2
    batch = 2
    seq = 8

    key = jax.random.PRNGKey(0)
    k_par, k_enc, k_cap = jax.random.split(key, 3)

    raw = init_raw_params(k_par, voc_size, embed_dim, decoder_dim, num_layers)
    packed = pack_params(raw)

    encoder_out = jax.random.normal(k_enc, (batch, embed_dim), jnp.float32)
    captions = jax.random.randint(k_cap, (seq, batch), 0, voc_size, jnp.int32)

    out = decoder_forward(packed, encoder_out, captions)
    out = jax.block_until_ready(out)

    ref = decoder_reference(raw, encoder_out, captions)
    assert out.shape == (seq + 1, batch, voc_size), out.shape
    assert jnp.allclose(out, ref, atol=1e-4, rtol=1e-4), "mismatch vs reference"

    print("KERNEL_OK")
</pallas_src>

<mosaic_0001>
module attributes {stable_mosaic.version = 11 : i64} {
  func.func @decoder_kernel(%arg0: i32, %arg1: memref<8x8x128xf32, #tpu.memory_space<vmem>>, %arg2: memref<2x256x512xf32, #tpu.memory_space<vmem>>, %arg3: memref<2x1x512xf32, #tpu.memory_space<vmem>>, %arg4: memref<128x128xf32, #tpu.memory_space<vmem>>, %arg5: memref<1x128xf32, #tpu.memory_space<vmem>>, %arg6: memref<8x8x128xf32, #tpu.memory_space<vmem>>, %arg7: memref<8x8x128xf32, #tpu.memory_space<vmem>>, %arg8: memref<2x8x128xf32, #tpu.memory_space<vmem>>, %arg9: memref<2x8x128xf32, #tpu.memory_space<vmem>>) attributes {dimension_semantics = [#tpu.dimension_semantics<arbitrary>], iteration_bounds = array<i64: 2>, scalar_prefetch = 0 : i64, scratch_operands = 3 : i64, tpu.core_type = #tpu.core_type<tc>, window_params = [{transform_indices = @transform_0, window_bounds = array<i64: 8, 8, 128>}, {pipeline_mode = #tpu.pipeline_mode<synchronous>, transform_indices = @transform_1, window_bounds = array<i64: 2, 256, 512>}, {pipeline_mode = #tpu.pipeline_mode<synchronous>, transform_indices = @transform_2, window_bounds = array<i64: 2, 1, 512>}, {pipeline_mode = #tpu.pipeline_mode<synchronous>, transform_indices = @transform_3, window_bounds = array<i64: 128, 128>}, {pipeline_mode = #tpu.pipeline_mode<synchronous>, transform_indices = @transform_4, window_bounds = array<i64: 1, 128>}, {transform_indices = @transform_5, window_bounds = array<i64: 8, 8, 128>}]} {
    %c0_i32 = arith.constant 0 : i32
    %0 = arith.cmpi eq, %arg0, %c0_i32 : i32
    %1 = arith.extui %0 : i1 to i32
    %c0_i32_0 = arith.constant 0 : i32
    %2 = arith.cmpi ne, %1, %c0_i32_0 : i32
    scf.if %2 {
      %cst_357 = arith.constant 0.000000e+00 : f32
      %746 = vector.broadcast %cst_357 : f32 to vector<2x8x128xf32>
      %c0_358 = arith.constant 0 : index
      %c0_359 = arith.constant 0 : index
      %c0_360 = arith.constant 0 : index
      %747 = vector.load %arg8[%c0_358, %c0_359, %c0_360] : memref<2x8x128xf32, #tpu.memory_space<vmem>>, vector<2x8x128xf32>
      tpu.vector_store %arg8[%c0_358, %c0_359, %c0_360], %746 {strides = array<i32>} : memref<2x8x128xf32, #tpu.memory_space<vmem>>, vector<2x8x128xf32>,
      %cst_361 = arith.constant 0.000000e+00 : f32
      %748 = vector.broadcast %cst_361 : f32 to vector<2x8x128xf32>
      %c0_362 = arith.constant 0 : index
      %c0_363 = arith.constant 0 : index
      %c0_364 = arith.constant 0 : index
      %749 = vector.load %arg9[%c0_362, %c0_363, %c0_364] : memref<2x8x128xf32, #tpu.memory_space<vmem>>, vector<2x8x128xf32>
      tpu.vector_store %arg9[%c0_362, %c0_363, %c0_364], %748 {strides = array<i32>} : memref<2x8x128xf32, #tpu.memory_space<vmem>>, vector<2x8x128xf32>,
    } else {
    }
    %c0 = arith.constant 0 : index
    %c0_1 = arith.constant 0 : index
    %c0_2 = arith.constant 0 : index
    %3 = vector.load %arg1[%c0, %c0_1, %c0_2] : memref<8x8x128xf32, #tpu.memory_space<vmem>>, vector<8x8x128xf32>
    %c0_3 = arith.constant 0 : index
    %c0_4 = arith.constant 0 : index
    %c0_5 = arith.constant 0 : index
    %4 = vector.load %arg7[%c0_3, %c0_4, %c0_5] : memref<8x8x128xf32, #tpu.memory_space<vmem>>, vector<8x8x128xf32>
    tpu.vector_store %arg7[%c0_3, %c0_4, %c0_5], %3 {strides = array<i32>} : memref<8x8x128xf32, #tpu.memory_space<vmem>>, vector<8x8x128xf32>,
    %c0_6 = arith.constant 0 : index
    %c0_7 = arith.constant 0 : index
    %c0_8 = arith.constant 0 : index
    %5 = vector.load %arg2[%c0_6, %c0_7, %c0_8] : memref<2x256x512xf32, #tpu.memory_space<vmem>>, vector<1x256x512xf32>
    %6 = vector.shape_cast %5 : vector<1x256x512xf32> to vector<256x512xf32>
    %c0_9 = arith.constant 0 : index
    %c0_10 = arith.constant 0 : index
    %c0_11 = arith.constant 0 : index
    %7 = vector.load %arg3[%c0_9, %c0_10, %c0_11] : memref<2x1x512xf32, #tpu.memory_space<vmem>>, vector<1x1x512xf32>
    %8 = vector.shape_cast %7 : vector<1x1x512xf32> to vector<1x512xf32>
    %9 = vector.shape_cast %8 : vector<1x512xf32> to vector<1x512xf32>
    %10 = vector.broadcast %9 : vector<1x512xf32> to vector<8x512xf32>
    %c0_i32_12 = arith.constant 0 : i32
    %11 = arith.index_cast %c0_i32_12 : i32 to index
    %c0_13 = arith.constant 0 : index
    %c0_14 = arith.constant 0 : index
    %12 = vector.load %arg7[%11, %c0_13, %c0_14] : memref<8x8x128xf32, #tpu.memory_space<vmem>>, vector<1x8x128xf32>
    %13 = vector.shape_cast %12 : vector<1x8x128xf32> to vector<8x128xf32>
    %c0_15 = arith.constant 0 : index
    %c0_16 = arith.constant 0 : index
    %c0_17 = arith.constant 0 : index
    %14 = vector.load %arg8[%c0_15, %c0_16, %c0_17] : memref<2x8x128xf32, #tpu.memory_space<vmem>>, vector<1x8x128xf32>
    %15 = vector.shape_cast %14 : vector<1x8x128xf32> to vector<8x128xf32>
    %16 = tpu.concatenate %13, %15 in 1 : vector<8x128xf32>, vector<8x128xf32> -> vector<8x256xf32>
    %cst = arith.constant dense<0.000000e+00> : vector<8x512xf32>
    %17 = tpu.matmul %16, %6, %cst {dimension_numbers = #tpu.dot_dimension_numbers<[1], [0], [0], [1], [0, 0, 1, 1], [], []>} : vector<8x256xf32>, vector<256x512xf32>, vector<8x512xf32> -> vector<8x512xf32>
    %18 = arith.addf %17, %10 : vector<8x512xf32>
    %19 = vector.extract_strided_slice %18 {offsets = [0, 0], sizes = [8, 128], strides = [1, 1]} : vector<8x512xf32> to vector<8x128xf32>
    %20 = arith.negf %19 : vector<8x128xf32>
    %21 = math.exp %20 : vector<8x128xf32>
    %cst_18 = arith.constant 1.000000e+00 : f32
    %22 = vector.broadcast %cst_18 : f32 to vector<8x128xf32>
    %23 = arith.addf %22, %21 : vector<8x128xf32>
    %24 = arith.divf %22, %23 : vector<8x128xf32>
    %25 = vector.extract_strided_slice %18 {offsets = [0, 128], sizes = [8, 128], strides = [1, 1]} : vector<8x512xf32> to vector<8x128xf32>
    %26 = arith.negf %25 : vector<8x128xf32>
    %27 = math.exp %26 : vector<8x128xf32>
    %cst_19 = arith.constant 1.000000e+00 : f32
    %28 = vector.broadcast %cst_19 : f32 to vector<8x128xf32>
    %29 = arith.addf %28, %27 : vector<8x128xf32>
    %30 = arith.divf %28, %29 : vector<8x128xf32>
    %31 = vector.extract_strided_slice %18 {offsets = [0, 256], sizes = [8, 128], strides = [1, 1]} : vector<8x512xf32> to vector<8x128xf32>
    %32 = math.tanh %31 : vector<8x128xf32>
    %33 = vector.extract_strided_slice %18 {offsets = [0, 384], sizes = [8, 128], strides = [1, 1]} : vector<8x512xf32> to vector<8x128xf32>
    %34 = arith.negf %33 : vector<8x128xf32>
    %35 = math.exp %34 : vector<8x128xf32>
    %cst_20 = arith.constant 1.000000e+00 : f32
    %36 = vector.broadcast %cst_20 : f32 to vector<8x128xf32>
    %37 = arith.addf %36, %35 : vector<8x128xf32>
    %38 = arith.divf %36, %37 : vector<8x128xf32>
    %c0_21 = arith.constant 0 : index
    %c0_22 = arith.constant 0 : index
    %c0_23 = arith.constant 0 : index
    %39 = vector.load %arg9[%c0_21, %c0_22, %c0_23] : memref<2x8x128xf32, #tpu.memory_space<vmem>>, vector<1x8x128xf32>
    %40 = vector.shape_cast %39 : vector<1x8x128xf32> to vector<8x128xf32>
    %41 = arith.mulf %30, %40 : vector<8x128xf32>
    %42 = arith.mulf %24, %32 : vector<8x128xf32>
    %43 = arith.addf %41, %42 : vector<8x128xf32>
    %44 = math.tanh %43 : vector<8x128xf32>
    %45 = arith.mulf %38, %44 : vector<8x128xf32>
    %c0_24 = arith.constant 0 : index
    %c0_25 = arith.constant 0 : index
    %c0_26 = arith.constant 0 : index
    %46 = vector.load %arg9[%c0_24, %c0_25, %c0_26] : memref<2x8x128xf32, #tpu.memory_space<vmem>>, vector<1x8x128xf32>
    %47 = vector.shape_cast %46 : vector<1x8x128xf32> to vector<8x128xf32>
    %48 = vector.shape_cast %43 : vector<8x128xf32> to vector<1x8x128xf32>
    tpu.vector_store %arg9[%c0_24, %c0_25, %c0_26], %48 {strides = array<i32>} : memref<2x8x128xf32, #tpu.memory_space<vmem>>, vector<1x8x128xf32>,
    %c0_27 = arith.constant 0 : index
    %c0_28 = arith.constant 0 : index
    %c0_29 = arith.constant 0 : index
    %49 = vector.load %arg8[%c0_27, %c0_28, %c0_29] : memref<2x8x128xf32, #tpu.memory_space<vmem>>, vector<1x8x128xf32>
    %50 = vector.shape_cast %49 : vector<1x8x128xf32> to vector<8x128xf32>
    %51 = vector.shape_cast %45 : vector<8x128xf32> to vector<1x8x128xf32>
    tpu.vector_store %arg8[%c0_27, %c0_28, %c0_29], %51 {strides = array<i32>} : memref<2x8x128xf32, #tpu.memory_space<vmem>>, vector<1x8x128xf32>,
    %52 = arith.index_cast %c0_i32_12 : i32 to index
    %c0_30 = arith.constant 0 : index
    %c0_31 = arith.constant 0 : index
    %53 = vector.load %arg7[%52, %c0_30, %c0_31] : memref<8x8x128xf32, #tpu.memory_space<vmem>>, vector<1x8x128xf32>
    %54 = vector.shape_cast %53 : vector<1x8x128xf32> to vector<8x128xf32>
    %55 = vector.shape_cast %45 : vector<8x128xf32> to vector<1x8x128xf32>
    tpu.vector_store %arg7[%52, %c0_30, %c0_31], %55 {strides = array<i32>} : memref<8x8x128xf32, #tpu.memory_space<vmem>>, vector<1x8x128xf32>,
    %c1_i32 = arith.constant 1 : i32
    %56 = arith.index_cast %c1_i32 : i32 to index
    %c0_32 = arith.constant 0 : index
    %c0_33 = arith.constant 0 : index
    %57 = vector.load %arg7[%56, %c0_32, %c0_33] : memref<8x8x128xf32, #tpu.memory_space<vmem>>, vector<1x8x128xf32>
    %58 = vector.shape_cast %57 : vector<1x8x128xf32> to vector<8x128xf32>
    %c0_34 = arith.constant 0 : index
    %c0_35 = arith.constant 0 : index
    %c0_36 = arith.constant 0 : index
    %59 = vector.load %arg8[%c0_34, %c0_35, %c0_36] : memref<2x8x128xf32, #tpu.memory_space<vmem>>, vector<1x8x128xf32>
    %60 = vector.shape_cast %59 : vector<1x8x128xf32> to vector<8x128xf32>
    %61 = tpu.concatenate %58, %60 in 1 : vector<8x128xf32>, vector<8x128xf32> -> vector<8x256xf32>
    %cst_37 = arith.constant dense<0.000000e+00> : vector<8x512xf32>
    %62 = tpu.matmul %61, %6, %cst_37 {dimension_numbers = #tpu.dot_dimension_numbers<[1], [0], [0], [1], [0, 0, 1, 1], [], []>} : vector<8x256xf32>, vector<256x512xf32>, vector<8x512xf32> -> vector<8x512xf32>
    %63 = arith.addf %62, %10 : vector<8x512xf32>
    %64 = vector.extract_strided_slice %63 {offsets = [0, 0], sizes = [8, 128], strides = [1, 1]} : vector<8x512xf32> to vector<8x128xf32>
    %65 = arith.negf %64 : vector<8x128xf32>
    %66 = math.exp %65 : vector<8x128xf32>
    %cst_38 = arith.constant 1.000000e+00 : f32
    %67 = vector.broadcast %cst_38 : f32 to vector<8x128xf32>
    %68 = arith.addf %67, %66 : vector<8x128xf32>
    %69 = arith.divf %67, %68 : vector<8x128xf32>
    %70 = vector.extract_strided_slice %63 {offsets = [0, 128], sizes = [8, 128], strides = [1, 1]} : vector<8x512xf32> to vector<8x128xf32>
    %71 = arith.negf %70 : vector<8x128xf32>
    %72 = math.exp %71 : vector<8x128xf32>
    %cst_39 = arith.constant 1.000000e+00 : f32
    %73 = vector.broadcast %cst_39 : f32 to vector<8x128xf32>
    %74 = arith.addf %73, %72 : vector<8x128xf32>
    %75 = arith.divf %73, %74 : vector<8x128xf32>
    %76 = vector.extract_strided_slice %63 {offsets = [0, 256], sizes = [8, 128], strides = [1, 1]} : vector<8x512xf32> to vector<8x128xf32>
    %77 = math.tanh %76 : vector<8x128xf32>
    %78 = vector.extract_strided_slice %63 {offsets = [0, 384], sizes = [8, 128], strides = [1, 1]} : vector<8x512xf32> to vector<8x128xf32>
    %79 = arith.negf %78 : vector<8x128xf32>
    %80 = math.exp %79 : vector<8x128xf32>
    %cst_40 = arith.constant 1.000000e+00 : f32
    %81 = vector.broadcast %cst_40 : f32 to vector<8x128xf32>
    %82 = arith.addf %81, %80 : vector<8x128xf32>
    %83 = arith.divf %81, %82 : vector<8x128xf32>
    %c0_41 = arith.constant 0 : index
    %c0_42 = arith.constant 0 : index
    %c0_43 = arith.constant 0 : index
    %84 = vector.load %arg9[%c0_41, %c0_42, %c0_43] : memref<2x8x128xf32, #tpu.memory_space<vmem>>, vector<1x8x128xf32>
    %85 = vector.shape_cast %84 : vector<1x8x128xf32> to vector<8x128xf32>
    %86 = arith.mulf %75, %85 : vector<8x128xf32>
    %87 = arith.mulf %69, %77 : vector<8x128xf32>
    %88 = arith.addf %86, %87 : vector<8x128xf32>
    %89 = math.tanh %88 : vector<8x128xf32>
    %90 = arith.mulf %83, %89 : vector<8x128xf32>
    %c0_44 = arith.constant 0 : index
    %c0_45 = arith.constant 0 : index
    %c0_46 = arith.constant 0 : index
    %91 = vector.load %arg9[%c0_44, %c0_45, %c0_46] : memref<2x8x128xf32, #tpu.memory_space<vmem>>, vector<1x8x128xf32>
    %92 = vector.shape_cast %91 : vector<1x8x128xf32> to vector<8x128xf32>
    %93 = vector.shape_cast %88 : vector<8x128xf32> to vector<1x8x128xf32>
    tpu.vector_store %arg9[%c0_44, %c0_45, %c0_46], %93 {strides = array<i32>} : memref<2x8x128xf32, #tpu.memory_space<vmem>>, vector<1x8x128xf32>,
    %c0_47 = arith.constant 0 : index
    %c0_48 = arith.constant 0 : index
    %c0_49 = arith.constant 0 : index
    %94 = vector.load %arg8[%c0_47, %c0_48, %c0_49] : memref<2x8x128xf32, #tpu.memory_space<vmem>>, vector<1x8x128xf32>
    %95 = vector.shape_cast %94 : vector<1x8x128xf32> to vector<8x128xf32>
    %96 = vector.shape_cast %90 : vector<8x128xf32> to vector<1x8x128xf32>
    tpu.vector_store %arg8[%c0_47, %c0_48, %c0_49], %96 {strides = array<i32>} : memref<2x8x128xf32, #tpu.memory_space<vmem>>, vector<1x8x128xf32>,
    %97 = arith.index_cast %c1_i32 : i32 to index
    %c0_50 = arith.constant 0 : index
    %c0_51 = arith.constant 0 : index
    %98 = vector.load %arg7[%97, %c0_50, %c0_51] : memref<8x8x128xf32, #tpu.memory_space<vmem>>, vector<1x8x128xf32>
    %99 = vector.shape_cast %98 : vector<1x8x128xf32> to vector<8x128xf32>
    %100 = vector.shape_cast %90 : vector<8x128xf32> to vector<1x8x128xf32>
    tpu.vector_store %arg7[%97, %c0_50, %c0_51], %100 {strides = array<i32>} : memref<8x8x128xf32, #tpu.memory_space<vmem>>, vector<1x8x128xf32>,
    %c2_i32 = arith.constant 2 : i32
    %101 = arith.index_cast %c2_i32 : i32 to index
    %c0_52 = arith.constant 0 : index
    %c0_53 = arith.constant 0 : index
    %102 = vector.load %arg7[%101, %c0_52, %c0_53] : memref<8x8x128xf32, #tpu.memory_space<vmem>>, vector<1x8x128xf32>
    %103 = vector.shape_cast %102 : vector<1x8x128xf32> to vector<8x128xf32>
    %c0_54 = arith.constant 0 : index
    %c0_55 = arith.constant 0 : index
    %c0_56 = arith.constant 0 : index
    %104 = vector.load %arg8[%c0_54, %c0_55, %c0_56] : memref<2x8x128xf32, #tpu.memory_space<vmem>>, vector<1x8x128xf32>
    %105 = vector.shape_cast %104 : vector<1x8x128xf32> to vector<8x128xf32>
    %106 = tpu.concatenate %103, %105 in 1 : vector<8x128xf32>, vector<8x128xf32> -> vector<8x256xf32>
    %cst_57 = arith.constant dense<0.000000e+00> : vector<8x512xf32>
    %107 = tpu.matmul %106, %6, %cst_57 {dimension_numbers = #tpu.dot_dimension_numbers<[1], [0], [0], [1], [0, 0, 1, 1], [], []>} : vector<8x256xf32>, vector<256x512xf32>, vector<8x512xf32> -> vector<8x512xf32>
    %108 = arith.addf %107, %10 : vector<8x512xf32>
    %109 = vector.extract_strided_slice %108 {offsets = [0, 0], sizes = [8, 128], strides = [1, 1]} : vector<8x512xf32> to vector<8x128xf32>
    %110 = arith.negf %109 : vector<8x128xf32>
    %111 = math.exp %110 : vector<8x128xf32>
    %cst_58 = arith.constant 1.000000e+00 : f32
    %112 = vector.broadcast %cst_58 : f32 to vector<8x128xf32>
    %113 = arith.addf %112, %111 : vector<8x128xf32>
    %114 = arith.divf %112, %113 : vector<8x128xf32>
    %115 = vector.extract_strided_slice %108 {offsets = [0, 128], sizes = [8, 128], strides = [1, 1]} : vector<8x512xf32> to vector<8x128xf32>
    %116 = arith.negf %115 : vector<8x128xf32>
    %117 = math.exp %116 : vector<8x128xf32>
    %cst_59 = arith.constant 1.000000e+00 : f32
    %118 = vector.broadcast %cst_59 : f32 to vector<8x128xf32>
    %119 = arith.addf %118, %117 : vector<8x128xf32>
    %120 = arith.divf %118, %119 : vector<8x128xf32>
    %121 = vector.extract_strided_slice %108 {offsets = [0, 256], sizes = [8, 128], strides = [1, 1]} : vector<8x512xf32> to vector<8x128xf32>
    %122 = math.tanh %121 : vector<8x128xf32>
    %123 = vector.extract_strided_slice %108 {offsets = [0, 384], sizes = [8, 128], strides = [1, 1]} : vector<8x512xf32> to vector<8x128xf32>
    %124 = arith.negf %123 : vector<8x128xf32>
    %125 = math.exp %124 : vector<8x128xf32>
    %cst_60 = arith.constant 1.000000e+00 : f32
    %126 = vector.broadcast %cst_60 : f32 to vector<8x128xf32>
    %127 = arith.addf %126, %125 : vector<8x128xf32>
    %128 = arith.divf %126, %127 : vector<8x128xf32>
    %c0_61 = arith.constant 0 : index
    %c0_62 = arith.constant 0 : index
    %c0_63 = arith.constant 0 : index
    %129 = vector.load %arg9[%c0_61, %c0_62, %c0_63] : memref<2x8x128xf32, #tpu.memory_space<vmem>>, vector<1x8x128xf32>
    %130 = vector.shape_cast %129 : vector<1x8x128xf32> to vector<8x128xf32>
    %131 = arith.mulf %120, %130 : vector<8x128xf32>
    %132 = arith.mulf %114, %122 : vector<8x128xf32>
    %133 = arith.addf %131, %132 : vector<8x128xf32>
    %134 = math.tanh %133 : vector<8x128xf32>
    %135 = arith.mulf %128, %134 : vector<8x128xf32>
    %c0_64 = arith.constant 0 : index
    %c0_65 = arith.constant 0 : index
    %c0_66 = arith.constant 0 : index
    %136 = vector.load %arg9[%c0_64, %c0_65, %c0_66] : memref<2x8x128xf32, #tpu.memory_space<vmem>>, vector<1x8x128xf32>
    %137 = vector.shape_cast %136 : vector<1x8x128xf32> to vector<8x128xf32>
    %138 = vector.shape_cast %133 : vector<8x128xf32> to vector<1x8x128xf32>
    tpu.vector_store %arg9[%c0_64, %c0_65, %c0_66], %138 {strides = array<i32>} : memref<2x8x128xf32, #tpu.memory_space<vmem>>, vector<1x8x128xf32>,
    %c0_67 = arith.constant 0 : index
    %c0_68 = arith.constant 0 : index
    %c0_69 = arith.constant 0 : index
    %139 = vector.load %arg8[%c0_67, %c0_68, %c0_69] : memref<2x8x128xf32, #tpu.memory_space<vmem>>, vector<1x8x128xf32>
    %140 = vector.shape_cast %139 : vector<1x8x128xf32> to vector<8x128xf32>
    %141 = vector.shape_cast %135 : vector<8x128xf32> to vector<1x8x128xf32>
    tpu.vector_store %arg8[%c0_67, %c0_68, %c0_69], %141 {strides = array<i32>} : memref<2x8x128xf32, #tpu.memory_space<vmem>>, vector<1x8x128xf32>,
    %142 = arith.index_cast %c2_i32 : i32 to index
    %c0_70 = arith.constant 0 : index
    %c0_71 = arith.constant 0 : index
    %143 = vector.load %arg7[%142, %c0_70, %c0_71] : memref<8x8x128xf32, #tpu.memory_space<vmem>>, vector<1x8x128xf32>
    %144 = vector.shape_cast %143 : vector<1x8x128xf32> to vector<8x128xf32>
    %145 = vector.shape_cast %135 : vector<8x128xf32> to vector<1x8x128xf32>
    tpu.vector_store %arg7[%142, %c0_70, %c0_71], %145 {strides = array<i32>} : memref<8x8x128xf32, #tpu.memory_space<vmem>>, vector<1x8x128xf32>,
    %c3_i32 = arith.constant 3 : i32
    %146 = arith.index_cast %c3_i32 : i32 to index
    %c0_72 = arith.constant 0 : index
    %c0_73 = arith.constant 0 : index
    %147 = vector.load %arg7[%146, %c0_72, %c0_73] : memref<8x8x128xf32, #tpu.memory_space<vmem>>, vector<1x8x128xf32>
    %148 = vector.shape_cast %147 : vector<1x8x128xf32> to vector<8x128xf32>
    %c0_74 = arith.constant 0 : index
    %c0_75 = arith.constant 0 : index
    %c0_76 = arith.constant 0 : index
    %149 = vector.load %arg8[%c0_74, %c0_75, %c0_76] : memref<2x8x128xf32, #tpu.memory_space<vmem>>, vector<1x8x128xf32>
    %150 = vector.shape_cast %149 : vector<1x8x128xf32> to vector<8x128xf32>
    %151 = tpu.concatenate %148, %150 in 1 : vector<8x128xf32>, vector<8x128xf32> -> vector<8x256xf32>
    %cst_77 = arith.constant dense<0.000000e+00> : vector<8x512xf32>
    %152 = tpu.matmul %151, %6, %cst_77 {dimension_numbers = #tpu.dot_dimension_numbers<[1], [0], [0], [1], [0, 0, 1, 1], [], []>} : vector<8x256xf32>, vector<256x512xf32>, vector<8x512xf32> -> vector<8x512xf32>
    %153 = arith.addf %152, %10 : vector<8x512xf32>
    %154 = vector.extract_strided_slice %153 {offsets = [0, 0], sizes = [8, 128], strides = [1, 1]} : vector<8x512xf32> to vector<8x128xf32>
    %155 = arith.negf %154 : vector<8x128xf32>
    %156 = math.exp %155 : vector<8x128xf32>
    %cst_78 = arith.constant 1.000000e+00 : f32
    %157 = vector.broadcast %cst_78 : f32 to vector<8x128xf32>
    %158 = arith.addf %157, %156 : vector<8x128xf32>
    %159 = arith.divf %157, %158 : vector<8x128xf32>
    %160 = vector.extract_strided_slice %153 {offsets = [0, 128], sizes = [8, 128], strides = [1, 1]} : vector<8x512xf32> to vector<8x128xf32>
    %161 = arith.negf %160 : vector<8x128xf32>
    %162 = math.exp %161 : vector<8x128xf32>
    %cst_79 = arith.constant 1.000000e+00 : f32
    %163 = vector.broadcast %cst_79 : f32 to vector<8x128xf32>
    %164 = arith.addf %163, %162 : vector<8x128xf32>
    %165 = arith.divf %163, %164 : vector<8x128xf32>
    %166 = vector.extract_strided_slice %153 {offsets = [0, 256], sizes = [8, 128], strides = [1, 1]} : vector<8x512xf32> to vector<8x128xf32>
    %167 = math.tanh %166 : vector<8x128xf32>
    %168 = vector.extract_strided_slice %153 {offsets = [0, 384], sizes = [8, 128], strides = [1, 1]} : vector<8x512xf32> to vector<8x128xf32>
    %169 = arith.negf %168 : vector<8x128xf32>
    %170 = math.exp %169 : vector<8x128xf32>
    %cst_80 = arith.constant 1.000000e+00 : f32
    %171 = vector.broadcast %cst_80 : f32 to vector<8x128xf32>
    %172 = arith.addf %171, %170 : vector<8x128xf32>
    %173 = arith.divf %171, %172 : vector<8x128xf32>
    %c0_81 = arith.constant 0 : index
    %c0_82 = arith.constant 0 : index
    %c0_83 = arith.constant 0 : index
    %174 = vector.load %arg9[%c0_81, %c0_82, %c0_83] : memref<2x8x128xf32, #tpu.memory_space<vmem>>, vector<1x8x128xf32>
    %175 = vector.shape_cast %174 : vector<1x8x128xf32> to vector<8x128xf32>
    %176 = arith.mulf %165, %175 : vector<8x128xf32>
    %177 = arith.mulf %159, %167 : vector<8x128xf32>
    %178 = arith.addf %176, %177 : vector<8x128xf32>
    %179 = math.tanh %178 : vector<8x128xf32>
    %180 = arith.mulf %173, %179 : vector<8x128xf32>
    %c0_84 = arith.constant 0 : index
    %c0_85 = arith.constant 0 : index
    %c0_86 = arith.constant 0 : index
    %181 = vector.load %arg9[%c0_84, %c0_85, %c0_86] : memref<2x8x128xf32, #tpu.memory_space<vmem>>, vector<1x8x128xf32>
    %182 = vector.shape_cast %181 : vector<1x8x128xf32> to vector<8x128xf32>
    %183 = vector.shape_cast %178 : vector<8x128xf32> to vector<1x8x128xf32>
    tpu.vector_store %arg9[%c0_84, %c0_85, %c0_86], %183 {strides = array<i32>} : memref<2x8x128xf32, #tpu.memory_space<vmem>>, vector<1x8x128xf32>,
    %c0_87 = arith.constant 0 : index
    %c0_88 = arith.constant 0 : index
    %c0_89 = arith.constant 0 : index
    %184 = vector.load %arg8[%c0_87, %c0_88, %c0_89] : memref<2x8x128xf32, #tpu.memory_space<vmem>>, vector<1x8x128xf32>
    %185 = vector.shape_cast %184 : vector<1x8x128xf32> to vector<8x128xf32>
    %186 = vector.shape_cast %180 : vector<8x128xf32> to vector<1x8x128xf32>
    tpu.vector_store %arg8[%c0_87, %c0_88, %c0_89], %186 {strides = array<i32>} : memref<2x8x128xf32, #tpu.memory_space<vmem>>, vector<1x8x128xf32>,
    %187 = arith.index_cast %c3_i32 : i32 to index
    %c0_90 = arith.constant 0 : index
    %c0_91 = arith.constant 0 : index
    %188 = vector.load %arg7[%187, %c0_90, %c0_91] : memref<8x8x128xf32, #tpu.memory_space<vmem>>, vector<1x8x128xf32>
    %189 = vector.shape_cast %188 : vector<1x8x128xf32> to vector<8x128xf32>
    %190 = vector.shape_cast %180 : vector<8x128xf32> to vector<1x8x128xf32>
    tpu.vector_store %arg7[%187, %c0_90, %c0_91], %190 {strides = array<i32>} : memref<8x8x128xf32, #tpu.memory_space<vmem>>, vector<1x8x128xf32>,
    %c4_i32 = arith.constant 4 : i32
    %191 = arith.index_cast %c4_i32 : i32 to index
    %c0_92 = arith.constant 0 : index
    %c0_93 = arith.constant 0 : index
    %192 = vector.load %arg7[%191, %c0_92, %c0_93] : memref<8x8x128xf32, #tpu.memory_space<vmem>>, vector<1x8x128xf32>
    %193 = vector.shape_cast %192 : vector<1x8x128xf32> to vector<8x128xf32>
    %c0_94 = arith.constant 0 : index
    %c0_95 = arith.constant 0 : index
    %c0_96 = arith.constant 0 : index
    %194 = vector.load %arg8[%c0_94, %c0_95, %c0_96] : memref<2x8x128xf32, #tpu.memory_space<vmem>>, vector<1x8x128xf32>
    %195 = vector.shape_cast %194 : vector<1x8x128xf32> to vector<8x128xf32>
    %196 = tpu.concatenate %193, %195 in 1 : vector<8x128xf32>, vector<8x128xf32> -> vector<8x256xf32>
    %cst_97 = arith.constant dense<0.000000e+00> : vector<8x512xf32>
    %197 = tpu.matmul %196, %6, %cst_97 {dimension_numbers = #tpu.dot_dimension_numbers<[1], [0], [0], [1], [0, 0, 1, 1], [], []>} : vector<8x256xf32>, vector<256x512xf32>, vector<8x512xf32> -> vector<8x512xf32>
    %198 = arith.addf %197, %10 : vector<8x512xf32>
    %199 = vector.extract_strided_slice %198 {offsets = [0, 0], sizes = [8, 128], strides = [1, 1]} : vector<8x512xf32> to vector<8x128xf32>
    %200 = arith.negf %199 : vector<8x128xf32>
    %201 = math.exp %200 : vector<8x128xf32>
    %cst_98 = arith.constant 1.000000e+00 : f32
    %202 = vector.broadcast %cst_98 : f32 to vector<8x128xf32>
    %203 = arith.addf %202, %201 : vector<8x128xf32>
    %204 = arith.divf %202, %203 : vector<8x128xf32>
    %205 = vector.extract_strided_slice %198 {offsets = [0, 128], sizes = [8, 128], strides = [1, 1]} : vector<8x512xf32> to vector<8x128xf32>
    %206 = arith.negf %205 : vector<8x128xf32>
    %207 = math.exp %206 : vector<8x128xf32>
    %cst_99 = arith.constant 1.000000e+00 : f32
    %208 = vector.broadcast %cst_99 : f32 to vector<8x128xf32>
    %209 = arith.addf %208, %207 : vector<8x128xf32>
    %210 = arith.divf %208, %209 : vector<8x128xf32>
    %211 = vector.extract_strided_slice %198 {offsets = [0, 256], sizes = [8, 128], strides = [1, 1]} : vector<8x512xf32> to vector<8x128xf32>
    %212 = math.tanh %211 : vector<8x128xf32>
    %213 = vector.extract_strided_slice %198 {offsets = [0, 384], sizes = [8, 128], strides = [1, 1]} : vector<8x512xf32> to vector<8x128xf32>
    %214 = arith.negf %213 : vector<8x128xf32>
    %215 = math.exp %214 : vector<8x128xf32>
    %cst_100 = arith.constant 1.000000e+00 : f32
    %216 = vector.broadcast %cst_100 : f32 to vector<8x128xf32>
    %217 = arith.addf %216, %215 : vector<8x128xf32>
    %218 = arith.divf %216, %217 : vector<8x128xf32>
    %c0_101 = arith.constant 0 : index
    %c0_102 = arith.constant 0 : index
    %c0_103 = arith.constant 0 : index
    %219 = vector.load %arg9[%c0_101, %c0_102, %c0_103] : memref<2x8x128xf32, #tpu.memory_space<vmem>>, vector<1x8x128xf32>
    %220 = vector.shape_cast %219 : vector<1x8x128xf32> to vector<8x128xf32>
    %221 = arith.mulf %210, %220 : vector<8x128xf32>
    %222 = arith.mulf %204, %212 : vector<8x128xf32>
    %223 = arith.addf %221, %222 : vector<8x128xf32>
    %224 = math.tanh %223 : vector<8x128xf32>
    %225 = arith.mulf %218, %224 : vector<8x128xf32>
    %c0_104 = arith.constant 0 : index
    %c0_105 = arith.constant 0 : index
    %c0_106 = arith.constant 0 : index
    %226 = vector.load %arg9[%c0_104, %c0_105, %c0_106] : memref<2x8x128xf32, #tpu.memory_space<vmem>>, vector<1x8x128xf32>
    %227 = vector.shape_cast %226 : vector<1x8x128xf32> to vector<8x128xf32>
    %228 = vector.shape_cast %223 : vector<8x128xf32> to vector<1x8x128xf32>
    tpu.vector_store %arg9[%c0_104, %c0_105, %c0_106], %228 {strides = array<i32>} : memref<2x8x128xf32, #tpu.memory_space<vmem>>, vector<1x8x128xf32>,
    %c0_107 = arith.constant 0 : index
    %c0_108 = arith.constant 0 : index
    %c0_109 = arith.constant 0 : index
    %229 = vector.load %arg8[%c0_107, %c0_108, %c0_109] : memref<2x8x128xf32, #tpu.memory_space<vmem>>, vector<1x8x128xf32>
    %230 = vector.shape_cast %229 : vector<1x8x128xf32> to vector<8x128xf32>
    %231 = vector.shape_cast %225 : vector<8x128xf32> to vector<1x8x128xf32>
    tpu.vector_store %arg8[%c0_107, %c0_108, %c0_109], %231 {strides = array<i32>} : memref<2x8x128xf32, #tpu.memory_space<vmem>>, vector<1x8x128xf32>,
    %232 = arith.index_cast %c4_i32 : i32 to index
    %c0_110 = arith.constant 0 : index
    %c0_111 = arith.constant 0 : index
    %233 = vector.load %arg7[%232, %c0_110, %c0_111] : memref<8x8x128xf32, #tpu.memory_space<vmem>>, vector<1x8x128xf32>
    %234 = vector.shape_cast %233 : vector<1x8x128xf32> to vector<8x128xf32>
    %235 = vector.shape_cast %225 : vector<8x128xf32> to vector<1x8x128xf32>
    tpu.vector_store %arg7[%232, %c0_110, %c0_111], %235 {strides = array<i32>} : memref<8x8x128xf32, #tpu.memory_space<vmem>>, vector<1x8x128xf32>,
    %c5_i32 = arith.constant 5 : i32
    %236 = arith.index_cast %c5_i32 : i32 to index
    %c0_112 = arith.constant 0 : index
    %c0_113 = arith.constant 0 : index
    %237 = vector.load %arg7[%236, %c0_112, %c0_113] : memref<8x8x128xf32, #tpu.memory_space<vmem>>, vector<1x8x128xf32>
    %238 = vector.shape_cast %237 : vector<1x8x128xf32> to vector<8x128xf32>
    %c0_114 = arith.constant 0 : index
    %c0_115 = arith.constant 0 : index
    %c0_116 = arith.constant 0 : index
    %239 = vector.load %arg8[%c0_114, %c0_115, %c0_116] : memref<2x8x128xf32, #tpu.memory_space<vmem>>, vector<1x8x128xf32>
    %240 = vector.shape_cast %239 : vector<1x8x128xf32> to vector<8x128xf32>
    %241 = tpu.concatenate %238, %240 in 1 : vector<8x128xf32>, vector<8x128xf32> -> vector<8x256xf32>
    %cst_117 = arith.constant dense<0.000000e+00> : vector<8x512xf32>
    %242 = tpu.matmul %241, %6, %cst_117 {dimension_numbers = #tpu.dot_dimension_numbers<[1], [0], [0], [1], [0, 0, 1, 1], [], []>} : vector<8x256xf32>, vector<256x512xf32>, vector<8x512xf32> -> vector<8x512xf32>
    %243 = arith.addf %242, %10 : vector<8x512xf32>
    %244 = vector.extract_strided_slice %243 {offsets = [0, 0], sizes = [8, 128], strides = [1, 1]} : vector<8x512xf32> to vector<8x128xf32>
    %245 = arith.negf %244 : vector<8x128xf32>
    %246 = math.exp %245 : vector<8x128xf32>
    %cst_118 = arith.constant 1.000000e+00 : f32
    %247 = vector.broadcast %cst_118 : f32 to vector<8x128xf32>
    %248 = arith.addf %247, %246 : vector<8x128xf32>
    %249 = arith.divf %247, %248 : vector<8x128xf32>
    %250 = vector.extract_strided_slice %243 {offsets = [0, 128], sizes = [8, 128], strides = [1, 1]} : vector<8x512xf32> to vector<8x128xf32>
    %251 = arith.negf %250 : vector<8x128xf32>
    %252 = math.exp %251 : vector<8x128xf32>
    %cst_119 = arith.constant 1.000000e+00 : f32
    %253 = vector.broadcast %cst_119 : f32 to vector<8x128xf32>
    %254 = arith.addf %253, %252 : vector<8x128xf32>
    %255 = arith.divf %253, %254 : vector<8x128xf32>
    %256 = vector.extract_strided_slice %243 {offsets = [0, 256], sizes = [8, 128], strides = [1, 1]} : vector<8x512xf32> to vector<8x128xf32>
    %257 = math.tanh %256 : vector<8x128xf32>
    %258 = vector.extract_strided_slice %243 {offsets = [0, 384], sizes = [8, 128], strides = [1, 1]} : vector<8x512xf32> to vector<8x128xf32>
    %259 = arith.negf %258 : vector<8x128xf32>
    %260 = math.exp %259 : vector<8x128xf32>
    %cst_120 = arith.constant 1.000000e+00 : f32
    %261 = vector.broadcast %cst_120 : f32 to vector<8x128xf32>
    %262 = arith.addf %261, %260 : vector<8x128xf32>
    %263 = arith.divf %261, %262 : vector<8x128xf32>
    %c0_121 = arith.constant 0 : index
    %c0_122 = arith.constant 0 : index
    %c0_123 = arith.constant 0 : index
    %264 = vector.load %arg9[%c0_121, %c0_122, %c0_123] : memref<2x8x128xf32, #tpu.memory_space<vmem>>, vector<1x8x128xf32>
    %265 = vector.shape_cast %264 : vector<1x8x128xf32> to vector<8x128xf32>
    %266 = arith.mulf %255, %265 : vector<8x128xf32>
    %267 = arith.mulf %249, %257 : vector<8x128xf32>
    %268 = arith.addf %266, %267 : vector<8x128xf32>
    %269 = math.tanh %268 : vector<8x128xf32>
    %270 = arith.mulf %263, %269 : vector<8x128xf32>
    %c0_124 = arith.constant 0 : index
    %c0_125 = arith.constant 0 : index
    %c0_126 = arith.constant 0 : index
    %271 = vector.load %arg9[%c0_124, %c0_125, %c0_126] : memref<2x8x128xf32, #tpu.memory_space<vmem>>, vector<1x8x128xf32>
    %272 = vector.shape_cast %271 : vector<1x8x128xf32> to vector<8x128xf32>
    %273 = vector.shape_cast %268 : vector<8x128xf32> to vector<1x8x128xf32>
    tpu.vector_store %arg9[%c0_124, %c0_125, %c0_126], %273 {strides = array<i32>} : memref<2x8x128xf32, #tpu.memory_space<vmem>>, vector<1x8x128xf32>,
    %c0_127 = arith.constant 0 : index
    %c0_128 = arith.constant 0 : index
    %c0_129 = arith.constant 0 : index
    %274 = vector.load %arg8[%c0_127, %c0_128, %c0_129] : memref<2x8x128xf32, #tpu.memory_space<vmem>>, vector<1x8x128xf32>
    %275 = vector.shape_cast %274 : vector<1x8x128xf32> to vector<8x128xf32>
    %276 = vector.shape_cast %270 : vector<8x128xf32> to vector<1x8x128xf32>
    tpu.vector_store %arg8[%c0_127, %c0_128, %c0_129], %276 {strides = array<i32>} : memref<2x8x128xf32, #tpu.memory_space<vmem>>, vector<1x8x128xf32>,
    %277 = arith.index_cast %c5_i32 : i32 to index
    %c0_130 = arith.constant 0 : index
    %c0_131 = arith.constant 0 : index
    %278 = vector.load %arg7[%277, %c0_130, %c0_131] : memref<8x8x128xf32, #tpu.memory_space<vmem>>, vector<1x8x128xf32>
    %279 = vector.shape_cast %278 : vector<1x8x128xf32> to vector<8x128xf32>
    %280 = vector.shape_cast %270 : vector<8x128xf32> to vector<1x8x128xf32>
    tpu.vector_store %arg7[%277, %c0_130, %c0_131], %280 {strides = array<i32>} : memref<8x8x128xf32, #tpu.memory_space<vmem>>, vector<1x8x128xf32>,
    %c6_i32 = arith.constant 6 : i32
    %281 = arith.index_cast %c6_i32 : i32 to index
    %c0_132 = arith.constant 0 : index
    %c0_133 = arith.constant 0 : index
    %282 = vector.load %arg7[%281, %c0_132, %c0_133] : memref<8x8x128xf32, #tpu.memory_space<vmem>>, vector<1x8x128xf32>
    %283 = vector.shape_cast %282 : vector<1x8x128xf32> to vector<8x128xf32>
    %c0_134 = arith.constant 0 : index
    %c0_135 = arith.constant 0 : index
    %c0_136 = arith.constant 0 : index
    %284 = vector.load %arg8[%c0_134, %c0_135, %c0_136] : memref<2x8x128xf32, #tpu.memory_space<vmem>>, vector<1x8x128xf32>
    %285 = vector.shape_cast %284 : vector<1x8x128xf32> to vector<8x128xf32>
    %286 = tpu.concatenate %283, %285 in 1 : vector<8x128xf32>, vector<8x128xf32> -> vector<8x256xf32>
    %cst_137 = arith.constant dense<0.000000e+00> : vector<8x512xf32>
    %287 = tpu.matmul %286, %6, %cst_137 {dimension_numbers = #tpu.dot_dimension_numbers<[1], [0], [0], [1], [0, 0, 1, 1], [], []>} : vector<8x256xf32>, vector<256x512xf32>, vector<8x512xf32> -> vector<8x512xf32>
    %288 = arith.addf %287, %10 : vector<8x512xf32>
    %289 = vector.extract_strided_slice %288 {offsets = [0, 0], sizes = [8, 128], strides = [1, 1]} : vector<8x512xf32> to vector<8x128xf32>
    %290 = arith.negf %289 : vector<8x128xf32>
    %291 = math.exp %290 : vector<8x128xf32>
    %cst_138 = arith.constant 1.000000e+00 : f32
    %292 = vector.broadcast %cst_138 : f32 to vector<8x128xf32>
    %293 = arith.addf %292, %291 : vector<8x128xf32>
    %294 = arith.divf %292, %293 : vector<8x128xf32>
    %295 = vector.extract_strided_slice %288 {offsets = [0, 128], sizes = [8, 128], strides = [1, 1]} : vector<8x512xf32> to vector<8x128xf32>
    %296 = arith.negf %295 : vector<8x128xf32>
    %297 = math.exp %296 : vector<8x128xf32>
    %cst_139 = arith.constant 1.000000e+00 : f32
    %298 = vector.broadcast %cst_139 : f32 to vector<8x128xf32>
    %299 = arith.addf %298, %297 : vector<8x128xf32>
    %300 = arith.divf %298, %299 : vector<8x128xf32>
    %301 = vector.extract_strided_slice %288 {offsets = [0, 256], sizes = [8, 128], strides = [1, 1]} : vector<8x512xf32> to vector<8x128xf32>
    %302 = math.tanh %301 : vector<8x128xf32>
    %303 = vector.extract_strided_slice %288 {offsets = [0, 384], sizes = [8, 128], strides = [1, 1]} : vector<8x512xf32> to vector<8x128xf32>
    %304 = arith.negf %303 : vector<8x128xf32>
    %305 = math.exp %304 : vector<8x128xf32>
    %cst_140 = arith.constant 1.000000e+00 : f32
    %306 = vector.broadcast %cst_140 : f32 to vector<8x128xf32>
    %307 = arith.addf %306, %305 : vector<8x128xf32>
    %308 = arith.divf %306, %307 : vector<8x128xf32>
    %c0_141 = arith.constant 0 : index
    %c0_142 = arith.constant 0 : index
    %c0_143 = arith.constant 0 : index
    %309 = vector.load %arg9[%c0_141, %c0_142, %c0_143] : memref<2x8x128xf32, #tpu.memory_space<vmem>>, vector<1x8x128xf32>
    %310 = vector.shape_cast %309 : vector<1x8x128xf32> to vector<8x128xf32>
    %311 = arith.mulf %300, %310 : vector<8x128xf32>
    %312 = arith.mulf %294, %302 : vector<8x128xf32>
    %313 = arith.addf %311, %312 : vector<8x128xf32>
    %314 = math.tanh %313 : vector<8x128xf32>
    %315 = arith.mulf %308, %314 : vector<8x128xf32>
    %c0_144 = arith.constant 0 : index
    %c0_145 = arith.constant 0 : index
    %c0_146 = arith.constant 0 : index
    %316 = vector.load %arg9[%c0_144, %c0_145, %c0_146] : memref<2x8x128xf32, #tpu.memory_space<vmem>>, vector<1x8x128xf32>
    %317 = vector.shape_cast %316 : vector<1x8x128xf32> to vector<8x128xf32>
    %318 = vector.shape_cast %313 : vector<8x128xf32> to vector<1x8x128xf32>
    tpu.vector_store %arg9[%c0_144, %c0_145, %c0_146], %318 {strides = array<i32>} : memref<2x8x128xf32, #tpu.memory_space<vmem>>, vector<1x8x128xf32>,
    %c0_147 = arith.constant 0 : index
    %c0_148 = arith.constant 0 : index
    %c0_149 = arith.constant 0 : index
    %319 = vector.load %arg8[%c0_147, %c0_148, %c0_149] : memref<2x8x128xf32, #tpu.memory_space<vmem>>, vector<1x8x128xf32>
    %320 = vector.shape_cast %319 : vector<1x8x128xf32> to vector<8x128xf32>
    %321 = vector.shape_cast %315 : vector<8x128xf32> to vector<1x8x128xf32>
    tpu.vector_store %arg8[%c0_147, %c0_148, %c0_149], %321 {strides = array<i32>} : memref<2x8x128xf32, #tpu.memory_space<vmem>>, vector<1x8x128xf32>,
    %322 = arith.index_cast %c6_i32 : i32 to index
    %c0_150 = arith.constant 0 : index
    %c0_151 = arith.constant 0 : index
    %323 = vector.load %arg7[%322, %c0_150, %c0_151] : memref<8x8x128xf32, #tpu.memory_space<vmem>>, vector<1x8x128xf32>
    %324 = vector.shape_cast %323 : vector<1x8x128xf32> to vector<8x128xf32>
    %325 = vector.shape_cast %315 : vector<8x128xf32> to vector<1x8x128xf32>
    tpu.vector_store %arg7[%322, %c0_150, %c0_151], %325 {strides = array<i32>} : memref<8x8x128xf32, #tpu.memory_space<vmem>>, vector<1x8x128xf32>,
    %c7_i32 = arith.constant 7 : i32
    %326 = arith.index_cast %c7_i32 : i32 to index
    %c0_152 = arith.constant 0 : index
    %c0_153 = arith.constant 0 : index
    %327 = vector.load %arg7[%326, %c0_152, %c0_153] : memref<8x8x128xf32, #tpu.memory_space<vmem>>, vector<1x8x128xf32>
    %328 = vector.shape_cast %327 : vector<1x8x128xf32> to vector<8x128xf32>
    %c0_154 = arith.constant 0 : index
    %c0_155 = arith.constant 0 : index
    %c0_156 = arith.constant 0 : index
    %329 = vector.load %arg8[%c0_154, %c0_155, %c0_156] : memref<2x8x128xf32, #tpu.memory_space<vmem>>, vector<1x8x128xf32>
    %330 = vector.shape_cast %329 : vector<1x8x128xf32> to vector<8x128xf32>
    %331 = tpu.concatenate %328, %330 in 1 : vector<8x128xf32>, vector<8x128xf32> -> vector<8x256xf32>
    %cst_157 = arith.constant dense<0.000000e+00> : vector<8x512xf32>
    %332 = tpu.matmul %331, %6, %cst_157 {dimension_numbers = #tpu.dot_dimension_numbers<[1], [0], [0], [1], [0, 0, 1, 1], [], []>} : vector<8x256xf32>, vector<256x512xf32>, vector<8x512xf32> -> vector<8x512xf32>
    %333 = arith.addf %332, %10 : vector<8x512xf32>
    %334 = vector.extract_strided_slice %333 {offsets = [0, 0], sizes = [8, 128], strides = [1, 1]} : vector<8x512xf32> to vector<8x128xf32>
    %335 = arith.negf %334 : vector<8x128xf32>
    %336 = math.exp %335 : vector<8x128xf32>
    %cst_158 = arith.constant 1.000000e+00 : f32
    %337 = vector.broadcast %cst_158 : f32 to vector<8x128xf32>
    %338 = arith.addf %337, %336 : vector<8x128xf32>
    %339 = arith.divf %337, %338 : vector<8x128xf32>
    %340 = vector.extract_strided_slice %333 {offsets = [0, 128], sizes = [8, 128], strides = [1, 1]} : vector<8x512xf32> to vector<8x128xf32>
    %341 = arith.negf %340 : vector<8x128xf32>
    %342 = math.exp %341 : vector<8x128xf32>
    %cst_159 = arith.constant 1.000000e+00 : f32
    %343 = vector.broadcast %cst_159 : f32 to vector<8x128xf32>
    %344 = arith.addf %343, %342 : vector<8x128xf32>
    %345 = arith.divf %343, %344 : vector<8x128xf32>
    %346 = vector.extract_strided_slice %333 {offsets = [0, 256], sizes = [8, 128], strides = [1, 1]} : vector<8x512xf32> to vector<8x128xf32>
    %347 = math.tanh %346 : vector<8x128xf32>
    %348 = vector.extract_strided_slice %333 {offsets = [0, 384], sizes = [8, 128], strides = [1, 1]} : vector<8x512xf32> to vector<8x128xf32>
    %349 = arith.negf %348 : vector<8x128xf32>
    %350 = math.exp %349 : vector<8x128xf32>
    %cst_160 = arith.constant 1.000000e+00 : f32
    %351 = vector.broadcast %cst_160 : f32 to vector<8x128xf32>
    %352 = arith.addf %351, %350 : vector<8x128xf32>
    %353 = arith.divf %351, %352 : vector<8x128xf32>
    %c0_161 = arith.constant 0 : index
    %c0_162 = arith.constant 0 : index
    %c0_163 = arith.constant 0 : index
    %354 = vector.load %arg9[%c0_161, %c0_162, %c0_163] : memref<2x8x128xf32, #tpu.memory_space<vmem>>, vector<1x8x128xf32>
    %355 = vector.shape_cast %354 : vector<1x8x128xf32> to vector<8x128xf32>
    %356 = arith.mulf %345, %355 : vector<8x128xf32>
    %357 = arith.mulf %339, %347 : vector<8x128xf32>
    %358 = arith.addf %356, %357 : vector<8x128xf32>
    %359 = math.tanh %358 : vector<8x128xf32>
    %360 = arith.mulf %353, %359 : vector<8x128xf32>
    %c0_164 = arith.constant 0 : index
    %c0_165 = arith.constant 0 : index
    %c0_166 = arith.constant 0 : index
    %361 = vector.load %arg9[%c0_164, %c0_165, %c0_166] : memref<2x8x128xf32, #tpu.memory_space<vmem>>, vector<1x8x128xf32>
    %362 = vector.shape_cast %361 : vector<1x8x128xf32> to vector<8x128xf32>
    %363 = vector.shape_cast %358 : vector<8x128xf32> to vector<1x8x128xf32>
    tpu.vector_store %arg9[%c0_164, %c0_165, %c0_166], %363 {strides = array<i32>} : memref<2x8x128xf32, #tpu.memory_space<vmem>>, vector<1x8x128xf32>,
    %c0_167 = arith.constant 0 : index
    %c0_168 = arith.constant 0 : index
    %c0_169 = arith.constant 0 : index
    %364 = vector.load %arg8[%c0_167, %c0_168, %c0_169] : memref<2x8x128xf32, #tpu.memory_space<vmem>>, vector<1x8x128xf32>
    %365 = vector.shape_cast %364 : vector<1x8x128xf32> to vector<8x128xf32>
    %366 = vector.shape_cast %360 : vector<8x128xf32> to vector<1x8x128xf32>
    tpu.vector_store %arg8[%c0_167, %c0_168, %c0_169], %366 {strides = array<i32>} : memref<2x8x128xf32, #tpu.memory_space<vmem>>, vector<1x8x128xf32>,
    %367 = arith.index_cast %c7_i32 : i32 to index
    %c0_170 = arith.constant 0 : index
    %c0_171 = arith.constant 0 : index
    %368 = vector.load %arg7[%367, %c0_170, %c0_171] : memref<8x8x128xf32, #tpu.memory_space<vmem>>, vector<1x8x128xf32>
    %369 = vector.shape_cast %368 : vector<1x8x128xf32> to vector<8x128xf32>
    %370 = vector.shape_cast %360 : vector<8x128xf32> to vector<1x8x128xf32>
    tpu.vector_store %arg7[%367, %c0_170, %c0_171], %370 {strides = array<i32>} : memref<8x8x128xf32, #tpu.memory_space<vmem>>, vector<1x8x128xf32>,
    %c8_i32 = arith.constant 8 : i32
    %c1 = arith.constant 1 : index
    %c0_172 = arith.constant 0 : index
    %c0_173 = arith.constant 0 : index
    %371 = vector.load %arg2[%c1, %c0_172, %c0_173] : memref<2x256x512xf32, #tpu.memory_space<vmem>>, vector<1x256x512xf32>
    %372 = vector.shape_cast %371 : vector<1x256x512xf32> to vector<256x512xf32>
    %c1_174 = arith.constant 1 : index
    %c0_175 = arith.constant 0 : index
    %c0_176 = arith.constant 0 : index
    %373 = vector.load %arg3[%c1_174, %c0_175, %c0_176] : memref<2x1x512xf32, #tpu.memory_space<vmem>>, vector<1x1x512xf32>
    %374 = vector.shape_cast %373 : vector<1x1x512xf32> to vector<1x512xf32>
    %375 = vector.shape_cast %374 : vector<1x512xf32> to vector<1x512xf32>
    %376 = vector.broadcast %375 : vector<1x512xf32> to vector<8x512xf32>
    %c0_i32_177 = arith.constant 0 : i32
    %377 = arith.index_cast %c0_i32_177 : i32 to index
    %c0_178 = arith.constant 0 : index
    %c0_179 = arith.constant 0 : index
    %378 = vector.load %arg7[%377, %c0_178, %c0_179] : memref<8x8x128xf32, #tpu.memory_space<vmem>>, vector<1x8x128xf32>
    %379 = vector.shape_cast %378 : vector<1x8x128xf32> to vector<8x128xf32>
    %c1_180 = arith.constant 1 : index
    %c0_181 = arith.constant 0 : index
    %c0_182 = arith.constant 0 : index
    %380 = vector.load %arg8[%c1_180, %c0_181, %c0_182] : memref<2x8x128xf32, #tpu.memory_space<vmem>>, vector<1x8x128xf32>
    %381 = vector.shape_cast %380 : vector<1x8x128xf32> to vector<8x128xf32>
    %382 = tpu.concatenate %379, %381 in 1 : vector<8x128xf32>, vector<8x128xf32> -> vector<8x256xf32>
    %cst_183 = arith.constant dense<0.000000e+00> : vector<8x512xf32>
    %383 = tpu.matmul %382, %372, %cst_183 {dimension_numbers = #tpu.dot_dimension_numbers<[1], [0], [0], [1], [0, 0, 1, 1], [], []>} : vector<8x256xf32>, vector<256x512xf32>, vector<8x512xf32> -> vector<8x512xf32>
    %384 = arith.addf %383, %376 : vector<8x512xf32>
    %385 = vector.extract_strided_slice %384 {offsets = [0, 0], sizes = [8, 128], strides = [1, 1]} : vector<8x512xf32> to vector<8x128xf32>
    %386 = arith.negf %385 : vector<8x128xf32>
    %387 = math.exp %386 : vector<8x128xf32>
    %cst_184 = arith.constant 1.000000e+00 : f32
    %388 = vector.broadcast %cst_184 : f32 to vector<8x128xf32>
    %389 = arith.addf %388, %387 : vector<8x128xf32>
    %390 = arith.divf %388, %389 : vector<8x128xf32>
    %391 = vector.extract_strided_slice %384 {offsets = [0, 128], sizes = [8, 128], strides = [1, 1]} : vector<8x512xf32> to vector<8x128xf32>
    %392 = arith.negf %391 : vector<8x128xf32>
    %393 = math.exp %392 : vector<8x128xf32>
    %cst_185 = arith.constant 1.000000e+00 : f32
    %394 = vector.broadcast %cst_185 : f32 to vector<8x128xf32>
    %395 = arith.addf %394, %393 : vector<8x128xf32>
    %396 = arith.divf %394, %395 : vector<8x128xf32>
    %397 = vector.extract_strided_slice %384 {offsets = [0, 256], sizes = [8, 128], strides = [1, 1]} : vector<8x512xf32> to vector<8x128xf32>
    %398 = math.tanh %397 : vector<8x128xf32>
    %399 = vector.extract_strided_slice %384 {offsets = [0, 384], sizes = [8, 128], strides = [1, 1]} : vector<8x512xf32> to vector<8x128xf32>
    %400 = arith.negf %399 : vector<8x128xf32>
    %401 = math.exp %400 : vector<8x128xf32>
    %cst_186 = arith.constant 1.000000e+00 : f32
    %402 = vector.broadcast %cst_186 : f32 to vector<8x128xf32>
    %403 = arith.addf %402, %401 : vector<8x128xf32>
    %404 = arith.divf %402, %403 : vector<8x128xf32>
    %c1_187 = arith.constant 1 : index
    %c0_188 = arith.constant 0 : index
    %c0_189 = arith.constant 0 : index
    %405 = vector.load %arg9[%c1_187, %c0_188, %c0_189] : memref<2x8x128xf32, #tpu.memory_space<vmem>>, vector<1x8x128xf32>
    %406 = vector.shape_cast %405 : vector<1x8x128xf32> to vector<8x128xf32>
    %407 = arith.mulf %396, %406 : vector<8x128xf32>
    %408 = arith.mulf %390, %398 : vector<8x128xf32>
    %409 = arith.addf %407, %408 : vector<8x128xf32>
    %410 = math.tanh %409 : vector<8x128xf32>
    %411 = arith.mulf %404, %410 : vector<8x128xf32>
    %c1_190 = arith.constant 1 : index
    %c0_191 = arith.constant 0 : index
    %c0_192 = arith.constant 0 : index
    %412 = vector.load %arg9[%c1_190, %c0_191, %c0_192] : memref<2x8x128xf32, #tpu.memory_space<vmem>>, vector<1x8x128xf32>
    %413 = vector.shape_cast %412 : vector<1x8x128xf32> to vector<8x128xf32>
    %414 = vector.shape_cast %409 : vector<8x128xf32> to vector<1x8x128xf32>
    tpu.vector_store %arg9[%c1_190, %c0_191, %c0_192], %414 {strides = array<i32>} : memref<2x8x128xf32, #tpu.memory_space<vmem>>, vector<1x8x128xf32>,
    %c1_193 = arith.constant 1 : index
    %c0_194 = arith.constant 0 : index
    %c0_195 = arith.constant 0 : index
    %415 = vector.load %arg8[%c1_193, %c0_194, %c0_195] : memref<2x8x128xf32, #tpu.memory_space<vmem>>, vector<1x8x128xf32>
    %416 = vector.shape_cast %415 : vector<1x8x128xf32> to vector<8x128xf32>
    %417 = vector.shape_cast %411 : vector<8x128xf32> to vector<1x8x128xf32>
    tpu.vector_store %arg8[%c1_193, %c0_194, %c0_195], %417 {strides = array<i32>} : memref<2x8x128xf32, #tpu.memory_space<vmem>>, vector<1x8x128xf32>,
    %418 = arith.index_cast %c0_i32_177 : i32 to index
    %c0_196 = arith.constant 0 : index
    %c0_197 = arith.constant 0 : index
    %419 = vector.load %arg7[%418, %c0_196, %c0_197] : memref<8x8x128xf32, #tpu.memory_space<vmem>>, vector<1x8x128xf32>
    %420 = vector.shape_cast %419 : vector<1x8x128xf32> to vector<8x128xf32>
    %421 = vector.shape_cast %411 : vector<8x128xf32> to vector<1x8x128xf32>
    tpu.vector_store %arg7[%418, %c0_196, %c0_197], %421 {strides = array<i32>} : memref<8x8x128xf32, #tpu.memory_space<vmem>>, vector<1x8x128xf32>,
    %c1_i32_198 = arith.constant 1 : i32
    %422 = arith.index_cast %c1_i32_198 : i32 to index
    %c0_199 = arith.constant 0 : index
    %c0_200 = arith.constant 0 : index
    %423 = vector.load %arg7[%422, %c0_199, %c0_200] : memref<8x8x128xf32, #tpu.memory_space<vmem>>, vector<1x8x128xf32>
    %424 = vector.shape_cast %423 : vector<1x8x128xf32> to vector<8x128xf32>
    %c1_201 = arith.constant 1 : index
    %c0_202 = arith.constant 0 : index
    %c0_203 = arith.constant 0 : index
    %425 = vector.load %arg8[%c1_201, %c0_202, %c0_203] : memref<2x8x128xf32, #tpu.memory_space<vmem>>, vector<1x8x128xf32>
    %426 = vector.shape_cast %425 : vector<1x8x128xf32> to vector<8x128xf32>
    %427 = tpu.concatenate %424, %426 in 1 : vector<8x128xf32>, vector<8x128xf32> -> vector<8x256xf32>
    %cst_204 = arith.constant dense<0.000000e+00> : vector<8x512xf32>
    %428 = tpu.matmul %427, %372, %cst_204 {dimension_numbers = #tpu.dot_dimension_numbers<[1], [0], [0], [1], [0, 0, 1, 1], [], []>} : vector<8x256xf32>, vector<256x512xf32>, vector<8x512xf32> -> vector<8x512xf32>
    %429 = arith.addf %428, %376 : vector<8x512xf32>
    %430 = vector.extract_strided_slice %429 {offsets = [0, 0], sizes = [8, 128], strides = [1, 1]} : vector<8x512xf32> to vector<8x128xf32>
    %431 = arith.negf %430 : vector<8x128xf32>
    %432 = math.exp %431 : vector<8x128xf32>
    %cst_205 = arith.constant 1.000000e+00 : f32
    %433 = vector.broadcast %cst_205 : f32 to vector<8x128xf32>
    %434 = arith.addf %433, %432 : vector<8x128xf32>
    %435 = arith.divf %433, %434 : vector<8x128xf32>
    %436 = vector.extract_strided_slice %429 {offsets = [0, 128], sizes = [8, 128], strides = [1, 1]} : vector<8x512xf32> to vector<8x128xf32>
    %437 = arith.negf %436 : vector<8x128xf32>
    %438 = math.exp %437 : vector<8x128xf32>
    %cst_206 = arith.constant 1.000000e+00 : f32
    %439 = vector.broadcast %cst_206 : f32 to vector<8x128xf32>
    %440 = arith.addf %439, %438 : vector<8x128xf32>
    %441 = arith.divf %439, %440 : vector<8x128xf32>
    %442 = vector.extract_strided_slice %429 {offsets = [0, 256], sizes = [8, 128], strides = [1, 1]} : vector<8x512xf32> to vector<8x128xf32>
    %443 = math.tanh %442 : vector<8x128xf32>
    %444 = vector.extract_strided_slice %429 {offsets = [0, 384], sizes = [8, 128], strides = [1, 1]} : vector<8x512xf32> to vector<8x128xf32>
    %445 = arith.negf %444 : vector<8x128xf32>
    %446 = math.exp %445 : vector<8x128xf32>
    %cst_207 = arith.constant 1.000000e+00 : f32
    %447 = vector.broadcast %cst_207 : f32 to vector<8x128xf32>
    %448 = arith.addf %447, %446 : vector<8x128xf32>
    %449 = arith.divf %447, %448 : vector<8x128xf32>
    %c1_208 = arith.constant 1 : index
    %c0_209 = arith.constant 0 : index
    %c0_210 = arith.constant 0 : index
    %450 = vector.load %arg9[%c1_208, %c0_209, %c0_210] : memref<2x8x128xf32, #tpu.memory_space<vmem>>, vector<1x8x128xf32>
    %451 = vector.shape_cast %450 : vector<1x8x128xf32> to vector<8x128xf32>
    %452 = arith.mulf %441, %451 : vector<8x128xf32>
    %453 = arith.mulf %435, %443 : vector<8x128xf32>
    %454 = arith.addf %452, %453 : vector<8x128xf32>
    %455 = math.tanh %454 : vector<8x128xf32>
    %456 = arith.mulf %449, %455 : vector<8x128xf32>
    %c1_211 = arith.constant 1 : index
    %c0_212 = arith.constant 0 : index
    %c0_213 = arith.constant 0 : index
    %457 = vector.load %arg9[%c1_211, %c0_212, %c0_213] : memref<2x8x128xf32, #tpu.memory_space<vmem>>, vector<1x8x128xf32>
    %458 = vector.shape_cast %457 : vector<1x8x128xf32> to vector<8x128xf32>
    %459 = vector.shape_cast %454 : vector<8x128xf32> to vector<1x8x128xf32>
    tpu.vector_store %arg9[%c1_211, %c0_212, %c0_213], %459 {strides = array<i32>} : memref<2x8x128xf32, #tpu.memory_space<vmem>>, vector<1x8x128xf32>,
    %c1_214 = arith.constant 1 : index
    %c0_215 = arith.constant 0 : index
    %c0_216 = arith.constant 0 : index
    %460 = vector.load %arg8[%c1_214, %c0_215, %c0_216] : memref<2x8x128xf32, #tpu.memory_space<vmem>>, vector<1x8x128xf32>
    %461 = vector.shape_cast %460 : vector<1x8x128xf32> to vector<8x128xf32>
    %462 = vector.shape_cast %456 : vector<8x128xf32> to vector<1x8x128xf32>
    tpu.vector_store %arg8[%c1_214, %c0_215, %c0_216], %462 {strides = array<i32>} : memref<2x8x128xf32, #tpu.memory_space<vmem>>, vector<1x8x128xf32>,
    %463 = arith.index_cast %c1_i32_198 : i32 to index
    %c0_217 = arith.constant 0 : index
    %c0_218 = arith.constant 0 : index
    %464 = vector.load %arg7[%463, %c0_217, %c0_218] : memref<8x8x128xf32, #tpu.memory_space<vmem>>, vector<1x8x128xf32>
    %465 = vector.shape_cast %464 : vector<1x8x128xf32> to vector<8x128xf32>
    %466 = vector.shape_cast %456 : vector<8x128xf32> to vector<1x8x128xf32>
    tpu.vector_store %arg7[%463, %c0_217, %c0_218], %466 {strides = array<i32>} : memref<8x8x128xf32, #tpu.memory_space<vmem>>, vector<1x8x128xf32>,
    %c2_i32_219 = arith.constant 2 : i32
    %467 = arith.index_cast %c2_i32_219 : i32 to index
    %c0_220 = arith.constant 0 : index
    %c0_221 = arith.constant 0 : index
    %468 = vector.load %arg7[%467, %c0_220, %c0_221] : memref<8x8x128xf32, #tpu.memory_space<vmem>>, vector<1x8x128xf32>
    %469 = vector.shape_cast %468 : vector<1x8x128xf32> to vector<8x128xf32>
    %c1_222 = arith.constant 1 : index
    %c0_223 = arith.constant 0 : index
    %c0_224 = arith.constant 0 : index
    %470 = vector.load %arg8[%c1_222, %c0_223, %c0_224] : memref<2x8x128xf32, #tpu.memory_space<vmem>>, vector<1x8x128xf32>
    %471 = vector.shape_cast %470 : vector<1x8x128xf32> to vector<8x128xf32>
    %472 = tpu.concatenate %469, %471 in 1 : vector<8x128xf32>, vector<8x128xf32> -> vector<8x256xf32>
    %cst_225 = arith.constant dense<0.000000e+00> : vector<8x512xf32>
    %473 = tpu.matmul %472, %372, %cst_225 {dimension_numbers = #tpu.dot_dimension_numbers<[1], [0], [0], [1], [0, 0, 1, 1], [], []>} : vector<8x256xf32>, vector<256x512xf32>, vector<8x512xf32> -> vector<8x512xf32>
    %474 = arith.addf %473, %376 : vector<8x512xf32>
    %475 = vector.extract_strided_slice %474 {offsets = [0, 0], sizes = [8, 128], strides = [1, 1]} : vector<8x512xf32> to vector<8x128xf32>
    %476 = arith.negf %475 : vector<8x128xf32>
    %477 = math.exp %476 : vector<8x128xf32>
    %cst_226 = arith.constant 1.000000e+00 : f32
    %478 = vector.broadcast %cst_226 : f32 to vector<8x128xf32>
    %479 = arith.addf %478, %477 : vector<8x128xf32>
    %480 = arith.divf %478, %479 : vector<8x128xf32>
    %481 = vector.extract_strided_slice %474 {offsets = [0, 128], sizes = [8, 128], strides = [1, 1]} : vector<8x512xf32> to vector<8x128xf32>
    %482 = arith.negf %481 : vector<8x128xf32>
    %483 = math.exp %482 : vector<8x128xf32>
    %cst_227 = arith.constant 1.000000e+00 : f32
    %484 = vector.broadcast %cst_227 : f32 to vector<8x128xf32>
    %485 = arith.addf %484, %483 : vector<8x128xf32>
    %486 = arith.divf %484, %485 : vector<8x128xf32>
    %487 = vector.extract_strided_slice %474 {offsets = [0, 256], sizes = [8, 128], strides = [1, 1]} : vector<8x512xf32> to vector<8x128xf32>
    %488 = math.tanh %487 : vector<8x128xf32>
    %489 = vector.extract_strided_slice %474 {offsets = [0, 384], sizes = [8, 128], strides = [1, 1]} : vector<8x512xf32> to vector<8x128xf32>
    %490 = arith.negf %489 : vector<8x128xf32>
    %491 = math.exp %490 : vector<8x128xf32>
    %cst_228 = arith.constant 1.000000e+00 : f32
    %492 = vector.broadcast %cst_228 : f32 to vector<8x128xf32>
    %493 = arith.addf %492, %491 : vector<8x128xf32>
    %494 = arith.divf %492, %493 : vector<8x128xf32>
    %c1_229 = arith.constant 1 : index
    %c0_230 = arith.constant 0 : index
    %c0_231 = arith.constant 0 : index
    %495 = vector.load %arg9[%c1_229, %c0_230, %c0_231] : memref<2x8x128xf32, #tpu.memory_space<vmem>>, vector<1x8x128xf32>
    %496 = vector.shape_cast %495 : vector<1x8x128xf32> to vector<8x128xf32>
    %497 = arith.mulf %486, %496 : vector<8x128xf32>
    %498 = arith.mulf %480, %488 : vector<8x128xf32>
    %499 = arith.addf %497, %498 : vector<8x128xf32>
    %500 = math.tanh %499 : vector<8x128xf32>
    %501 = arith.mulf %494, %500 : vector<8x128xf32>
    %c1_232 = arith.constant 1 : index
    %c0_233 = arith.constant 0 : index
    %c0_234 = arith.constant 0 : index
    %502 = vector.load %arg9[%c1_232, %c0_233, %c0_234] : memref<2x8x128xf32, #tpu.memory_space<vmem>>, vector<1x8x128xf32>
    %503 = vector.shape_cast %502 : vector<1x8x128xf32> to vector<8x128xf32>
    %504 = vector.shape_cast %499 : vector<8x128xf32> to vector<1x8x128xf32>
    tpu.vector_store %arg9[%c1_232, %c0_233, %c0_234], %504 {strides = array<i32>} : memref<2x8x128xf32, #tpu.memory_space<vmem>>, vector<1x8x128xf32>,
    %c1_235 = arith.constant 1 : index
    %c0_236 = arith.constant 0 : index
    %c0_237 = arith.constant 0 : index
    %505 = vector.load %arg8[%c1_235, %c0_236, %c0_237] : memref<2x8x128xf32, #tpu.memory_space<vmem>>, vector<1x8x128xf32>
    %506 = vector.shape_cast %505 : vector<1x8x128xf32> to vector<8x128xf32>
    %507 = vector.shape_cast %501 : vector<8x128xf32> to vector<1x8x128xf32>
    tpu.vector_store %arg8[%c1_235, %c0_236, %c0_237], %507 {strides = array<i32>} : memref<2x8x128xf32, #tpu.memory_space<vmem>>, vector<1x8x128xf32>,
    %508 = arith.index_cast %c2_i32_219 : i32 to index
    %c0_238 = arith.constant 0 : index
    %c0_239 = arith.constant 0 : index
    %509 = vector.load %arg7[%508, %c0_238, %c0_239] : memref<8x8x128xf32, #tpu.memory_space<vmem>>, vector<1x8x128xf32>
    %510 = vector.shape_cast %509 : vector<1x8x128xf32> to vector<8x128xf32>
    %511 = vector.shape_cast %501 : vector<8x128xf32> to vector<1x8x128xf32>
    tpu.vector_store %arg7[%508, %c0_238, %c0_239], %511 {strides = array<i32>} : memref<8x8x128xf32, #tpu.memory_space<vmem>>, vector<1x8x128xf32>,
    %c3_i32_240 = arith.constant 3 : i32
    %512 = arith.index_cast %c3_i32_240 : i32 to index
    %c0_241 = arith.constant 0 : index
    %c0_242 = arith.constant 0 : index
    %513 = vector.load %arg7[%512, %c0_241, %c0_242] : memref<8x8x128xf32, #tpu.memory_space<vmem>>, vector<1x8x128xf32>
    %514 = vector.shape_cast %513 : vector<1x8x128xf32> to vector<8x128xf32>
    %c1_243 = arith.constant 1 : index
    %c0_244 = arith.constant 0 : index
    %c0_245 = arith.constant 0 : index
    %515 = vector.load %arg8[%c1_243, %c0_244, %c0_245] : memref<2x8x128xf32, #tpu.memory_space<vmem>>, vector<1x8x128xf32>
    %516 = vector.shape_cast %515 : vector<1x8x128xf32> to vector<8x128xf32>
    %517 = tpu.concatenate %514, %516 in 1 : vector<8x128xf32>, vector<8x128xf32> -> vector<8x256xf32>
    %cst_246 = arith.constant dense<0.000000e+00> : vector<8x512xf32>
    %518 = tpu.matmul %517, %372, %cst_246 {dimension_numbers = #tpu.dot_dimension_numbers<[1], [0], [0], [1], [0, 0, 1, 1], [], []>} : vector<8x256xf32>, vector<256x512xf32>, vector<8x512xf32> -> vector<8x512xf32>
    %519 = arith.addf %518, %376 : vector<8x512xf32>
    %520 = vector.extract_strided_slice %519 {offsets = [0, 0], sizes = [8, 128], strides = [1, 1]} : vector<8x512xf32> to vector<8x128xf32>
    %521 = arith.negf %520 : vector<8x128xf32>
    %522 = math.exp %521 : vector<8x128xf32>
    %cst_247 = arith.constant 1.000000e+00 : f32
    %523 = vector.broadcast %cst_247 : f32 to vector<8x128xf32>
    %524 = arith.addf %523, %522 : vector<8x128xf32>
    %525 = arith.divf %523, %524 : vector<8x128xf32>
    %526 = vector.extract_strided_slice %519 {offsets = [0, 128], sizes = [8, 128], strides = [1, 1]} : vector<8x512xf32> to vector<8x128xf32>
    %527 = arith.negf %526 : vector<8x128xf32>
    %528 = math.exp %527 : vector<8x128xf32>
    %cst_248 = arith.constant 1.000000e+00 : f32
    %529 = vector.broadcast %cst_248 : f32 to vector<8x128xf32>
    %530 = arith.addf %529, %528 : vector<8x128xf32>
    %531 = arith.divf %529, %530 : vector<8x128xf32>
    %532 = vector.extract_strided_slice %519 {offsets = [0, 256], sizes = [8, 128], strides = [1, 1]} : vector<8x512xf32> to vector<8x128xf32>
    %533 = math.tanh %532 : vector<8x128xf32>
    %534 = vector.extract_strided_slice %519 {offsets = [0, 384], sizes = [8, 128], strides = [1, 1]} : vector<8x512xf32> to vector<8x128xf32>
    %535 = arith.negf %534 : vector<8x128xf32>
    %536 = math.exp %535 : vector<8x128xf32>
    %cst_249 = arith.constant 1.000000e+00 : f32
    %537 = vector.broadcast %cst_249 : f32 to vector<8x128xf32>
    %538 = arith.addf %537, %536 : vector<8x128xf32>
    %539 = arith.divf %537, %538 : vector<8x128xf32>
    %c1_250 = arith.constant 1 : index
    %c0_251 = arith.constant 0 : index
    %c0_252 = arith.constant 0 : index
    %540 = vector.load %arg9[%c1_250, %c0_251, %c0_252] : memref<2x8x128xf32, #tpu.memory_space<vmem>>, vector<1x8x128xf32>
    %541 = vector.shape_cast %540 : vector<1x8x128xf32> to vector<8x128xf32>
    %542 = arith.mulf %531, %541 : vector<8x128xf32>
    %543 = arith.mulf %525, %533 : vector<8x128xf32>
    %544 = arith.addf %542, %543 : vector<8x128xf32>
    %545 = math.tanh %544 : vector<8x128xf32>
    %546 = arith.mulf %539, %545 : vector<8x128xf32>
    %c1_253 = arith.constant 1 : index
    %c0_254 = arith.constant 0 : index
    %c0_255 = arith.constant 0 : index
    %547 = vector.load %arg9[%c1_253, %c0_254, %c0_255] : memref<2x8x128xf32, #tpu.memory_space<vmem>>, vector<1x8x128xf32>
    %548 = vector.shape_cast %547 : vector<1x8x128xf32> to vector<8x128xf32>
    %549 = vector.shape_cast %544 : vector<8x128xf32> to vector<1x8x128xf32>
    tpu.vector_store %arg9[%c1_253, %c0_254, %c0_255], %549 {strides = array<i32>} : memref<2x8x128xf32, #tpu.memory_space<vmem>>, vector<1x8x128xf32>,
    %c1_256 = arith.constant 1 : index
    %c0_257 = arith.constant 0 : index
    %c0_258 = arith.constant 0 : index
    %550 = vector.load %arg8[%c1_256, %c0_257, %c0_258] : memref<2x8x128xf32, #tpu.memory_space<vmem>>, vector<1x8x128xf32>
    %551 = vector.shape_cast %550 : vector<1x8x128xf32> to vector<8x128xf32>
    %552 = vector.shape_cast %546 : vector<8x128xf32> to vector<1x8x128xf32>
    tpu.vector_store %arg8[%c1_256, %c0_257, %c0_258], %552 {strides = array<i32>} : memref<2x8x128xf32, #tpu.memory_space<vmem>>, vector<1x8x128xf32>,
    %553 = arith.index_cast %c3_i32_240 : i32 to index
    %c0_259 = arith.constant 0 : index
    %c0_260 = arith.constant 0 : index
    %554 = vector.load %arg7[%553, %c0_259, %c0_260] : memref<8x8x128xf32, #tpu.memory_space<vmem>>, vector<1x8x128xf32>
    %555 = vector.shape_cast %554 : vector<1x8x128xf32> to vector<8x128xf32>
    %556 = vector.shape_cast %546 : vector<8x128xf32> to vector<1x8x128xf32>
    tpu.vector_store %arg7[%553, %c0_259, %c0_260], %556 {strides = array<i32>} : memref<8x8x128xf32, #tpu.memory_space<vmem>>, vector<1x8x128xf32>,
    %c4_i32_261 = arith.constant 4 : i32
    %557 = arith.index_cast %c4_i32_261 : i32 to index
    %c0_262 = arith.constant 0 : index
    %c0_263 = arith.constant 0 : index
    %558 = vector.load %arg7[%557, %c0_262, %c0_263] : memref<8x8x128xf32, #tpu.memory_space<vmem>>, vector<1x8x128xf32>
    %559 = vector.shape_cast %558 : vector<1x8x128xf32> to vector<8x128xf32>
    %c1_264 = arith.constant 1 : index
    %c0_265 = arith.constant 0 : index
    %c0_266 = arith.constant 0 : index
    %560 = vector.load %arg8[%c1_264, %c0_265, %c0_266] : memref<2x8x128xf32, #tpu.memory_space<vmem>>, vector<1x8x128xf32>
    %561 = vector.shape_cast %560 : vector<1x8x128xf32> to vector<8x128xf32>
    %562 = tpu.concatenate %559, %561 in 1 : vector<8x128xf32>, vector<8x128xf32> -> vector<8x256xf32>
    %cst_267 = arith.constant dense<0.000000e+00> : vector<8x512xf32>
    %563 = tpu.matmul %562, %372, %cst_267 {dimension_numbers = #tpu.dot_dimension_numbers<[1], [0], [0], [1], [0, 0, 1, 1], [], []>} : vector<8x256xf32>, vector<256x512xf32>, vector<8x512xf32> -> vector<8x512xf32>
    %564 = arith.addf %563, %376 : vector<8x512xf32>
    %565 = vector.extract_strided_slice %564 {offsets = [0, 0], sizes = [8, 128], strides = [1, 1]} : vector<8x512xf32> to vector<8x128xf32>
    %566 = arith.negf %565 : vector<8x128xf32>
    %567 = math.exp %566 : vector<8x128xf32>
    %cst_268 = arith.constant 1.000000e+00 : f32
    %568 = vector.broadcast %cst_268 : f32 to vector<8x128xf32>
    %569 = arith.addf %568, %567 : vector<8x128xf32>
    %570 = arith.divf %568, %569 : vector<8x128xf32>
    %571 = vector.extract_strided_slice %564 {offsets = [0, 128], sizes = [8, 128], strides = [1, 1]} : vector<8x512xf32> to vector<8x128xf32>
    %572 = arith.negf %571 : vector<8x128xf32>
    %573 = math.exp %572 : vector<8x128xf32>
    %cst_269 = arith.constant 1.000000e+00 : f32
    %574 = vector.broadcast %cst_269 : f32 to vector<8x128xf32>
    %575 = arith.addf %574, %573 : vector<8x128xf32>
    %576 = arith.divf %574, %575 : vector<8x128xf32>
    %577 = vector.extract_strided_slice %564 {offsets = [0, 256], sizes = [8, 128], strides = [1, 1]} : vector<8x512xf32> to vector<8x128xf32>
    %578 = math.tanh %577 : vector<8x128xf32>
    %579 = vector.extract_strided_slice %564 {offsets = [0, 384], sizes = [8, 128], strides = [1, 1]} : vector<8x512xf32> to vector<8x128xf32>
    %580 = arith.negf %579 : vector<8x128xf32>
    %581 = math.exp %580 : vector<8x128xf32>
    %cst_270 = arith.constant 1.000000e+00 : f32
    %582 = vector.broadcast %cst_270 : f32 to vector<8x128xf32>
    %583 = arith.addf %582, %581 : vector<8x128xf32>
    %584 = arith.divf %582, %583 : vector<8x128xf32>
    %c1_271 = arith.constant 1 : index
    %c0_272 = arith.constant 0 : index
    %c0_273 = arith.constant 0 : index
    %585 = vector.load %arg9[%c1_271, %c0_272, %c0_273] : memref<2x8x128xf32, #tpu.memory_space<vmem>>, vector<1x8x128xf32>
    %586 = vector.shape_cast %585 : vector<1x8x128xf32> to vector<8x128xf32>
    %587 = arith.mulf %576, %586 : vector<8x128xf32>
    %588 = arith.mulf %570, %578 : vector<8x128xf32>
    %589 = arith.addf %587, %588 : vector<8x128xf32>
    %590 = math.tanh %589 : vector<8x128xf32>
    %591 = arith.mulf %584, %590 : vector<8x128xf32>
    %c1_274 = arith.constant 1 : index
    %c0_275 = arith.constant 0 : index
    %c0_276 = arith.constant 0 : index
    %592 = vector.load %arg9[%c1_274, %c0_275, %c0_276] : memref<2x8x128xf32, #tpu.memory_space<vmem>>, vector<1x8x128xf32>
    %593 = vector.shape_cast %592 : vector<1x8x128xf32> to vector<8x128xf32>
    %594 = vector.shape_cast %589 : vector<8x128xf32> to vector<1x8x128xf32>
    tpu.vector_store %arg9[%c1_274, %c0_275, %c0_276], %594 {strides = array<i32>} : memref<2x8x128xf32, #tpu.memory_space<vmem>>, vector<1x8x128xf32>,
    %c1_277 = arith.constant 1 : index
    %c0_278 = arith.constant 0 : index
    %c0_279 = arith.constant 0 : index
    %595 = vector.load %arg8[%c1_277, %c0_278, %c0_279] : memref<2x8x128xf32, #tpu.memory_space<vmem>>, vector<1x8x128xf32>
    %596 = vector.shape_cast %595 : vector<1x8x128xf32> to vector<8x128xf32>
    %597 = vector.shape_cast %591 : vector<8x128xf32> to vector<1x8x128xf32>
    tpu.vector_store %arg8[%c1_277, %c0_278, %c0_279], %597 {strides = array<i32>} : memref<2x8x128xf32, #tpu.memory_space<vmem>>, vector<1x8x128xf32>,
    %598 = arith.index_cast %c4_i32_261 : i32 to index
    %c0_280 = arith.constant 0 : index
    %c0_281 = arith.constant 0 : index
    %599 = vector.load %arg7[%598, %c0_280, %c0_281] : memref<8x8x128xf32, #tpu.memory_space<vmem>>, vector<1x8x128xf32>
    %600 = vector.shape_cast %599 : vector<1x8x128xf32> to vector<8x128xf32>
    %601 = vector.shape_cast %591 : vector<8x128xf32> to vector<1x8x128xf32>
    tpu.vector_store %arg7[%598, %c0_280, %c0_281], %601 {strides = array<i32>} : memref<8x8x128xf32, #tpu.memory_space<vmem>>, vector<1x8x128xf32>,
    %c5_i32_282 = arith.constant 5 : i32
    %602 = arith.index_cast %c5_i32_282 : i32 to index
    %c0_283 = arith.constant 0 : index
    %c0_284 = arith.constant 0 : index
    %603 = vector.load %arg7[%602, %c0_283, %c0_284] : memref<8x8x128xf32, #tpu.memory_space<vmem>>, vector<1x8x128xf32>
    %604 = vector.shape_cast %603 : vector<1x8x128xf32> to vector<8x128xf32>
    %c1_285 = arith.constant 1 : index
    %c0_286 = arith.constant 0 : index
    %c0_287 = arith.constant 0 : index
    %605 = vector.load %arg8[%c1_285, %c0_286, %c0_287] : memref<2x8x128xf32, #tpu.memory_space<vmem>>, vector<1x8x128xf32>
    %606 = vector.shape_cast %605 : vector<1x8x128xf32> to vector<8x128xf32>
    %607 = tpu.concatenate %604, %606 in 1 : vector<8x128xf32>, vector<8x128xf32> -> vector<8x256xf32>
    %cst_288 = arith.constant dense<0.000000e+00> : vector<8x512xf32>
    %608 = tpu.matmul %607, %372, %cst_288 {dimension_numbers = #tpu.dot_dimension_numbers<[1], [0], [0], [1], [0, 0, 1, 1], [], []>} : vector<8x256xf32>, vector<256x512xf32>, vector<8x512xf32> -> vector<8x512xf32>
    %609 = arith.addf %608, %376 : vector<8x512xf32>
    %610 = vector.extract_strided_slice %609 {offsets = [0, 0], sizes = [8, 128], strides = [1, 1]} : vector<8x512xf32> to vector<8x128xf32>
    %611 = arith.negf %610 : vector<8x128xf32>
    %612 = math.exp %611 : vector<8x128xf32>
    %cst_289 = arith.constant 1.000000e+00 : f32
    %613 = vector.broadcast %cst_289 : f32 to vector<8x128xf32>
    %614 = arith.addf %613, %612 : vector<8x128xf32>
    %615 = arith.divf %613, %614 : vector<8x128xf32>
    %616 = vector.extract_strided_slice %609 {offsets = [0, 128], sizes = [8, 128], strides = [1, 1]} : vector<8x512xf32> to vector<8x128xf32>
    %617 = arith.negf %616 : vector<8x128xf32>
    %618 = math.exp %617 : vector<8x128xf32>
    %cst_290 = arith.constant 1.000000e+00 : f32
    %619 = vector.broadcast %cst_290 : f32 to vector<8x128xf32>
    %620 = arith.addf %619, %618 : vector<8x128xf32>
    %621 = arith.divf %619, %620 : vector<8x128xf32>
    %622 = vector.extract_strided_slice %609 {offsets = [0, 256], sizes = [8, 128], strides = [1, 1]} : vector<8x512xf32> to vector<8x128xf32>
    %623 = math.tanh %622 : vector<8x128xf32>
    %624 = vector.extract_strided_slice %609 {offsets = [0, 384], sizes = [8, 128], strides = [1, 1]} : vector<8x512xf32> to vector<8x128xf32>
    %625 = arith.negf %624 : vector<8x128xf32>
    %626 = math.exp %625 : vector<8x128xf32>
    %cst_291 = arith.constant 1.000000e+00 : f32
    %627 = vector.broadcast %cst_291 : f32 to vector<8x128xf32>
    %628 = arith.addf %627, %626 : vector<8x128xf32>
    %629 = arith.divf %627, %628 : vector<8x128xf32>
    %c1_292 = arith.constant 1 : index
    %c0_293 = arith.constant 0 : index
    %c0_294 = arith.constant 0 : index
    %630 = vector.load %arg9[%c1_292, %c0_293, %c0_294] : memref<2x8x128xf32, #tpu.memory_space<vmem>>, vector<1x8x128xf32>
    %631 = vector.shape_cast %630 : vector<1x8x128xf32> to vector<8x128xf32>
    %632 = arith.mulf %621, %631 : vector<8x128xf32>
    %633 = arith.mulf %615, %623 : vector<8x128xf32>
    %634 = arith.addf %632, %633 : vector<8x128xf32>
    %635 = math.tanh %634 : vector<8x128xf32>
    %636 = arith.mulf %629, %635 : vector<8x128xf32>
    %c1_295 = arith.constant 1 : index
    %c0_296 = arith.constant 0 : index
    %c0_297 = arith.constant 0 : index
    %637 = vector.load %arg9[%c1_295, %c0_296, %c0_297] : memref<2x8x128xf32, #tpu.memory_space<vmem>>, vector<1x8x128xf32>
    %638 = vector.shape_cast %637 : vector<1x8x128xf32> to vector<8x128xf32>
    %639 = vector.shape_cast %634 : vector<8x128xf32> to vector<1x8x128xf32>
    tpu.vector_store %arg9[%c1_295, %c0_296, %c0_297], %639 {strides = array<i32>} : memref<2x8x128xf32, #tpu.memory_space<vmem>>, vector<1x8x128xf32>,
    %c1_298 = arith.constant 1 : index
    %c0_299 = arith.constant 0 : index
    %c0_300 = arith.constant 0 : index
    %640 = vector.load %arg8[%c1_298, %c0_299, %c0_300] : memref<2x8x128xf32, #tpu.memory_space<vmem>>, vector<1x8x128xf32>
    %641 = vector.shape_cast %640 : vector<1x8x128xf32> to vector<8x128xf32>
    %642 = vector.shape_cast %636 : vector<8x128xf32> to vector<1x8x128xf32>
    tpu.vector_store %arg8[%c1_298, %c0_299, %c0_300], %642 {strides = array<i32>} : memref<2x8x128xf32, #tpu.memory_space<vmem>>, vector<1x8x128xf32>,
    %643 = arith.index_cast %c5_i32_282 : i32 to index
    %c0_301 = arith.constant 0 : index
    %c0_302 = arith.constant 0 : index
    %644 = vector.load %arg7[%643, %c0_301, %c0_302] : memref<8x8x128xf32, #tpu.memory_space<vmem>>, vector<1x8x128xf32>
    %645 = vector.shape_cast %644 : vector<1x8x128xf32> to vector<8x128xf32>
    %646 = vector.shape_cast %636 : vector<8x128xf32> to vector<1x8x128xf32>
    tpu.vector_store %arg7[%643, %c0_301, %c0_302], %646 {strides = array<i32>} : memref<8x8x128xf32, #tpu.memory_space<vmem>>, vector<1x8x128xf32>,
    %c6_i32_303 = arith.constant 6 : i32
    %647 = arith.index_cast %c6_i32_303 : i32 to index
    %c0_304 = arith.constant 0 : index
    %c0_305 = arith.constant 0 : index
    %648 = vector.load %arg7[%647, %c0_304, %c0_305] : memref<8x8x128xf32, #tpu.memory_space<vmem>>, vector<1x8x128xf32>
    %649 = vector.shape_cast %648 : vector<1x8x128xf32> to vector<8x128xf32>
    %c1_306 = arith.constant 1 : index
    %c0_307 = arith.constant 0 : index
    %c0_308 = arith.constant 0 : index
    %650 = vector.load %arg8[%c1_306, %c0_307, %c0_308] : memref<2x8x128xf32, #tpu.memory_space<vmem>>, vector<1x8x128xf32>
    %651 = vector.shape_cast %650 : vector<1x8x128xf32> to vector<8x128xf32>
    %652 = tpu.concatenate %649, %651 in 1 : vector<8x128xf32>, vector<8x128xf32> -> vector<8x256xf32>
    %cst_309 = arith.constant dense<0.000000e+00> : vector<8x512xf32>
    %653 = tpu.matmul %652, %372, %cst_309 {dimension_numbers = #tpu.dot_dimension_numbers<[1], [0], [0], [1], [0, 0, 1, 1], [], []>} : vector<8x256xf32>, vector<256x512xf32>, vector<8x512xf32> -> vector<8x512xf32>
    %654 = arith.addf %653, %376 : vector<8x512xf32>
    %655 = vector.extract_strided_slice %654 {offsets = [0, 0], sizes = [8, 128], strides = [1, 1]} : vector<8x512xf32> to vector<8x128xf32>
    %656 = arith.negf %655 : vector<8x128xf32>
    %657 = math.exp %656 : vector<8x128xf32>
    %cst_310 = arith.constant 1.000000e+00 : f32
    %658 = vector.broadcast %cst_310 : f32 to vector<8x128xf32>
    %659 = arith.addf %658, %657 : vector<8x128xf32>
    %660 = arith.divf %658, %659 : vector<8x128xf32>
    %661 = vector.extract_strided_slice %654 {offsets = [0, 128], sizes = [8, 128], strides = [1, 1]} : vector<8x512xf32> to vector<8x128xf32>
    %662 = arith.negf %661 : vector<8x128xf32>
    %663 = math.exp %662 : vector<8x128xf32>
    %cst_311 = arith.constant 1.000000e+00 : f32
    %664 = vector.broadcast %cst_311 : f32 to vector<8x128xf32>
    %665 = arith.addf %664, %663 : vector<8x128xf32>
    %666 = arith.divf %664, %665 : vector<8x128xf32>
    %667 = vector.extract_strided_slice %654 {offsets = [0, 256], sizes = [8, 128], strides = [1, 1]} : vector<8x512xf32> to vector<8x128xf32>
    %668 = math.tanh %667 : vector<8x128xf32>
    %669 = vector.extract_strided_slice %654 {offsets = [0, 384], sizes = [8, 128], strides = [1, 1]} : vector<8x512xf32> to vector<8x128xf32>
    %670 = arith.negf %669 : vector<8x128xf32>
    %671 = math.exp %670 : vector<8x128xf32>
    %cst_312 = arith.constant 1.000000e+00 : f32
    %672 = vector.broadcast %cst_312 : f32 to vector<8x128xf32>
    %673 = arith.addf %672, %671 : vector<8x128xf32>
    %674 = arith.divf %672, %673 : vector<8x128xf32>
    %c1_313 = arith.constant 1 : index
    %c0_314 = arith.constant 0 : index
    %c0_315 = arith.constant 0 : index
    %675 = vector.load %arg9[%c1_313, %c0_314, %c0_315] : memref<2x8x128xf32, #tpu.memory_space<vmem>>, vector<1x8x128xf32>
    %676 = vector.shape_cast %675 : vector<1x8x128xf32> to vector<8x128xf32>
    %677 = arith.mulf %666, %676 : vector<8x128xf32>
    %678 = arith.mulf %660, %668 : vector<8x128xf32>
    %679 = arith.addf %677, %678 : vector<8x128xf32>
    %680 = math.tanh %679 : vector<8x128xf32>
    %681 = arith.mulf %674, %680 : vector<8x128xf32>
    %c1_316 = arith.constant 1 : index
    %c0_317 = arith.constant 0 : index
    %c0_318 = arith.constant 0 : index
    %682 = vector.load %arg9[%c1_316, %c0_317, %c0_318] : memref<2x8x128xf32, #tpu.memory_space<vmem>>, vector<1x8x128xf32>
    %683 = vector.shape_cast %682 : vector<1x8x128xf32> to vector<8x128xf32>
    %684 = vector.shape_cast %679 : vector<8x128xf32> to vector<1x8x128xf32>
    tpu.vector_store %arg9[%c1_316, %c0_317, %c0_318], %684 {strides = array<i32>} : memref<2x8x128xf32, #tpu.memory_space<vmem>>, vector<1x8x128xf32>,
    %c1_319 = arith.constant 1 : index
    %c0_320 = arith.constant 0 : index
    %c0_321 = arith.constant 0 : index
    %685 = vector.load %arg8[%c1_319, %c0_320, %c0_321] : memref<2x8x128xf32, #tpu.memory_space<vmem>>, vector<1x8x128xf32>
    %686 = vector.shape_cast %685 : vector<1x8x128xf32> to vector<8x128xf32>
    %687 = vector.shape_cast %681 : vector<8x128xf32> to vector<1x8x128xf32>
    tpu.vector_store %arg8[%c1_319, %c0_320, %c0_321], %687 {strides = array<i32>} : memref<2x8x128xf32, #tpu.memory_space<vmem>>, vector<1x8x128xf32>,
    %688 = arith.index_cast %c6_i32_303 : i32 to index
    %c0_322 = arith.constant 0 : index
    %c0_323 = arith.constant 0 : index
    %689 = vector.load %arg7[%688, %c0_322, %c0_323] : memref<8x8x128xf32, #tpu.memory_space<vmem>>, vector<1x8x128xf32>
    %690 = vector.shape_cast %689 : vector<1x8x128xf32> to vector<8x128xf32>
    %691 = vector.shape_cast %681 : vector<8x128xf32> to vector<1x8x128xf32>
    tpu.vector_store %arg7[%688, %c0_322, %c0_323], %691 {strides = array<i32>} : memref<8x8x128xf32, #tpu.memory_space<vmem>>, vector<1x8x128xf32>,
    %c7_i32_324 = arith.constant 7 : i32
    %692 = arith.index_cast %c7_i32_324 : i32 to index
    %c0_325 = arith.constant 0 : index
    %c0_326 = arith.constant 0 : index
    %693 = vector.load %arg7[%692, %c0_325, %c0_326] : memref<8x8x128xf32, #tpu.memory_space<vmem>>, vector<1x8x128xf32>
    %694 = vector.shape_cast %693 : vector<1x8x128xf32> to vector<8x128xf32>
    %c1_327 = arith.constant 1 : index
    %c0_328 = arith.constant 0 : index
    %c0_329 = arith.constant 0 : index
    %695 = vector.load %arg8[%c1_327, %c0_328, %c0_329] : memref<2x8x128xf32, #tpu.memory_space<vmem>>, vector<1x8x128xf32>
    %696 = vector.shape_cast %695 : vector<1x8x128xf32> to vector<8x128xf32>
    %697 = tpu.concatenate %694, %696 in 1 : vector<8x128xf32>, vector<8x128xf32> -> vector<8x256xf32>
    %cst_330 = arith.constant dense<0.000000e+00> : vector<8x512xf32>
    %698 = tpu.matmul %697, %372, %cst_330 {dimension_numbers = #tpu.dot_dimension_numbers<[1], [0], [0], [1], [0, 0, 1, 1], [], []>} : vector<8x256xf32>, vector<256x512xf32>, vector<8x512xf32> -> vector<8x512xf32>
    %699 = arith.addf %698, %376 : vector<8x512xf32>
    %700 = vector.extract_strided_slice %699 {offsets = [0, 0], sizes = [8, 128], strides = [1, 1]} : vector<8x512xf32> to vector<8x128xf32>
    %701 = arith.negf %700 : vector<8x128xf32>
    %702 = math.exp %701 : vector<8x128xf32>
    %cst_331 = arith.constant 1.000000e+00 : f32
    %703 = vector.broadcast %cst_331 : f32 to vector<8x128xf32>
    %704 = arith.addf %703, %702 : vector<8x128xf32>
    %705 = arith.divf %703, %704 : vector<8x128xf32>
    %706 = vector.extract_strided_slice %699 {offsets = [0, 128], sizes = [8, 128], strides = [1, 1]} : vector<8x512xf32> to vector<8x128xf32>
    %707 = arith.negf %706 : vector<8x128xf32>
    %708 = math.exp %707 : vector<8x128xf32>
    %cst_332 = arith.constant 1.000000e+00 : f32
    %709 = vector.broadcast %cst_332 : f32 to vector<8x128xf32>
    %710 = arith.addf %709, %708 : vector<8x128xf32>
    %711 = arith.divf %709, %710 : vector<8x128xf32>
    %712 = vector.extract_strided_slice %699 {offsets = [0, 256], sizes = [8, 128], strides = [1, 1]} : vector<8x512xf32> to vector<8x128xf32>
    %713 = math.tanh %712 : vector<8x128xf32>
    %714 = vector.extract_strided_slice %699 {offsets = [0, 384], sizes = [8, 128], strides = [1, 1]} : vector<8x512xf32> to vector<8x128xf32>
    %715 = arith.negf %714 : vector<8x128xf32>
    %716 = math.exp %715 : vector<8x128xf32>
    %cst_333 = arith.constant 1.000000e+00 : f32
    %717 = vector.broadcast %cst_333 : f32 to vector<8x128xf32>
    %718 = arith.addf %717, %716 : vector<8x128xf32>
    %719 = arith.divf %717, %718 : vector<8x128xf32>
    %c1_334 = arith.constant 1 : index
    %c0_335 = arith.constant 0 : index
    %c0_336 = arith.constant 0 : index
    %720 = vector.load %arg9[%c1_334, %c0_335, %c0_336] : memref<2x8x128xf32, #tpu.memory_space<vmem>>, vector<1x8x128xf32>
    %721 = vector.shape_cast %720 : vector<1x8x128xf32> to vector<8x128xf32>
    %722 = arith.mulf %711, %721 : vector<8x128xf32>
    %723 = arith.mulf %705, %713 : vector<8x128xf32>
    %724 = arith.addf %722, %723 : vector<8x128xf32>
    %725 = math.tanh %724 : vector<8x128xf32>
    %726 = arith.mulf %719, %725 : vector<8x128xf32>
    %c1_337 = arith.constant 1 : index
    %c0_338 = arith.constant 0 : index
    %c0_339 = arith.constant 0 : index
    %727 = vector.load %arg9[%c1_337, %c0_338, %c0_339] : memref<2x8x128xf32, #tpu.memory_space<vmem>>, vector<1x8x128xf32>
    %728 = vector.shape_cast %727 : vector<1x8x128xf32> to vector<8x128xf32>
    %729 = vector.shape_cast %724 : vector<8x128xf32> to vector<1x8x128xf32>
    tpu.vector_store %arg9[%c1_337, %c0_338, %c0_339], %729 {strides = array<i32>} : memref<2x8x128xf32, #tpu.memory_space<vmem>>, vector<1x8x128xf32>,
    %c1_340 = arith.constant 1 : index
    %c0_341 = arith.constant 0 : index
    %c0_342 = arith.constant 0 : index
    %730 = vector.load %arg8[%c1_340, %c0_341, %c0_342] : memref<2x8x128xf32, #tpu.memory_space<vmem>>, vector<1x8x128xf32>
    %731 = vector.shape_cast %730 : vector<1x8x128xf32> to vector<8x128xf32>
    %732 = vector.shape_cast %726 : vector<8x128xf32> to vector<1x8x128xf32>
    tpu.vector_store %arg8[%c1_340, %c0_341, %c0_342], %732 {strides = array<i32>} : memref<2x8x128xf32, #tpu.memory_space<vmem>>, vector<1x8x128xf32>,
    %733 = arith.index_cast %c7_i32_324 : i32 to index
    %c0_343 = arith.constant 0 : index
    %c0_344 = arith.constant 0 : index
    %734 = vector.load %arg7[%733, %c0_343, %c0_344] : memref<8x8x128xf32, #tpu.memory_space<vmem>>, vector<1x8x128xf32>
    %735 = vector.shape_cast %734 : vector<1x8x128xf32> to vector<8x128xf32>
    %736 = vector.shape_cast %726 : vector<8x128xf32> to vector<1x8x128xf32>
    tpu.vector_store %arg7[%733, %c0_343, %c0_344], %736 {strides = array<i32>} : memref<8x8x128xf32, #tpu.memory_space<vmem>>, vector<1x8x128xf32>,
    %c8_i32_345 = arith.constant 8 : i32
    %c0_346 = arith.constant 0 : index
    %c0_347 = arith.constant 0 : index
    %c0_348 = arith.constant 0 : index
    %737 = vector.load %arg7[%c0_346, %c0_347, %c0_348] : memref<8x8x128xf32, #tpu.memory_space<vmem>>, vector<8x8x128xf32>
    %738 = vector.shape_cast %737 : vector<8x8x128xf32> to vector<64x128xf32>
    %c0_349 = arith.constant 0 : index
    %c0_350 = arith.constant 0 : index
    %739 = vector.load %arg4[%c0_349, %c0_350] : memref<128x128xf32, #tpu.memory_space<vmem>>, vector<128x128xf32>
    %cst_351 = arith.constant dense<0.000000e+00> : vector<64x128xf32>
    %740 = tpu.matmul %738, %739, %cst_351 {dimension_numbers = #tpu.dot_dimension_numbers<[1], [0], [0], [1], [0, 0, 1, 1], [], []>} : vector<64x128xf32>, vector<128x128xf32>, vector<64x128xf32> -> vector<64x128xf32>
    %c0_352 = arith.constant 0 : index
    %c0_353 = arith.constant 0 : index
    %741 = vector.load %arg5[%c0_352, %c0_353] : memref<1x128xf32, #tpu.memory_space<vmem>>, vector<1x128xf32>
    %742 = vector.broadcast %741 : vector<1x128xf32> to vector<64x128xf32>
    %743 = arith.addf %740, %742 : vector<64x128xf32>
    %744 = vector.shape_cast %743 : vector<64x128xf32> to vector<8x8x128xf32>
    %c0_354 = arith.constant 0 : index
    %c0_355 = arith.constant 0 : index
    %c0_356 = arith.constant 0 : index
    %745 = vector.load %arg6[%c0_354, %c0_355, %c0_356] : memref<8x8x128xf32, #tpu.memory_space<vmem>>, vector<8x8x128xf32>
    tpu.vector_store %arg6[%c0_354, %c0_355, %c0_356], %744 {strides = array<i32>} : memref<8x8x128xf32, #tpu.memory_space<vmem>>, vector<8x8x128xf32>,
    return
  }
  func.func @transform_0(%arg0: i32) -> (i32, i32, i32) {
    %c0_i32 = arith.constant 0 : i32
    %c0_i32_0 = arith.constant 0 : i32
    %c0_i32_1 = arith.constant 0 : i32
    return %arg0, %c0_i32, %c0_i32_0 : i32, i32, i32
  }
  func.func @transform_1(%arg0: i32) -> (i32, i32, i32) {
    %c0_i32 = arith.constant 0 : i32
    %c0_i32_0 = arith.constant 0 : i32
    %c0_i32_1 = arith.constant 0 : i32
    %c0_i32_2 = arith.constant 0 : i32
    return %c0_i32, %c0_i32_0, %c0_i32_1 : i32, i32, i32
  }
  func.func @transform_2(%arg0: i32) -> (i32, i32, i32) {
    %c0_i32 = arith.constant 0 : i32
    %c0_i32_0 = arith.constant 0 : i32
    %c0_i32_1 = arith.constant 0 : i32
    %c0_i32_2 = arith.constant 0 : i32
    return %c0_i32, %c0_i32_0, %c0_i32_1 : i32, i32, i32
  }
  func.func @transform_3(%arg0: i32) -> (i32, i32) {
    %c0_i32 = arith.constant 0 : i32
    %c0_i32_0 = arith.constant 0 : i32
    %c0_i32_1 = arith.constant 0 : i32
    return %c0_i32, %c0_i32_0 : i32, i32
  }
  func.func @transform_4(%arg0: i32) -> (i32, i32) {
    %c0_i32 = arith.constant 0 : i32
    %c0_i32_0 = arith.constant 0 : i32
    %c0_i32_1 = arith.constant 0 : i32
    return %c0_i32, %c0_i32_0 : i32, i32
  }
  func.func @transform_5(%arg0: i32) -> (i32, i32, i32) {
    %c0_i32 = arith.constant 0 : i32
    %c0_i32_0 = arith.constant 0 : i32
    %c0_i32_1 = arith.constant 0 : i32
    return %arg0, %c0_i32, %c0_i32_0 : i32, i32, i32
  }
}

</mosaic_0001>

<llo_original>
// kernel: tpu_custom_call.1
$region0: #{tpu_custom_call.1}
  #allocation0 [shape = 'u32[]', space=smem, size = 0x4, offset = 0x4, fixed_abs, tag = 'smem constant byte address 0x4 - core index']
  #allocation1 [shape = 'u32[144,128]{1,0:T(1,128)}', space=vmem, size = 0x12000, scoped, tag = 'internal scratch']
  #allocation2 [shape = 'f32[8,8,128]{2,1,0:T(8,128)}', space=vmem, size = 0x8000, scoped, tag = 'scratch operand']
  #allocation3 [shape = 'f32[2,8,128]{2,1,0:T(8,128)}', space=vmem, size = 0x2000, scoped, tag = 'scratch operand']
  #allocation4 [shape = 'f32[2,8,128]{2,1,0:T(8,128)}', space=vmem, size = 0x2000, scoped, tag = 'scratch operand']
  %s0 = inlined_call_operand.hbm [shape: f32[16,8,128], index: 0, kind: input, shape index: {}]
  %s1 = inlined_call_operand.hbm [shape: f32[2,256,512], index: 1, kind: input, shape index: {}]
  %s2 = inlined_call_operand.hbm [shape: f32[2,1,512], index: 2, kind: input, shape index: {}]
  %s3 = inlined_call_operand.hbm [shape: f32[128,128], index: 3, kind: input, shape index: {}]
  %s4 = inlined_call_operand.vmem [shape: f32[1,128], index: 4, kind: input, shape index: {}]
  %s5 = inlined_call_operand.hbm [shape: f32[16,8,128], index: 5, kind: output, shape index: {}]
  %s6 = sld [smem:[#allocation0]]
  $region73: #{tpu_custom_call.1} parent=0
    _
  %s8 = ssub.s32 1, %s6
  %s9 = scalar_select 0, %s8, %s6
  $region1: #{tpu_custom_call.1} parent=0
    #allocation5 [shape = 'u8[65536]{0}', space=vmem, size = 0x10000, scoped, tag = 'input window, operand 0']
    #allocation6 [shape = 's32[2]{0}', space=sflag, size = 0x8, scoped, tag = 'scoped memory for tpu_custom_call.1']
    #allocation7 [shape = 's32[2]{0}', space=sflag, size = 0x8, scoped, tag = 'scoped memory for tpu_custom_call.1']
    #allocation8 [shape = 'u8[1048576]{0}', space=vmem, size = 0x100000, scoped, tag = 'input window, operand 1, single buffered']
    #allocation9 [shape = 's32[1]{0}', space=sflag, size = 0x4, scoped, tag = 'scoped memory for tpu_custom_call.1']
    #allocation10 [shape = 'u8[4096]{0}', space=vmem, size = 0x1000, scoped, tag = 'input window, operand 2, single buffered']
    #allocation11 [shape = 'u8[65536]{0}', space=vmem, size = 0x10000, scoped, tag = 'input window, operand 3, single buffered']
    #allocation12 [shape = 's32[1]{0}', space=sflag, size = 0x4, scoped, tag = 'scoped memory for tpu_custom_call.1']
    #allocation13 [shape = 'u8[65536]{0}', space=vmem, size = 0x10000, scoped, tag = 'output window, operand 0']
    %10 = vsyncpa [#allocation6], 0
    %s11 = scalar_lea.sflag [#allocation6], 1
    %12 = vsyncpa %s11, 0
    %13 = vsyncpa [#allocation9], 0
    %14 = vsyncpa [#allocation12], 0
    %15 = vsyncpa [#allocation7], 0
    %s16 = scalar_lea.sflag [#allocation7], 1
    %17 = vsyncpa %s16, 0
    loop: start=0, step=1, limit=4
    $region2: #{tpu_custom_call.1} parent=1 // loop_pre_header
      _
    $region3: #{tpu_custom_call.1} parent=1 // loop_header
      %s19 = sphi 0, %s23
      %p20 = scmp.ge.s32.totalorder %s19, 4
      %s29 = sphi 0, %s31
      %s32 = sphi 0, %s29
      %s33 = sphi 0, %s32
      %s49 = sphi 0, %s33
      %s53 = sphi 0, %s53
      %s55 = sphi 0, %s53
      %s56 = sphi 0, %s55
      %s70 = sphi 0, %s56
      %s74 = sphi 0, %s74
      %s76 = sphi 0, %s74
      %s77 = sphi 0, %s76
      %s91 = sphi 0, %s77
      %s95 = sphi 0, %s95
      %s97 = sphi 0, %s95
      %s98 = sphi 0, %s97
      %s112 = sphi 0, %s98
      %s116 = sphi 0, %s116
      %s118 = sphi 0, %s116
      %s119 = sphi 0, %s118
      %s133 = sphi 0, %s119
      %s139 = sphi 0, %s141
      %s142 = sphi 0, %s139
      %s143 = sphi 0, %s142
      %s159 = sphi 0, %s143
    $region4: #{tpu_custom_call.1} parent=1 // loop_header_branch
      %22 = sbr.rel (%p20) target = $region8
    $region5: #{tpu_custom_call.1} parent=1 // loop_body
      %s24 = ssub.s32 %s19, 1
      %s25 = ssub.s32 %s19, 2
      %s26 = sadd.s32 %s19, 1
      %s27 = ssub.s32 %s19, %s26
      %p28 = scmp.eq.s32.totalorder %s27, 0
      %s30 = sadd.s32 %s29, 1
      %s31 = scalar_select %p28, %s29, %s30
      %p34 = pneg %p28
      %p35 = scmp.eq.s32.totalorder %s19, 1
      %p36 = por %p34, %p35
      %p37 = scmp.ne.s32.totalorder %s29, %s32
      %p38 = scmp.eq.s32.totalorder %s19, 0
      %p39 = por %p37, %p38
      %p40 = scmp.ne.s32.totalorder %s29, %s32
      %p41 = scmp.eq.s32.totalorder %s24, 1
      %p42 = por %p40, %p41
      %p43 = scmp.ne.s32.totalorder %s32, %s33
      %p44 = scmp.eq.s32.totalorder %s24, 0
      %p45 = por %p43, %p44
      %p46 = scmp.ne.s32.totalorder %s32, %s33
      %p47 = scmp.eq.s32.totalorder %s25, 1
      %p48 = por %p46, %p47
      %p50 = scmp.ne.s32.totalorder %s33, %s49
      %p51 = scmp.eq.s32.totalorder %s25, 0
      %p52 = por %p50, %p51
      %s54 = sadd.s32 %s53, 1
      %p57 = scmp.eq.s32.totalorder %s19, 1
      %p58 = scmp.ne.s32.totalorder %s53, %s55
      %p59 = scmp.eq.s32.totalorder %s19, 0
      %p60 = por %p58, %p59
      %p61 = scmp.ne.s32.totalorder %s53, %s55
      %p62 = scmp.eq.s32.totalorder %s24, 1
      %p63 = por %p61, %p62
      %p64 = scmp.ne.s32.totalorder %s55, %s56
      %p65 = scmp.eq.s32.totalorder %s24, 0
      %p66 = por %p64, %p65
      %p67 = scmp.ne.s32.totalorder %s55, %s56
      %p68 = scmp.eq.s32.totalorder %s25, 1
      %p69 = por %p67, %p68
      %p71 = scmp.ne.s32.totalorder %s56, %s70
      %p72 = scmp.eq.s32.totalorder %s25, 0
      %p73 = por %p71, %p72
      %s75 = sadd.s32 %s74, 1
      %p78 = scmp.eq.s32.totalorder %s19, 1
      %p79 = scmp.ne.s32.totalorder %s74, %s76
      %p80 = scmp.eq.s32.totalorder %s19, 0
      %p81 = por %p79, %p80
      %p82 = scmp.ne.s32.totalorder %s74, %s76
      %p83 = scmp.eq.s32.totalorder %s24, 1
      %p84 = por %p82, %p83
      %p85 = scmp.ne.s32.totalorder %s76, %s77
      %p86 = scmp.eq.s32.totalorder %s24, 0
      %p87 = por %p85, %p86
      %p88 = scmp.ne.s32.totalorder %s76, %s77
      %p89 = scmp.eq.s32.totalorder %s25, 1
      %p90 = por %p88, %p89
      %p92 = scmp.ne.s32.totalorder %s77, %s91
      %p93 = scmp.eq.s32.totalorder %s25, 0
      %p94 = por %p92, %p93
      %s96 = sadd.s32 %s95, 1
      %p99 = scmp.eq.s32.totalorder %s19, 1
      %p100 = scmp.ne.s32.totalorder %s95, %s97
      %p101 = scmp.eq.s32.totalorder %s19, 0
      %p102 = por %p100, %p101
      %p103 = scmp.ne.s32.totalorder %s95, %s97
      %p104 = scmp.eq.s32.totalorder %s24, 1
      %p105 = por %p103, %p104
      %p106 = scmp.ne.s32.totalorder %s97, %s98
      %p107 = scmp.eq.s32.totalorder %s24, 0
      %p108 = por %p106, %p107
      %p109 = scmp.ne.s32.totalorder %s97, %s98
      %p110 = scmp.eq.s32.totalorder %s25, 1
      %p111 = por %p109, %p110
      %p113 = scmp.ne.s32.totalorder %s98, %s112
      %p114 = scmp.eq.s32.totalorder %s25, 0
      %p115 = por %p113, %p114
      %s117 = sadd.s32 %s116, 1
      %p120 = scmp.eq.s32.totalorder %s19, 1
      %p121 = scmp.ne.s32.totalorder %s116, %s118
      %p122 = scmp.eq.s32.totalorder %s19, 0
      %p123 = por %p121, %p122
      %p124 = scmp.ne.s32.totalorder %s116, %s118
      %p125 = scmp.eq.s32.totalorder %s24, 1
      %p126 = por %p124, %p125
      %p127 = scmp.ne.s32.totalorder %s118, %s119
      %p128 = scmp.eq.s32.totalorder %s24, 0
      %p129 = por %p127, %p128
      %p130 = scmp.ne.s32.totalorder %s118, %s119
      %p131 = scmp.eq.s32.totalorder %s25, 1
      %p132 = por %p130, %p131
      %p134 = scmp.ne.s32.totalorder %s119, %s133
      %p135 = scmp.eq.s32.totalorder %s25, 0
      %p136 = por %p134, %p135
      %s137 = ssub.s32 %s19, %s26
      %p138 = scmp.eq.s32.totalorder %s137, 0
      %s140 = sadd.s32 %s139, 1
      %s141 = scalar_select %p138, %s139, %s140
      %p144 = pneg %p138
      %p145 = scmp.eq.s32.totalorder %s19, 1
      %p146 = por %p144, %p145
      %p147 = scmp.ne.s32.totalorder %s139, %s142
      %p148 = scmp.eq.s32.totalorder %s19, 0
      %p149 = por %p147, %p148
      %p150 = scmp.ne.s32.totalorder %s139, %s142
      %p151 = scmp.eq.s32.totalorder %s24, 1
      %p152 = por %p150, %p151
      %p153 = scmp.ne.s32.totalorder %s142, %s143
      %p154 = scmp.eq.s32.totalorder %s24, 0
      %p155 = por %p153, %p154
      %p156 = scmp.ne.s32.totalorder %s142, %s143
      %p157 = scmp.eq.s32.totalorder %s25, 1
      %p158 = por %p156, %p157
      %p160 = scmp.ne.s32.totalorder %s143, %s159
      %p161 = scmp.eq.s32.totalorder %s25, 0
      %p162 = por %p160, %p161
      %p163 = scmp.le.s32.totalorder 1, %s19
      %p164 = scmp.lt.s32.totalorder %s19, 3
      %p165 = pnand %p163, %p164
      %p166 = pneg %p165
      // Predicated region
      $region9: #{tpu_custom_call.1} parent=5 // pred_check
        _
      $region10: #{tpu_custom_call.1} parent=5 // pred_check_branch
        %168 = sbr.rel (%p165) target = $region12
      $region11: #{tpu_custom_call.1} parent=5 // pred_region
        %s169 = ssub.s32 %s19, 1
        // Predicated region
        $region13: #{tpu_custom_call.1} parent=11 // pred_check
          %p170 = pneg %p66
        $region14: #{tpu_custom_call.1} parent=11 // pred_check_branch
          %172 = sbr.rel (%p170) target = $region16
        $region15: #{tpu_custom_call.1} parent=11 // pred_region
          %s174 = ssub.s32 32768, 32768
          %175 = vsyncadd [#allocation9], %s174
          %s176 = sshll.u32 [#allocation8], 4
          %s177 = int_to_ptr.vmem [resolvable:$true] %s176
          %182 = dma.hbm_to_vmem [thread:$0]  %s1, 32768, %s177, [#allocation9], 512, 512, 32
        $region16: #{tpu_custom_call.1} parent=11 // pred_fallthru
          _
        // Predicated region
        $region17: #{tpu_custom_call.1} parent=11 // pred_check
          %p183 = pneg %p87
        $region18: #{tpu_custom_call.1} parent=11 // pred_check_branch
          %185 = sbr.rel (%p183) target = $region20
        $region19: #{tpu_custom_call.1} parent=11 // pred_region
          %s187 = ssub.s32 128, 128
          %188 = vsyncadd [#allocation9], %s187
          %s189 = sshll.u32 [#allocation10], 4
          %s190 = int_to_ptr.vmem [resolvable:$true] %s189
          %195 = dma.hbm_to_vmem [thread:$0]  %s2, 128, %s190, [#allocation9], 64, 64, 4
        $region20: #{tpu_custom_call.1} parent=11 // pred_fallthru
          _
        // Predicated region
        $region21: #{tpu_custom_call.1} parent=11 // pred_check
          %p196 = pneg %p108
        $region22: #{tpu_custom_call.1} parent=11 // pred_check_branch
          %198 = sbr.rel (%p196) target = $region24
        $region23: #{tpu_custom_call.1} parent=11 // pred_region
          %s200 = ssub.s32 2048, 2048
          %201 = vsyncadd [#allocation12], %s200
          %s202 = sshll.u32 [#allocation11], 4
          %s203 = int_to_ptr.vmem [resolvable:$true] %s202
          %208 = dma.hbm_to_vmem [thread:$0]  %s3, 2048, %s203, [#allocation12], 128, 128, 8
        $region24: #{tpu_custom_call.1} parent=11 // pred_fallthru
          _
        // Predicated region
        $region25: #{tpu_custom_call.1} parent=11 // pred_check
          %p209 = pneg %p129
        $region26: #{tpu_custom_call.1} parent=11 // pred_check_branch
          %211 = sbr.rel (%p209) target = $region28
        $region27: #{tpu_custom_call.1} parent=11 // pred_region
          _
        $region28: #{tpu_custom_call.1} parent=11 // pred_fallthru
          _
      $region12: #{tpu_custom_call.1} parent=5 // pred_fallthru
        _
      %p212 = scmp.lt.s32.totalorder %s19, 2
      // Predicated region
      $region29: #{tpu_custom_call.1} parent=5 // pred_check
        %p213 = pneg %p212
      $region30: #{tpu_custom_call.1} parent=5 // pred_check_branch
        %215 = sbr.rel (%p213) target = $region32
      $region31: #{tpu_custom_call.1} parent=5 // pred_region
        // Predicated region
        $region33: #{tpu_custom_call.1} parent=31 // pred_check
          %p216 = pneg %p39
        $region34: #{tpu_custom_call.1} parent=31 // pred_check_branch
          %218 = sbr.rel (%p216) target = $region36
        $region35: #{tpu_custom_call.1} parent=31 // pred_region
          %s219 = sand.u32 %s29, 1
          %s220 = scalar_lea.sflag [#allocation6], %s219
          %s221 = sand.u32 %s29, 1
          %s222 = smul.addr %s221, 64
          %s223 = scalar_lea.vmem [#allocation5], %s222
          %s224 = smul.u32 8, %s19
          %s226 = ssub.s32 1024, 1024
          %227 = vsyncadd %s220, %s226
          %s228 = smul.addr %s224, 128
          %s229 = scalar_lea.hbm %s0, %s228
          %s230 = sshll.u32 %s223, 4
          %s231 = int_to_ptr.vmem [resolvable:$true] %s230
          %236 = dma.hbm_to_vmem [thread:$0]  %s229, 1024, %s231, %s220, 128, 128, 8
        $region36: #{tpu_custom_call.1} parent=31 // pred_fallthru
          _
      $region32: #{tpu_custom_call.1} parent=5 // pred_fallthru
        _
      %p237 = scmp.le.s32.totalorder 1, %s19
      %p238 = scmp.lt.s32.totalorder %s19, 3
      %p239 = pnand %p237, %p238
      %p240 = pneg %p239
      // Predicated region
      $region37: #{tpu_custom_call.1} parent=5 // pred_check
        _
      $region38: #{tpu_custom_call.1} parent=5 // pred_check_branch
        %242 = sbr.rel (%p239) target = $region40
      $region39: #{tpu_custom_call.1} parent=5 // pred_region
        %s243 = ssub.s32 %s19, 1
        %s244 = sand.u32 %s32, 1
        %s245 = scalar_lea.sflag [#allocation6], %s244
        %s246 = sand.u32 %s32, 1
        %s247 = smul.addr %s246, 64
        %s248 = scalar_lea.vmem [#allocation5], %s247
        // Predicated region
        $region41: #{tpu_custom_call.1} parent=39 // pred_check
          %p249 = pneg %p45
        $region42: #{tpu_custom_call.1} parent=39 // pred_check_branch
          %251 = sbr.rel (%p249) target = $region44
        $region43: #{tpu_custom_call.1} parent=39 // pred_region
          %252 = dma.done %s245, 1024
        $region44: #{tpu_custom_call.1} parent=39 // pred_fallthru
          _
        // Predicated region
        $region45: #{tpu_custom_call.1} parent=39 // pred_check
          %p253 = pneg %p66
        $region46: #{tpu_custom_call.1} parent=39 // pred_check_branch
          %255 = sbr.rel (%p253) target = $region48
        $region47: #{tpu_custom_call.1} parent=39 // pred_region
          %256 = dma.done [#allocation9], 32768
        $region48: #{tpu_custom_call.1} parent=39 // pred_fallthru
          _
        // Predicated region
        $region49: #{tpu_custom_call.1} parent=39 // pred_check
          %p257 = pneg %p87
        $region50: #{tpu_custom_call.1} parent=39 // pred_check_branch
          %259 = sbr.rel (%p257) target = $region52
        $region51: #{tpu_custom_call.1} parent=39 // pred_region
          %260 = dma.done [#allocation9], 128
        $region52: #{tpu_custom_call.1} parent=39 // pred_fallthru
          _
        // Predicated region
        $region53: #{tpu_custom_call.1} parent=39 // pred_check
          %p261 = pneg %p108
        $region54: #{tpu_custom_call.1} parent=39 // pred_check_branch
          %263 = sbr.rel (%p261) target = $region56
        $region55: #{tpu_custom_call.1} parent=39 // pred_region
          %264 = dma.done [#allocation12], 2048
        $region56: #{tpu_custom_call.1} parent=39 // pred_fallthru
          _
        %s265 = sand.u32 %s32, 1
        %s266 = scalar_lea.sflag [#allocation6], %s265
        %s267 = sand.u32 %s32, 1
        %s268 = smul.addr %s267, 64
        %s269 = scalar_lea.vmem [#allocation5], %s268
        %p270 = pneg %p45
        %p271 = pneg %p42
        %p272 = pneg %p66
        %p273 = pneg %p63
        %p274 = pneg %p87
        %p275 = pneg %p84
        %p276 = pneg %p108
        %p277 = pneg %p105
        %p278 = pneg %p129
        %p279 = pneg %p126
        %p280 = pneg %p155
        %p281 = pneg %p152
        %s282 = sand.u32 %s142, 1
        %s283 = scalar_lea.sflag [#allocation7], %s282
        %s284 = sand.u32 %s142, 1
        %s285 = smul.addr %s284, 64
        %s286 = scalar_lea.vmem [#allocation13], %s285
        %s287 = smul.u32 8, %s24
        %s288 = smul.u32 8, %s24
        %p289 = scmp.eq.s32.totalorder %s24, 0
        // Predicated region
        $region57: #{tpu_custom_call.1} parent=39 // pred_check
          %p290 = pneg %p289
        $region58: #{tpu_custom_call.1} parent=39 // pred_check_branch
          %292 = sbr.rel (%p290) target = $region60
        $region59: #{tpu_custom_call.1} parent=39 // pred_region
          %293 = vst [vmem:[#allocation3] sm:$0xff] 0.0
          %294 = vst [vmem:[#allocation3 + $0x8] sm:$0xff] 0.0
          %295 = vst [vmem:[#allocation4] sm:$0xff] 0.0
          %296 = vst [vmem:[#allocation4 + $0x8] sm:$0xff] 0.0
        $region60: #{tpu_custom_call.1} parent=39 // pred_fallthru
          _
        %v297 = vld [vmem:[%s248] sm:$0xff]
        %v298 = vld [vmem:[%s248 + $0x8] sm:$0xff]
        %v299 = vld [vmem:[%s248 + $0x10] sm:$0xff]
        %v300 = vld [vmem:[%s248 + $0x18] sm:$0xff]
        %v301 = vld [vmem:[%s248 + $0x20] sm:$0xff]
        %v302 = vld [vmem:[%s248 + $0x28] sm:$0xff]
        %v303 = vld [vmem:[%s248 + $0x30] sm:$0xff]
        %v304 = vld [vmem:[%s248 + $0x38] sm:$0xff]
        %305 = vst [vmem:[#allocation2] sm:$0xff] %v297
        %306 = vst [vmem:[#allocation2 + $0x8] sm:$0xff] %v298
        %307 = vst [vmem:[#allocation2 + $0x10] sm:$0xff] %v299
        %308 = vst [vmem:[#allocation2 + $0x18] sm:$0xff] %v300
        %309 = vst [vmem:[#allocation2 + $0x20] sm:$0xff] %v301
        %310 = vst [vmem:[#allocation2 + $0x28] sm:$0xff] %v302
        %311 = vst [vmem:[#allocation2 + $0x30] sm:$0xff] %v303
        %312 = vst [vmem:[#allocation2 + $0x38] sm:$0xff] %v304
        %v313 = vld [vmem:[#allocation8] sm:$0xff]
        %v314 = vld [vmem:[#allocation8 + $0x8] sm:$0xff]
        %v315 = vld [vmem:[#allocation8 + $0x10] sm:$0xff]
        %v316 = vld [vmem:[#allocation8 + $0x18] sm:$0xff]
        %v317 = vld [vmem:[#allocation8 + $0x20] sm:$0xff]
        %v318 = vld [vmem:[#allocation8 + $0x28] sm:$0xff]
        %v319 = vld [vmem:[#allocation8 + $0x30] sm:$0xff]
        %v320 = vld [vmem:[#allocation8 + $0x38] sm:$0xff]
        %v321 = vld [vmem:[#allocation8 + $0x40] sm:$0xff]
        %v322 = vld [vmem:[#allocation8 + $0x48] sm:$0xff]
        %v323 = vld [vmem:[#allocation8 + $0x50] sm:$0xff]
        %v324 = vld [vmem:[#allocation8 + $0x58] sm:$0xff]
        %v325 = vld [vmem:[#allocation8 + $0x60] sm:$0xff]
        %v326 = vld [vmem:[#allocation8 + $0x68] sm:$0xff]
        %v327 = vld [vmem:[#allocation8 + $0x70] sm:$0xff]
        %v328 = vld [vmem:[#allocation8 + $0x78] sm:$0xff]
        %v329 = vld [vmem:[#allocation8 + $0x80] sm:$0xff]
        %v330 = vld [vmem:[#allocation8 + $0x88] sm:$0xff]
        %v331 = vld [vmem:[#allocation8 + $0x90] sm:$0xff]
        %v332 = vld [vmem:[#allocation8 + $0x98] sm:$0xff]
        %v333 = vld [vmem:[#allocation8 + $0xa0] sm:$0xff]
        %v334 = vld [vmem:[#allocation8 + $0xa8] sm:$0xff]
        %v335 = vld [vmem:[#allocation8 + $0xb0] sm:$0xff]
        %v336 = vld [vmem:[#allocation8 + $0xb8] sm:$0xff]
        %v337 = vld [vmem:[#allocation8 + $0xc0] sm:$0xff]
        %v338 = vld [vmem:[#allocation8 + $0xc8] sm:$0xff]
        %v339 = vld [vmem:[#allocation8 + $0xd0] sm:$0xff]
        %v340 = vld [vmem:[#allocation8 + $0xd8] sm:$0xff]
        %v341 = vld [vmem:[#allocation8 + $0xe0] sm:$0xff]
        %v342 = vld [vmem:[#allocation8 + $0xe8] sm:$0xff]
        %v343 = vld [vmem:[#allocation8 + $0xf0] sm:$0xff]
        %v344 = vld [vmem:[#allocation8 + $0xf8] sm:$0xff]
        %v345 = vld [vmem:[#allocation8 + $0x100] sm:$0xff]
        %v346 = vld [vmem:[#allocation8 + $0x108] sm:$0xff]
        %v347 = vld [vmem:[#allocation8 + $0x110] sm:$0xff]
        %v348 = vld [vmem:[#allocation8 + $0x118] sm:$0xff]
        %v349 = vld [vmem:[#allocation8 + $0x120] sm:$0xff]
        %v350 = vld [vmem:[#allocation8 + $0x128] sm:$0xff]
        %v351 = vld [vmem:[#allocation8 + $0x130] sm:$0xff]
        %v352 = vld [vmem:[#allocation8 + $0x138] sm:$0xff]
        %v353 = vld [vmem:[#allocation8 + $0x140] sm:$0xff]
        %v354 = vld [vmem:[#allocation8 + $0x148] sm:$0xff]
        %v355 = vld [vmem:[#allocation8 + $0x150] sm:$0xff]
        %v356 = vld [vmem:[#allocation8 + $0x158] sm:$0xff]
        %v357 = vld [vmem:[#allocation8 + $0x160] sm:$0xff]
        %v358 = vld [vmem:[#allocation8 + $0x168] sm:$0xff]
        %v359 = vld [vmem:[#allocation8 + $0x170] sm:$0xff]
        %v360 = vld [vmem:[#allocation8 + $0x178] sm:$0xff]
        %v361 = vld [vmem:[#allocation8 + $0x180] sm:$0xff]
        %v362 = vld [vmem:[#allocation8 + $0x188] sm:$0xff]
        %v363 = vld [vmem:[#allocation8 + $0x190] sm:$0xff]
        %v364 = vld [vmem:[#allocation8 + $0x198] sm:$0xff]
        %v365 = vld [vmem:[#allocation8 + $0x1a0] sm:$0xff]
        %v366 = vld [vmem:[#allocation8 + $0x1a8] sm:$0xff]
        %v367 = vld [vmem:[#allocation8 + $0x1b0] sm:$0xff]
        %v368 = vld [vmem:[#allocation8 + $0x1b8] sm:$0xff]
        %v369 = vld [vmem:[#allocation8 + $0x1c0] sm:$0xff]
        %v370 = vld [vmem:[#allocation8 + $0x1c8] sm:$0xff]
        %v371 = vld [vmem:[#allocation8 + $0x1d0] sm:$0xff]
        %v372 = vld [vmem:[#allocation8 + $0x1d8] sm:$0xff]
        %v373 = vld [vmem:[#allocation8 + $0x1e0] sm:$0xff]
        %v374 = vld [vmem:[#allocation8 + $0x1e8] sm:$0xff]
        %v375 = vld [vmem:[#allocation8 + $0x1f0] sm:$0xff]
        %v376 = vld [vmem:[#allocation8 + $0x1f8] sm:$0xff]
        %v377 = vld [vmem:[#allocation8 + $0x200] sm:$0xff]
        %v378 = vld [vmem:[#allocation8 + $0x208] sm:$0xff]
        %v379 = vld [vmem:[#allocation8 + $0x210] sm:$0xff]
        %v380 = vld [vmem:[#allocation8 + $0x218] sm:$0xff]
        %v381 = vld [vmem:[#allocation8 + $0x220] sm:$0xff]
        %v382 = vld [vmem:[#allocation8 + $0x228] sm:$0xff]
        %v383 = vld [vmem:[#allocation8 + $0x230] sm:$0xff]
        %v384 = vld [vmem:[#allocation8 + $0x238] sm:$0xff]
        %v385 = vld [vmem:[#allocation8 + $0x240] sm:$0xff]
        %v386 = vld [vmem:[#allocation8 + $0x248] sm:$0xff]
        %v387 = vld [vmem:[#allocation8 + $0x250] sm:$0xff]
        %v388 = vld [vmem:[#allocation8 + $0x258] sm:$0xff]
        %v389 = vld [vmem:[#allocation8 + $0x260] sm:$0xff]
        %v390 = vld [vmem:[#allocation8 + $0x268] sm:$0xff]
        %v391 = vld [vmem:[#allocation8 + $0x270] sm:$0xff]
        %v392 = vld [vmem:[#allocation8 + $0x278] sm:$0xff]
        %v393 = vld [vmem:[#allocation8 + $0x280] sm:$0xff]
        %v394 = vld [vmem:[#allocation8 + $0x288] sm:$0xff]
        %v395 = vld [vmem:[#allocation8 + $0x290] sm:$0xff]
        %v396 = vld [vmem:[#allocation8 + $0x298] sm:$0xff]
        %v397 = vld [vmem:[#allocation8 + $0x2a0] sm:$0xff]
        %v398 = vld [vmem:[#allocation8 + $0x2a8] sm:$0xff]
        %v399 = vld [vmem:[#allocation8 + $0x2b0] sm:$0xff]
        %v400 = vld [vmem:[#allocation8 + $0x2b8] sm:$0xff]
        %v401 = vld [vmem:[#allocation8 + $0x2c0] sm:$0xff]
        %v402 = vld [vmem:[#allocation8 + $0x2c8] sm:$0xff]
        %v403 = vld [vmem:[#allocation8 + $0x2d0] sm:$0xff]
        %v404 = vld [vmem:[#allocation8 + $0x2d8] sm:$0xff]
        %v405 = vld [vmem:[#allocation8 + $0x2e0] sm:$0xff]
        %v406 = vld [vmem:[#allocation8 + $0x2e8] sm:$0xff]
        %v407 = vld [vmem:[#allocation8 + $0x2f0] sm:$0xff]
        %v408 = vld [vmem:[#allocation8 + $0x2f8] sm:$0xff]
        %v409 = vld [vmem:[#allocation8 + $0x300] sm:$0xff]
        %v410 = vld [vmem:[#allocation8 + $0x308] sm:$0xff]
        %v411 = vld [vmem:[#allocation8 + $0x310] sm:$0xff]
        %v412 = vld [vmem:[#allocation8 + $0x318] sm:$0xff]
        %v413 = vld [vmem:[#allocation8 + $0x320] sm:$0xff]
        %v414 = vld [vmem:[#allocation8 + $0x328] sm:$0xff]
        %v415 = vld [vmem:[#allocation8 + $0x330] sm:$0xff]
        %v416 = vld [vmem:[#allocation8 + $0x338] sm:$0xff]
        %v417 = vld [vmem:[#allocation8 + $0x340] sm:$0xff]
        %v418 = vld [vmem:[#allocation8 + $0x348] sm:$0xff]
        %v419 = vld [vmem:[#allocation8 + $0x350] sm:$0xff]
        %v420 = vld [vmem:[#allocation8 + $0x358] sm:$0xff]
        %v421 = vld [vmem:[#allocation8 + $0x360] sm:$0xff]
        %v422 = vld [vmem:[#allocation8 + $0x368] sm:$0xff]
        %v423 = vld [vmem:[#allocation8 + $0x370] sm:$0xff]
        %v424 = vld [vmem:[#allocation8 + $0x378] sm:$0xff]
        %v425 = vld [vmem:[#allocation8 + $0x380] sm:$0xff]
        %v426 = vld [vmem:[#allocation8 + $0x388] sm:$0xff]
        %v427 = vld [vmem:[#allocation8 + $0x390] sm:$0xff]
        %v428 = vld [vmem:[#allocation8 + $0x398] sm:$0xff]
        %v429 = vld [vmem:[#allocation8 + $0x3a0] sm:$0xff]
        %v430 = vld [vmem:[#allocation8 + $0x3a8] sm:$0xff]
        %v431 = vld [vmem:[#allocation8 + $0x3b0] sm:$0xff]
        %v432 = vld [vmem:[#allocation8 + $0x3b8] sm:$0xff]
        %v433 = vld [vmem:[#allocation8 + $0x3c0] sm:$0xff]
        %v434 = vld [vmem:[#allocation8 + $0x3c8] sm:$0xff]
        %v435 = vld [vmem:[#allocation8 + $0x3d0] sm:$0xff]
        %v436 = vld [vmem:[#allocation8 + $0x3d8] sm:$0xff]
        %v437 = vld [vmem:[#allocation8 + $0x3e0] sm:$0xff]
        %v438 = vld [vmem:[#allocation8 + $0x3e8] sm:$0xff]
        %v439 = vld [vmem:[#allocation8 + $0x3f0] sm:$0xff]
        %v440 = vld [vmem:[#allocation8 + $0x3f8] sm:$0xff]
        %v441 = vld [vmem:[#allocation10] sm:$0xf]
        %v443 = vlaneseq
        %v444 = vshrl.u32 %v443, 7
        %v445 = vsub.s32 0, %v444
        %v446 = vrot.slane %v441, %v445
        %v447 = vlaneseq
        %v448 = vshrl.u32 %v447, 7
        %v449 = vsub.s32 1, %v448
        %v450 = vrot.slane %v441, %v449
        %v451 = vlaneseq
        %v452 = vshrl.u32 %v451, 7
        %v453 = vsub.s32 2, %v452
        %v454 = vrot.slane %v441, %v453
        %v455 = vlaneseq
        %v456 = vshrl.u32 %v455, 7
        %v457 = vsub.s32 3, %v456
        %v458 = vrot.slane %v441, %v457
        %v463 = vld [vmem:[#allocation2] sm:$0xff]
        %v464 = vld [vmem:[#allocation3] sm:$0xff]
        %465 = vmatprep.subr.mxu0 %v314
        %466 = vmatpush1.msra.mxu0 %v313
        %467 = vmatprep.subr.mxu0 %v318
        %468 = vmatpush1.msra.mxu0 %v317
        %469 = vmatprep.subr.mxu0 %v322
        %470 = vmatpush1.msra.mxu0 %v321
        %471 = vmatprep.subr.mxu0 %v326
        %472 = vmatpush1.msra.mxu0 %v325
        %473 = vmatprep.subr.mxu0 %v330
        %474 = vmatpush1.msra.mxu0 %v329
        %475 = vmatprep.subr.mxu0 %v334
        %476 = vmatpush1.msra.mxu0 %v333
        %477 = vmatprep.subr.mxu0 %v338
        %478 = vmatpush1.msra.mxu0 %v337
        %479 = vmatprep.subr.mxu0 %v342
        %480 = vmatpush1.msra.mxu0 %v341
        %481 = vmatprep.subr.mxu0 %v346
        %482 = vmatpush1.msra.mxu0 %v345
        %483 = vmatprep.subr.mxu0 %v350
        %484 = vmatpush1.msra.mxu0 %v349
        %485 = vmatprep.subr.mxu0 %v354
        %486 = vmatpush1.msra.mxu0 %v353
        %487 = vmatprep.subr.mxu0 %v358
        %488 = vmatpush1.msra.mxu0 %v357
        %489 = vmatprep.subr.mxu0 %v362
        %490 = vmatpush1.msra.mxu0 %v361
        %491 = vmatprep.subr.mxu0 %v366
        %492 = vmatpush1.msra.mxu0 %v365
        %493 = vmatprep.subr.mxu0 %v370
        %494 = vmatpush1.msra.mxu0 %v369
        %495 = vmatprep.subr.mxu0 %v374
        %496 = vmatpush1.msra.mxu0 %v373
        %497 = vmatprep.subr.mxu0 %v378
        %498 = vmatpush1.msra.mxu0 %v377
        %499 = vmatprep.subr.mxu0 %v382
        %500 = vmatpush1.msra.mxu0 %v381
        %501 = vmatprep.subr.mxu0 %v386
        %502 = vmatpush1.msra.mxu0 %v385
        %503 = vmatprep.subr.mxu0 %v390
        %504 = vmatpush1.msra.mxu0 %v389
        %505 = vmatprep.subr.mxu0 %v394
        %506 = vmatpush1.msra.mxu0 %v393
        %507 = vmatprep.subr.mxu0 %v398
        %508 = vmatpush1.msra.mxu0 %v397
        %509 = vmatprep.subr.mxu0 %v402
        %510 = vmatpush1.msra.mxu0 %v401
        %511 = vmatprep.subr.mxu0 %v406
        %512 = vmatpush1.msra.mxu0 %v405
        %513 = vmatprep.subr.mxu0 %v410
        %514 = vmatpush1.msra.mxu0 %v409
        %515 = vmatprep.subr.mxu0 %v414
        %516 = vmatpush1.msra.mxu0 %v413
        %517 = vmatprep.subr.mxu0 %v418
        %518 = vmatpush1.msra.mxu0 %v417
        %519 = vmatprep.subr.mxu0 %v422
        %520 = vmatpush1.msra.mxu0 %v421
        %521 = vmatprep.subr.mxu0 %v426
        %522 = vmatpush1.msra.mxu0 %v425
        %523 = vmatprep.subr.mxu0 %v430
        %524 = vmatpush1.msra.mxu0 %v429
        %525 = vmatprep.subr.mxu0 %v434
        %526 = vmatpush1.msra.mxu0 %v433
        %527 = vmatprep.subr.mxu0 %v438
        %528 = vmatpush1.msra.mxu0 %v437
        %529 = vmatprep.mubr.f32.mxu0 %v464
        %530 = vmatmul.mubr.f32.gmra.mrb[0].mxu0 %v463
        %v531 = vpop.f32.mrb[0].mxu0
        %v532 = vadd.f32 %v446, %v531
        %v533 = vpop.f32.mrb[0].mxu0
        %v534 = vadd.f32 %v450, %v533
        %535 = vdwg.mxu0
        %536 = vmatprep.subr.mxu0 %v316
        %537 = vmatpush1.msra.mxu0 %v315
        %538 = vmatprep.subr.mxu0 %v320
        %539 = vmatpush1.msra.mxu0 %v319
        %540 = vmatprep.subr.mxu0 %v324
        %541 = vmatpush1.msra.mxu0 %v323
        %542 = vmatprep.subr.mxu0 %v328
        %543 = vmatpush1.msra.mxu0 %v327
        %544 = vmatprep.subr.mxu0 %v332
        %545 = vmatpush1.msra.mxu0 %v331
        %546 = vmatprep.subr.mxu0 %v336
        %547 = vmatpush1.msra.mxu0 %v335
        %548 = vmatprep.subr.mxu0 %v340
        %549 = vmatpush1.msra.mxu0 %v339
        %550 = vmatprep.subr.mxu0 %v344
        %551 = vmatpush1.msra.mxu0 %v343
        %552 = vmatprep.subr.mxu0 %v348
        %553 = vmatpush1.msra.mxu0 %v347
        %554 = vmatprep.subr.mxu0 %v352
        %555 = vmatpush1.msra.mxu0 %v351
        %556 = vmatprep.subr.mxu0 %v356
        %557 = vmatpush1.msra.mxu0 %v355
        %558 = vmatprep.subr.mxu0 %v360
        %559 = vmatpush1.msra.mxu0 %v359
        %560 = vmatprep.subr.mxu0 %v364
        %561 = vmatpush1.msra.mxu0 %v363
        %562 = vmatprep.subr.mxu0 %v368
        %563 = vmatpush1.msra.mxu0 %v367
        %564 = vmatprep.subr.mxu0 %v372
        %565 = vmatpush1.msra.mxu0 %v371
        %566 = vmatprep.subr.mxu0 %v376
        %567 = vmatpush1.msra.mxu0 %v375
        %568 = vmatprep.subr.mxu0 %v380
        %569 = vmatpush1.msra.mxu0 %v379
        %570 = vmatprep.subr.mxu0 %v384
        %571 = vmatpush1.msra.mxu0 %v383
        %572 = vmatprep.subr.mxu0 %v388
        %573 = vmatpush1.msra.mxu0 %v387
        %574 = vmatprep.subr.mxu0 %v392
        %575 = vmatpush1.msra.mxu0 %v391
        %576 = vmatprep.subr.mxu0 %v396
        %577 = vmatpush1.msra.mxu0 %v395
        %578 = vmatprep.subr.mxu0 %v400
        %579 = vmatpush1.msra.mxu0 %v399
        %580 = vmatprep.subr.mxu0 %v404
        %581 = vmatpush1.msra.mxu0 %v403
        %582 = vmatprep.subr.mxu0 %v408
        %583 = vmatpush1.msra.mxu0 %v407
        %584 = vmatprep.subr.mxu0 %v412
        %585 = vmatpush1.msra.mxu0 %v411
        %586 = vmatprep.subr.mxu0 %v416
        %587 = vmatpush1.msra.mxu0 %v415
        %588 = vmatprep.subr.mxu0 %v420
        %589 = vmatpush1.msra.mxu0 %v419
        %590 = vmatprep.subr.mxu0 %v424
        %591 = vmatpush1.msra.mxu0 %v423
        %592 = vmatprep.subr.mxu0 %v428
        %593 = vmatpush1.msra.mxu0 %v427
        %594 = vmatprep.subr.mxu0 %v432
        %595 = vmatpush1.msra.mxu0 %v431
        %596 = vmatprep.subr.mxu0 %v436
        %597 = vmatpush1.msra.mxu0 %v435
        %598 = vmatprep.subr.mxu0 %v440
        %599 = vmatpush1.msra.mxu0 %v439
        %600 = vmatprep.mubr.f32.mxu0 %v464
        %601 = vmatmul.mubr.f32.gmra.mrb[0].mxu0 %v463
        %v602 = vpop.f32.mrb[0].mxu0
        %v603 = vadd.f32 %v454, %v602
        %v604 = vpop.f32.mrb[0].mxu0
        %v605 = vadd.f32 %v458, %v604
        %606 = vdwg.mxu0
        %v607 = vxor.u32 %v532, 2147483648
        %v608 = vmul.f32 %v607, 1.442695
        %v609 = vpow.pop %v608
        %v610 = vadd.f32 %v609, 1.0
        %v611 = vrcp.pop %v610
        %v612 = vmul.f32 1.0, %v611
        %v613 = vxor.u32 %v534, 2147483648
        %v614 = vmul.f32 %v613, 1.442695
        %v615 = vpow.pop %v614
        %v616 = vadd.f32 %v615, 1.0
        %v617 = vrcp.pop %v616
        %v618 = vmul.f32 1.0, %v617
        %v619 = vtanh.pop %v603
        %v620 = vxor.u32 %v605, 2147483648
        %v621 = vmul.f32 %v620, 1.442695
        %v622 = vpow.pop %v621
        %v623 = vadd.f32 %v622, 1.0
        %v624 = vrcp.pop %v623
        %v625 = vmul.f32 1.0, %v624
        %v626 = vld [vmem:[#allocation4] sm:$0xff]
        %v627 = vmul.f32 %v618, %v626
        %v628 = vmul.f32 %v612, %v619
        %v629 = vadd.f32 %v627, %v628
        %v630 = vtanh.pop %v629
        %v631 = vmul.f32 %v625, %v630
        %632 = vst [vmem:[#allocation4] sm:$0xff] %v629
        %633 = vst [vmem:[#allocation3] sm:$0xff] %v631
        %634 = vst [vmem:[#allocation2] sm:$0xff] %v631
        %s635 = scalar_lea.vmem [#allocation2], 8
        %v636 = vld [vmem:[%s635] sm:$0xff]
        %v637 = vld [vmem:[#allocation3] sm:$0xff]
        %638 = vmatprep.subr.mxu0 %v314
        %639 = vmatpush1.msra.mxu0 %v313
        %640 = vmatprep.subr.mxu0 %v318
        %641 = vmatpush1.msra.mxu0 %v317
        %642 = vmatprep.subr.mxu0 %v322
        %643 = vmatpush1.msra.mxu0 %v321
        %644 = vmatprep.subr.mxu0 %v326
        %645 = vmatpush1.msra.mxu0 %v325
        %646 = vmatprep.subr.mxu0 %v330
        %647 = vmatpush1.msra.mxu0 %v329
        %648 = vmatprep.subr.mxu0 %v334
        %649 = vmatpush1.msra.mxu0 %v333
        %650 = vmatprep.subr.mxu0 %v338
        %651 = vmatpush1.msra.mxu0 %v337
        %652 = vmatprep.subr.mxu0 %v342
        %653 = vmatpush1.msra.mxu0 %v341
        %654 = vmatprep.subr.mxu0 %v346
        %655 = vmatpush1.msra.mxu0 %v345
        %656 = vmatprep.subr.mxu0 %v350
        %657 = vmatpush1.msra.mxu0 %v349
        %658 = vmatprep.subr.mxu0 %v354
        %659 = vmatpush1.msra.mxu0 %v353
        %660 = vmatprep.subr.mxu0 %v358
        %661 = vmatpush1.msra.mxu0 %v357
        %662 = vmatprep.subr.mxu0 %v362
        %663 = vmatpush1.msra.mxu0 %v361
        %664 = vmatprep.subr.mxu0 %v366
        %665 = vmatpush1.msra.mxu0 %v365
        %666 = vmatprep.subr.mxu0 %v370
        %667 = vmatpush1.msra.mxu0 %v369
        %668 = vmatprep.subr.mxu0 %v374
        %669 = vmatpush1.msra.mxu0 %v373
        %670 = vmatprep.subr.mxu0 %v378
        %671 = vmatpush1.msra.mxu0 %v377
        %672 = vmatprep.subr.mxu0 %v382
        %673 = vmatpush1.msra.mxu0 %v381
        %674 = vmatprep.subr.mxu0 %v386
        %675 = vmatpush1.msra.mxu0 %v385
        %676 = vmatprep.subr.mxu0 %v390
        %677 = vmatpush1.msra.mxu0 %v389
        %678 = vmatprep.subr.mxu0 %v394
        %679 = vmatpush1.msra.mxu0 %v393
        %680 = vmatprep.subr.mxu0 %v398
        %681 = vmatpush1.msra.mxu0 %v397
        %682 = vmatprep.subr.mxu0 %v402
        %683 = vmatpush1.msra.mxu0 %v401
        %684 = vmatprep.subr.mxu0 %v406
        %685 = vmatpush1.msra.mxu0 %v405
        %686 = vmatprep.subr.mxu0 %v410
        %687 = vmatpush1.msra.mxu0 %v409
        %688 = vmatprep.subr.mxu0 %v414
        %689 = vmatpush1.msra.mxu0 %v413
        %690 = vmatprep.subr.mxu0 %v418
        %691 = vmatpush1.msra.mxu0 %v417
        %692 = vmatprep.subr.mxu0 %v422
        %693 = vmatpush1.msra.mxu0 %v421
        %694 = vmatprep.subr.mxu0 %v426
        %695 = vmatpush1.msra.mxu0 %v425
        %696 = vmatprep.subr.mxu0 %v430
        %697 = vmatpush1.msra.mxu0 %v429
        %698 = vmatprep.subr.mxu0 %v434
        %699 = vmatpush1.msra.mxu0 %v433
        %700 = vmatprep.subr.mxu0 %v438
        %701 = vmatpush1.msra.mxu0 %v437
        %702 = vmatprep.mubr.f32.mxu0 %v637
        %703 = vmatmul.mubr.f32.gmra.mrb[0].mxu0 %v636
        %v704 = vpop.f32.mrb[0].mxu0
        %v705 = vadd.f32 %v446, %v704
        %v706 = vpop.f32.mrb[0].mxu0
        %v707 = vadd.f32 %v450, %v706
        %708 = vdwg.mxu0
        %709 = vmatprep.subr.mxu0 %v316
        %710 = vmatpush1.msra.mxu0 %v315
        %711 = vmatprep.subr.mxu0 %v320
        %712 = vmatpush1.msra.mxu0 %v319
        %713 = vmatprep.subr.mxu0 %v324
        %714 = vmatpush1.msra.mxu0 %v323
        %715 = vmatprep.subr.mxu0 %v328
        %716 = vmatpush1.msra.mxu0 %v327
        %717 = vmatprep.subr.mxu0 %v332
        %718 = vmatpush1.msra.mxu0 %v331
        %719 = vmatprep.subr.mxu0 %v336
        %720 = vmatpush1.msra.mxu0 %v335
        %721 = vmatprep.subr.mxu0 %v340
        %722 = vmatpush1.msra.mxu0 %v339
        %723 = vmatprep.subr.mxu0 %v344
        %724 = vmatpush1.msra.mxu0 %v343
        %725 = vmatprep.subr.mxu0 %v348
        %726 = vmatpush1.msra.mxu0 %v347
        %727 = vmatprep.subr.mxu0 %v352
        %728 = vmatpush1.msra.mxu0 %v351
        %729 = vmatprep.subr.mxu0 %v356
        %730 = vmatpush1.msra.mxu0 %v355
        %731 = vmatprep.subr.mxu0 %v360
        %732 = vmatpush1.msra.mxu0 %v359
        %733 = vmatprep.subr.mxu0 %v364
        %734 = vmatpush1.msra.mxu0 %v363
        %735 = vmatprep.subr.mxu0 %v368
        %736 = vmatpush1.msra.mxu0 %v367
        %737 = vmatprep.subr.mxu0 %v372
        %738 = vmatpush1.msra.mxu0 %v371
        %739 = vmatprep.subr.mxu0 %v376
        %740 = vmatpush1.msra.mxu0 %v375
        %741 = vmatprep.subr.mxu0 %v380
        %742 = vmatpush1.msra.mxu0 %v379
        %743 = vmatprep.subr.mxu0 %v384
        %744 = vmatpush1.msra.mxu0 %v383
        %745 = vmatprep.subr.mxu0 %v388
        %746 = vmatpush1.msra.mxu0 %v387
        %747 = vmatprep.subr.mxu0 %v392
        %748 = vmatpush1.msra.mxu0 %v391
        %749 = vmatprep.subr.mxu0 %v396
        %750 = vmatpush1.msra.mxu0 %v395
        %751 = vmatprep.subr.mxu0 %v400
        %752 = vmatpush1.msra.mxu0 %v399
        %753 = vmatprep.subr.mxu0 %v404
        %754 = vmatpush1.msra.mxu0 %v403
        %755 = vmatprep.subr.mxu0 %v408
        %756 = vmatpush1.msra.mxu0 %v407
        %757 = vmatprep.subr.mxu0 %v412
        %758 = vmatpush1.msra.mxu0 %v411
        %759 = vmatprep.subr.mxu0 %v416
        %760 = vmatpush1.msra.mxu0 %v415
        %761 = vmatprep.subr.mxu0 %v420
        %762 = vmatpush1.msra.mxu0 %v419
        %763 = vmatprep.subr.mxu0 %v424
        %764 = vmatpush1.msra.mxu0 %v423
        %765 = vmatprep.subr.mxu0 %v428
        %766 = vmatpush1.msra.mxu0 %v427
        %767 = vmatprep.subr.mxu0 %v432
        %768 = vmatpush1.msra.mxu0 %v431
        %769 = vmatprep.subr.mxu0 %v436
        %770 = vmatpush1.msra.mxu0 %v435
        %771 = vmatprep.subr.mxu0 %v440
        %772 = vmatpush1.msra.mxu0 %v439
        %773 = vmatprep.mubr.f32.mxu0 %v637
        %774 = vmatmul.mubr.f32.gmra.mrb[0].mxu0 %v636
        %v775 = vpop.f32.mrb[0].mxu0
        %v776 = vadd.f32 %v454, %v775
        %v777 = vpop.f32.mrb[0].mxu0
        %v778 = vadd.f32 %v458, %v777
        %779 = vdwg.mxu0
        %v780 = vxor.u32 %v705, 2147483648
        %v781 = vmul.f32 %v780, 1.442695
        %v782 = vpow.pop %v781
        %v783 = vadd.f32 %v782, 1.0
        %v784 = vrcp.pop %v783
        %v785 = vmul.f32 1.0, %v784
        %v786 = vxor.u32 %v707, 2147483648
        %v787 = vmul.f32 %v786, 1.442695
        %v788 = vpow.pop %v787
        %v789 = vadd.f32 %v788, 1.0
        %v790 = vrcp.pop %v789
        %v791 = vmul.f32 1.0, %v790
        %v792 = vtanh.pop %v776
        %v793 = vxor.u32 %v778, 2147483648
        %v794 = vmul.f32 %v793, 1.442695
        %v795 = vpow.pop %v794
        %v796 = vadd.f32 %v795, 1.0
        %v797 = vrcp.pop %v796
        %v798 = vmul.f32 1.0, %v797
        %v799 = vld [vmem:[#allocation4] sm:$0xff]
        %v800 = vmul.f32 %v791, %v799
        %v801 = vmul.f32 %v785, %v792
        %v802 = vadd.f32 %v800, %v801
        %v803 = vtanh.pop %v802
        %v804 = vmul.f32 %v798, %v803
        %805 = vst [vmem:[#allocation4] sm:$0xff] %v802
        %806 = vst [vmem:[#allocation3] sm:$0xff] %v804
        %807 = vst [vmem:[%s635] sm:$0xff] %v804
        %s808 = scalar_lea.vmem [#allocation2], 16
        %v809 = vld [vmem:[%s808] sm:$0xff]
        %v810 = vld [vmem:[#allocation3] sm:$0xff]
        %811 = vmatprep.subr.mxu0 %v314
        %812 = vmatpush1.msra.mxu0 %v313
        %813 = vmatprep.subr.mxu0 %v318
        %814 = vmatpush1.msra.mxu0 %v317
        %815 = vmatprep.subr.mxu0 %v322
        %816 = vmatpush1.msra.mxu0 %v321
        %817 = vmatprep.subr.mxu0 %v326
        %818 = vmatpush1.msra.mxu0 %v325
        %819 = vmatprep.subr.mxu0 %v330
        %820 = vmatpush1.msra.mxu0 %v329
        %821 = vmatprep.subr.mxu0 %v334
        %822 = vmatpush1.msra.mxu0 %v333
        %823 = vmatprep.subr.mxu0 %v338
        %824 = vmatpush1.msra.mxu0 %v337
        %825 = vmatprep.subr.mxu0 %v342
        %826 = vmatpush1.msra.mxu0 %v341
        %827 = vmatprep.subr.mxu0 %v346
        %828 = vmatpush1.msra.mxu0 %v345
        %829 = vmatprep.subr.mxu0 %v350
        %830 = vmatpush1.msra.mxu0 %v349
        %831 = vmatprep.subr.mxu0 %v354
        %832 = vmatpush1.msra.mxu0 %v353
        %833 = vmatprep.subr.mxu0 %v358
        %834 = vmatpush1.msra.mxu0 %v357
        %835 = vmatprep.subr.mxu0 %v362
        %836 = vmatpush1.msra.mxu0 %v361
        %837 = vmatprep.subr.mxu0 %v366
        %838 = vmatpush1.msra.mxu0 %v365
        %839 = vmatprep.subr.mxu0 %v370
        %840 = vmatpush1.msra.mxu0 %v369
        %841 = vmatprep.subr.mxu0 %v374
        %842 = vmatpush1.msra.mxu0 %v373
        %843 = vmatprep.subr.mxu0 %v378
        %844 = vmatpush1.msra.mxu0 %v377
        %845 = vmatprep.subr.mxu0 %v382
        %846 = vmatpush1.msra.mxu0 %v381
        %847 = vmatprep.subr.mxu0 %v386
        %848 = vmatpush1.msra.mxu0 %v385
        %849 = vmatprep.subr.mxu0 %v390
        %850 = vmatpush1.msra.mxu0 %v389
        %851 = vmatprep.subr.mxu0 %v394
        %852 = vmatpush1.msra.mxu0 %v393
        %853 = vmatprep.subr.mxu0 %v398
        %854 = vmatpush1.msra.mxu0 %v397
        %855 = vmatprep.subr.mxu0 %v402
        %856 = vmatpush1.msra.mxu0 %v401
        %857 = vmatprep.subr.mxu0 %v406
        %858 = vmatpush1.msra.mxu0 %v405
        %859 = vmatprep.subr.mxu0 %v410
        %860 = vmatpush1.msra.mxu0 %v409
        %861 = vmatprep.subr.mxu0 %v414
        %862 = vmatpush1.msra.mxu0 %v413
        %863 = vmatprep.subr.mxu0 %v418
        %864 = vmatpush1.msra.mxu0 %v417
        %865 = vmatprep.subr.mxu0 %v422
        %866 = vmatpush1.msra.mxu0 %v421
        %867 = vmatprep.subr.mxu0 %v426
        %868 = vmatpush1.msra.mxu0 %v425
        %869 = vmatprep.subr.mxu0 %v430
        %870 = vmatpush1.msra.mxu0 %v429
        %871 = vmatprep.subr.mxu0 %v434
        %872 = vmatpush1.msra.mxu0 %v433
        %873 = vmatprep.subr.mxu0 %v438
        %874 = vmatpush1.msra.mxu0 %v437
        %875 = vmatprep.mubr.f32.mxu0 %v810
        %876 = vmatmul.mubr.f32.gmra.mrb[0].mxu0 %v809
        %v877 = vpop.f32.mrb[0].mxu0
        %v878 = vadd.f32 %v446, %v877
        %v879 = vpop.f32.mrb[0].mxu0
        %v880 = vadd.f32 %v450, %v879
        %881 = vdwg.mxu0
        %882 = vmatprep.subr.mxu0 %v316
        %883 = vmatpush1.msra.mxu0 %v315
        %884 = vmatprep.subr.mxu0 %v320
        %885 = vmatpush1.msra.mxu0 %v319
        %886 = vmatprep.subr.mxu0 %v324
        %887 = vmatpush1.msra.mxu0 %v323
        %888 = vmatprep.subr.mxu0 %v328
        %889 = vmatpush1.msra.mxu0 %v327
        %890 = vmatprep.subr.mxu0 %v332
        %891 = vmatpush1.msra.mxu0 %v331
        %892 = vmatprep.subr.mxu0 %v336
        %893 = vmatpush1.msra.mxu0 %v335
        %894 = vmatprep.subr.mxu0 %v340
        %895 = vmatpush1.msra.mxu0 %v339
        %896 = vmatprep.subr.mxu0 %v344
        %897 = vmatpush1.msra.mxu0 %v343
        %898 = vmatprep.subr.mxu0 %v348
        %899 = vmatpush1.msra.mxu0 %v347
        %900 = vmatprep.subr.mxu0 %v352
        %901 = vmatpush1.msra.mxu0 %v351
        %902 = vmatprep.subr.mxu0 %v356
        %903 = vmatpush1.msra.mxu0 %v355
        %904 = vmatprep.subr.mxu0 %v360
        %905 = vmatpush1.msra.mxu0 %v359
        %906 = vmatprep.subr.mxu0 %v364
        %907 = vmatpush1.msra.mxu0 %v363
        %908 = vmatprep.subr.mxu0 %v368
        %909 = vmatpush1.msra.mxu0 %v367
        %910 = vmatprep.subr.mxu0 %v372
        %911 = vmatpush1.msra.mxu0 %v371
        %912 = vmatprep.subr.mxu0 %v376
        %913 = vmatpush1.msra.mxu0 %v375
        %914 = vmatprep.subr.mxu0 %v380
        %915 = vmatpush1.msra.mxu0 %v379
        %916 = vmatprep.subr.mxu0 %v384
        %917 = vmatpush1.msra.mxu0 %v383
        %918 = vmatprep.subr.mxu0 %v388
        %919 = vmatpush1.msra.mxu0 %v387
        %920 = vmatprep.subr.mxu0 %v392
        %921 = vmatpush1.msra.mxu0 %v391
        %922 = vmatprep.subr.mxu0 %v396
        %923 = vmatpush1.msra.mxu0 %v395
        %924 = vmatprep.subr.mxu0 %v400
        %925 = vmatpush1.msra.mxu0 %v399
        %926 = vmatprep.subr.mxu0 %v404
        %927 = vmatpush1.msra.mxu0 %v403
        %928 = vmatprep.subr.mxu0 %v408
        %929 = vmatpush1.msra.mxu0 %v407
        %930 = vmatprep.subr.mxu0 %v412
        %931 = vmatpush1.msra.mxu0 %v411
        %932 = vmatprep.subr.mxu0 %v416
        %933 = vmatpush1.msra.mxu0 %v415
        %934 = vmatprep.subr.mxu0 %v420
        %935 = vmatpush1.msra.mxu0 %v419
        %936 = vmatprep.subr.mxu0 %v424
        %937 = vmatpush1.msra.mxu0 %v423
        %938 = vmatprep.subr.mxu0 %v428
        %939 = vmatpush1.msra.mxu0 %v427
        %940 = vmatprep.subr.mxu0 %v432
        %941 = vmatpush1.msra.mxu0 %v431
        %942 = vmatprep.subr.mxu0 %v436
        %943 = vmatpush1.msra.mxu0 %v435
        %944 = vmatprep.subr.mxu0 %v440
        %945 = vmatpush1.msra.mxu0 %v439
        %946 = vmatprep.mubr.f32.mxu0 %v810
        %947 = vmatmul.mubr.f32.gmra.mrb[0].mxu0 %v809
        %v948 = vpop.f32.mrb[0].mxu0
        %v949 = vadd.f32 %v454, %v948
        %v950 = vpop.f32.mrb[0].mxu0
        %v951 = vadd.f32 %v458, %v950
        %952 = vdwg.mxu0
        %v953 = vxor.u32 %v878, 2147483648
        %v954 = vmul.f32 %v953, 1.442695
        %v955 = vpow.pop %v954
        %v956 = vadd.f32 %v955, 1.0
        %v957 = vrcp.pop %v956
        %v958 = vmul.f32 1.0, %v957
        %v959 = vxor.u32 %v880, 2147483648
        %v960 = vmul.f32 %v959, 1.442695
        %v961 = vpow.pop %v960
        %v962 = vadd.f32 %v961, 1.0
        %v963 = vrcp.pop %v962
        %v964 = vmul.f32 1.0, %v963
        %v965 = vtanh.pop %v949
        %v966 = vxor.u32 %v951, 2147483648
        %v967 = vmul.f32 %v966, 1.442695
        %v968 = vpow.pop %v967
        %v969 = vadd.f32 %v968, 1.0
        %v970 = vrcp.pop %v969
        %v971 = vmul.f32 1.0, %v970
        %v972 = vld [vmem:[#allocation4] sm:$0xff]
        %v973 = vmul.f32 %v964, %v972
        %v974 = vmul.f32 %v958, %v965
        %v975 = vadd.f32 %v973, %v974
        %v976 = vtanh.pop %v975
        %v977 = vmul.f32 %v971, %v976
        %978 = vst [vmem:[#allocation4] sm:$0xff] %v975
        %979 = vst [vmem:[#allocation3] sm:$0xff] %v977
        %980 = vst [vmem:[%s808] sm:$0xff] %v977
        %s981 = scalar_lea.vmem [#allocation2], 24
        %v982 = vld [vmem:[%s981] sm:$0xff]
        %v983 = vld [vmem:[#allocation3] sm:$0xff]
        %984 = vmatprep.subr.mxu0 %v314
        %985 = vmatpush1.msra.mxu0 %v313
        %986 = vmatprep.subr.mxu0 %v318
        %987 = vmatpush1.msra.mxu0 %v317
        %988 = vmatprep.subr.mxu0 %v322
        %989 = vmatpush1.msra.mxu0 %v321
        %990 = vmatprep.subr.mxu0 %v326
        %991 = vmatpush1.msra.mxu0 %v325
        %992 = vmatprep.subr.mxu0 %v330
        %993 = vmatpush1.msra.mxu0 %v329
        %994 = vmatprep.subr.mxu0 %v334
        %995 = vmatpush1.msra.mxu0 %v333
        %996 = vmatprep.subr.mxu0 %v338
        %997 = vmatpush1.msra.mxu0 %v337
        %998 = vmatprep.subr.mxu0 %v342
        %999 = vmatpush1.msra.mxu0 %v341
        %1000 = vmatprep.subr.mxu0 %v346
        %1001 = vmatpush1.msra.mxu0 %v345
        %1002 = vmatprep.subr.mxu0 %v350
        %1003 = vmatpush1.msra.mxu0 %v349
        %1004 = vmatprep.subr.mxu0 %v354
        %1005 = vmatpush1.msra.mxu0 %v353
        %1006 = vmatprep.subr.mxu0 %v358
        %1007 = vmatpush1.msra.mxu0 %v357
        %1008 = vmatprep.subr.mxu0 %v362
        %1009 = vmatpush1.msra.mxu0 %v361
        %1010 = vmatprep.subr.mxu0 %v366
        %1011 = vmatpush1.msra.mxu0 %v365
        %1012 = vmatprep.subr.mxu0 %v370
        %1013 = vmatpush1.msra.mxu0 %v369
        %1014 = vmatprep.subr.mxu0 %v374
        %1015 = vmatpush1.msra.mxu0 %v373
        %1016 = vmatprep.subr.mxu0 %v378
        %1017 = vmatpush1.msra.mxu0 %v377
        %1018 = vmatprep.subr.mxu0 %v382
        %1019 = vmatpush1.msra.mxu0 %v381
        %1020 = vmatprep.subr.mxu0 %v386
        %1021 = vmatpush1.msra.mxu0 %v385
        %1022 = vmatprep.subr.mxu0 %v390
        %1023 = vmatpush1.msra.mxu0 %v389
        %1024 = vmatprep.subr.mxu0 %v394
        %1025 = vmatpush1.msra.mxu0 %v393
        %1026 = vmatprep.subr.mxu0 %v398
        %1027 = vmatpush1.msra.mxu0 %v397
        %1028 = vmatprep.subr.mxu0 %v402
        %1029 = vmatpush1.msra.mxu0 %v401
        %1030 = vmatprep.subr.mxu0 %v406
        %1031 = vmatpush1.msra.mxu0 %v405
        %1032 = vmatprep.subr.mxu0 %v410
        %1033 = vmatpush1.msra.mxu0 %v409
        %1034 = vmatprep.subr.mxu0 %v414
        %1035 = vmatpush1.msra.mxu0 %v413
        %1036 = vmatprep.subr.mxu0 %v418
        %1037 = vmatpush1.msra.mxu0 %v417
        %1038 = vmatprep.subr.mxu0 %v422
        %1039 = vmatpush1.msra.mxu0 %v421
        %1040 = vmatprep.subr.mxu0 %v426
        %1041 = vmatpush1.msra.mxu0 %v425
        %1042 = vmatprep.subr.mxu0 %v430
        %1043 = vmatpush1.msra.mxu0 %v429
        %1044 = vmatprep.subr.mxu0 %v434
        %1045 = vmatpush1.msra.mxu0 %v433
        %1046 = vmatprep.subr.mxu0 %v438
        %1047 = vmatpush1.msra.mxu0 %v437
        %1048 = vmatprep.mubr.f32.mxu0 %v983
        %1049 = vmatmul.mubr.f32.gmra.mrb[0].mxu0 %v982
        %v1050 = vpop.f32.mrb[0].mxu0
        %v1051 = vadd.f32 %v446, %v1050
        %v1052 = vpop.f32.mrb[0].mxu0
        %v1053 = vadd.f32 %v450, %v1052
        %1054 = vdwg.mxu0
        %1055 = vmatprep.subr.mxu0 %v316
        %1056 = vmatpush1.msra.mxu0 %v315
        %1057 = vmatprep.subr.mxu0 %v320
        %1058 = vmatpush1.msra.mxu0 %v319
        %1059 = vmatprep.subr.mxu0 %v324
        %1060 = vmatpush1.msra.mxu0 %v323
        %1061 = vmatprep.subr.mxu0 %v328
        %1062 = vmatpush1.msra.mxu0 %v327
        %1063 = vmatprep.subr.mxu0 %v332
        %1064 = vmatpush1.msra.mxu0 %v331
        %1065 = vmatprep.subr.mxu0 %v336
        %1066 = vmatpush1.msra.mxu0 %v335
        %1067 = vmatprep.subr.mxu0 %v340
        %1068 = vmatpush1.msra.mxu0 %v339
        %1069 = vmatprep.subr.mxu0 %v344
        %1070 = vmatpush1.msra.mxu0 %v343
        %1071 = vmatprep.subr.mxu0 %v348
        %1072 = vmatpush1.msra.mxu0 %v347
        %1073 = vmatprep.subr.mxu0 %v352
        %1074 = vmatpush1.msra.mxu0 %v351
        %1075 = vmatprep.subr.mxu0 %v356
        %1076 = vmatpush1.msra.mxu0 %v355
        %1077 = vmatprep.subr.mxu0 %v360
        %1078 = vmatpush1.msra.mxu0 %v359
        %1079 = vmatprep.subr.mxu0 %v364
        %1080 = vmatpush1.msra.mxu0 %v363
        %1081 = vmatprep.subr.mxu0 %v368
        %1082 = vmatpush1.msra.mxu0 %v367
        %1083 = vmatprep.subr.mxu0 %v372
        %1084 = vmatpush1.msra.mxu0 %v371
        %1085 = vmatprep.subr.mxu0 %v376
        %1086 = vmatpush1.msra.mxu0 %v375
        %1087 = vmatprep.subr.mxu0 %v380
        %1088 = vmatpush1.msra.mxu0 %v379
        %1089 = vmatprep.subr.mxu0 %v384
        %1090 = vmatpush1.msra.mxu0 %v383
        %1091 = vmatprep.subr.mxu0 %v388
        %1092 = vmatpush1.msra.mxu0 %v387
        %1093 = vmatprep.subr.mxu0 %v392
        %1094 = vmatpush1.msra.mxu0 %v391
        %1095 = vmatprep.subr.mxu0 %v396
        %1096 = vmatpush1.msra.mxu0 %v395
        %1097 = vmatprep.subr.mxu0 %v400
        %1098 = vmatpush1.msra.mxu0 %v399
        %1099 = vmatprep.subr.mxu0 %v404
        %1100 = vmatpush1.msra.mxu0 %v403
        %1101 = vmatprep.subr.mxu0 %v408
        %1102 = vmatpush1.msra.mxu0 %v407
        %1103 = vmatprep.subr.mxu0 %v412
        %1104 = vmatpush1.msra.mxu0 %v411
        %1105 = vmatprep.subr.mxu0 %v416
        %1106 = vmatpush1.msra.mxu0 %v415
        %1107 = vmatprep.subr.mxu0 %v420
        %1108 = vmatpush1.msra.mxu0 %v419
        %1109 = vmatprep.subr.mxu0 %v424
        %1110 = vmatpush1.msra.mxu0 %v423
        %1111 = vmatprep.subr.mxu0 %v428
        %1112 = vmatpush1.msra.mxu0 %v427
        %1113 = vmatprep.subr.mxu0 %v432
        %1114 = vmatpush1.msra.mxu0 %v431
        %1115 = vmatprep.subr.mxu0 %v436
        %1116 = vmatpush1.msra.mxu0 %v435
        %1117 = vmatprep.subr.mxu0 %v440
        %1118 = vmatpush1.msra.mxu0 %v439
        %1119 = vmatprep.mubr.f32.mxu0 %v983
        %1120 = vmatmul.mubr.f32.gmra.mrb[0].mxu0 %v982
        %v1121 = vpop.f32.mrb[0].mxu0
        %v1122 = vadd.f32 %v454, %v1121
        %v1123 = vpop.f32.mrb[0].mxu0
        %v1124 = vadd.f32 %v458, %v1123
        %1125 = vdwg.mxu0
        %v1126 = vxor.u32 %v1051, 2147483648
        %v1127 = vmul.f32 %v1126, 1.442695
        %v1128 = vpow.pop %v1127
        %v1129 = vadd.f32 %v1128, 1.0
        %v1130 = vrcp.pop %v1129
        %v1131 = vmul.f32 1.0, %v1130
        %v1132 = vxor.u32 %v1053, 2147483648
        %v1133 = vmul.f32 %v1132, 1.442695
        %v1134 = vpow.pop %v1133
        %v1135 = vadd.f32 %v1134, 1.0
        %v1136 = vrcp.pop %v1135
        %v1137 = vmul.f32 1.0, %v1136
        %v1138 = vtanh.pop %v1122
        %v1139 = vxor.u32 %v1124, 2147483648
        %v1140 = vmul.f32 %v1139, 1.442695
        %v1141 = vpow.pop %v1140
        %v1142 = vadd.f32 %v1141, 1.0
        %v1143 = vrcp.pop %v1142
        %v1144 = vmul.f32 1.0, %v1143
        %v1145 = vld [vmem:[#allocation4] sm:$0xff]
        %v1146 = vmul.f32 %v1137, %v1145
        %v1147 = vmul.f32 %v1131, %v1138
        %v1148 = vadd.f32 %v1146, %v1147
        %v1149 = vtanh.pop %v1148
        %v1150 = vmul.f32 %v1144, %v1149
        %1151 = vst [vmem:[#allocation4] sm:$0xff] %v1148
        %1152 = vst [vmem:[#allocation3] sm:$0xff] %v1150
        %1153 = vst [vmem:[%s981] sm:$0xff] %v1150
        %s1154 = scalar_lea.vmem [#allocation2], 32
        %v1155 = vld [vmem:[%s1154] sm:$0xff]
        %v1156 = vld [vmem:[#allocation3] sm:$0xff]
        %1157 = vmatprep.subr.mxu0 %v314
        %1158 = vmatpush1.msra.mxu0 %v313
        %1159 = vmatprep.subr.mxu0 %v318
        %1160 = vmatpush1.msra.mxu0 %v317
        %1161 = vmatprep.subr.mxu0 %v322
        %1162 = vmatpush1.msra.mxu0 %v321
        %1163 = vmatprep.subr.mxu0 %v326
        %1164 = vmatpush1.msra.mxu0 %v325
        %1165 = vmatprep.subr.mxu0 %v330
        %1166 = vmatpush1.msra.mxu0 %v329
        %1167 = vmatprep.subr.mxu0 %v334
        %1168 = vmatpush1.msra.mxu0 %v333
        %1169 = vmatprep.subr.mxu0 %v338
        %1170 = vmatpush1.msra.mxu0 %v337
        %1171 = vmatprep.subr.mxu0 %v342
        %1172 = vmatpush1.msra.mxu0 %v341
        %1173 = vmatprep.subr.mxu0 %v346
        %1174 = vmatpush1.msra.mxu0 %v345
        %1175 = vmatprep.subr.mxu0 %v350
        %1176 = vmatpush1.msra.mxu0 %v349
        %1177 = vmatprep.subr.mxu0 %v354
        %1178 = vmatpush1.msra.mxu0 %v353
        %1179 = vmatprep.subr.mxu0 %v358
        %1180 = vmatpush1.msra.mxu0 %v357
        %1181 = vmatprep.subr.mxu0 %v362
        %1182 = vmatpush1.msra.mxu0 %v361
        %1183 = vmatprep.subr.mxu0 %v366
        %1184 = vmatpush1.msra.mxu0 %v365
        %1185 = vmatprep.subr.mxu0 %v370
        %1186 = vmatpush1.msra.mxu0 %v369
        %1187 = vmatprep.subr.mxu0 %v374
        %1188 = vmatpush1.msra.mxu0 %v373
        %1189 = vmatprep.subr.mxu0 %v378
        %1190 = vmatpush1.msra.mxu0 %v377
        %1191 = vmatprep.subr.mxu0 %v382
        %1192 = vmatpush1.msra.mxu0 %v381
        %1193 = vmatprep.subr.mxu0 %v386
        %1194 = vmatpush1.msra.mxu0 %v385
        %1195 = vmatprep.subr.mxu0 %v390
        %1196 = vmatpush1.msra.mxu0 %v389
        %1197 = vmatprep.subr.mxu0 %v394
        %1198 = vmatpush1.msra.mxu0 %v393
        %1199 = vmatprep.subr.mxu0 %v398
        %1200 = vmatpush1.msra.mxu0 %v397
        %1201 = vmatprep.subr.mxu0 %v402
        %1202 = vmatpush1.msra.mxu0 %v401
        %1203 = vmatprep.subr.mxu0 %v406
        %1204 = vmatpush1.msra.mxu0 %v405
        %1205 = vmatprep.subr.mxu0 %v410
        %1206 = vmatpush1.msra.mxu0 %v409
        %1207 = vmatprep.subr.mxu0 %v414
        %1208 = vmatpush1.msra.mxu0 %v413
        %1209 = vmatprep.subr.mxu0 %v418
        %1210 = vmatpush1.msra.mxu0 %v417
        %1211 = vmatprep.subr.mxu0 %v422
        %1212 = vmatpush1.msra.mxu0 %v421
        %1213 = vmatprep.subr.mxu0 %v426
        %1214 = vmatpush1.msra.mxu0 %v425
        %1215 = vmatprep.subr.mxu0 %v430
        %1216 = vmatpush1.msra.mxu0 %v429
        %1217 = vmatprep.subr.mxu0 %v434
        %1218 = vmatpush1.msra.mxu0 %v433
        %1219 = vmatprep.subr.mxu0 %v438
        %1220 = vmatpush1.msra.mxu0 %v437
        %1221 = vmatprep.mubr.f32.mxu0 %v1156
        %1222 = vmatmul.mubr.f32.gmra.mrb[0].mxu0 %v1155
        %v1223 = vpop.f32.mrb[0].mxu0
        %v1224 = vadd.f32 %v446, %v1223
        %v1225 = vpop.f32.mrb[0].mxu0
        %v1226 = vadd.f32 %v450, %v1225
        %1227 = vdwg.mxu0
        %1228 = vmatprep.subr.mxu0 %v316
        %1229 = vmatpush1.msra.mxu0 %v315
        %1230 = vmatprep.subr.mxu0 %v320
        %1231 = vmatpush1.msra.mxu0 %v319
        %1232 = vmatprep.subr.mxu0 %v324
        %1233 = vmatpush1.msra.mxu0 %v323
        %1234 = vmatprep.subr.mxu0 %v328
        %1235 = vmatpush1.msra.mxu0 %v327
        %1236 = vmatprep.subr.mxu0 %v332
        %1237 = vmatpush1.msra.mxu0 %v331
        %1238 = vmatprep.subr.mxu0 %v336
        %1239 = vmatpush1.msra.mxu0 %v335
        %1240 = vmatprep.subr.mxu0 %v340
        %1241 = vmatpush1.msra.mxu0 %v339
        %1242 = vmatprep.subr.mxu0 %v344
        %1243 = vmatpush1.msra.mxu0 %v343
        %1244 = vmatprep.subr.mxu0 %v348
        %1245 = vmatpush1.msra.mxu0 %v347
        %1246 = vmatprep.subr.mxu0 %v352
        %1247 = vmatpush1.msra.mxu0 %v351
        %1248 = vmatprep.subr.mxu0 %v356
        %1249 = vmatpush1.msra.mxu0 %v355
        %1250 = vmatprep.subr.mxu0 %v360
        %1251 = vmatpush1.msra.mxu0 %v359
        %1252 = vmatprep.subr.mxu0 %v364
        %1253 = vmatpush1.msra.mxu0 %v363
        %1254 = vmatprep.subr.mxu0 %v368
        %1255 = vmatpush1.msra.mxu0 %v367
        %1256 = vmatprep.subr.mxu0 %v372
        %1257 = vmatpush1.msra.mxu0 %v371
        %1258 = vmatprep.subr.mxu0 %v376
        %1259 = vmatpush1.msra.mxu0 %v375
        %1260 = vmatprep.subr.mxu0 %v380
        %1261 = vmatpush1.msra.mxu0 %v379
        %1262 = vmatprep.subr.mxu0 %v384
        %1263 = vmatpush1.msra.mxu0 %v383
        %1264 = vmatprep.subr.mxu0 %v388
        %1265 = vmatpush1.msra.mxu0 %v387
        %1266 = vmatprep.subr.mxu0 %v392
        %1267 = vmatpush1.msra.mxu0 %v391
        %1268 = vmatprep.subr.mxu0 %v396
        %1269 = vmatpush1.msra.mxu0 %v395
        %1270 = vmatprep.subr.mxu0 %v400
        %1271 = vmatpush1.msra.mxu0 %v399
        %1272 = vmatprep.subr.mxu0 %v404
        %1273 = vmatpush1.msra.mxu0 %v403
        %1274 = vmatprep.subr.mxu0 %v408
        %1275 = vmatpush1.msra.mxu0 %v407
        %1276 = vmatprep.subr.mxu0 %v412
        %1277 = vmatpush1.msra.mxu0 %v411
        %1278 = vmatprep.subr.mxu0 %v416
        %1279 = vmatpush1.msra.mxu0 %v415
        %1280 = vmatprep.subr.mxu0 %v420
        %1281 = vmatpush1.msra.mxu0 %v419
        %1282 = vmatprep.subr.mxu0 %v424
        %1283 = vmatpush1.msra.mxu0 %v423
        %1284 = vmatprep.subr.mxu0 %v428
        %1285 = vmatpush1.msra.mxu0 %v427
        %1286 = vmatprep.subr.mxu0 %v432
        %1287 = vmatpush1.msra.mxu0 %v431
        %1288 = vmatprep.subr.mxu0 %v436
        %1289 = vmatpush1.msra.mxu0 %v435
        %1290 = vmatprep.subr.mxu0 %v440
        %1291 = vmatpush1.msra.mxu0 %v439
        %1292 = vmatprep.mubr.f32.mxu0 %v1156
        %1293 = vmatmul.mubr.f32.gmra.mrb[0].mxu0 %v1155
        %v1294 = vpop.f32.mrb[0].mxu0
        %v1295 = vadd.f32 %v454, %v1294
        %v1296 = vpop.f32.mrb[0].mxu0
        %v1297 = vadd.f32 %v458, %v1296
        %1298 = vdwg.mxu0
        %v1299 = vxor.u32 %v1224, 2147483648
        %v1300 = vmul.f32 %v1299, 1.442695
        %v1301 = vpow.pop %v1300
        %v1302 = vadd.f32 %v1301, 1.0
        %v1303 = vrcp.pop %v1302
        %v1304 = vmul.f32 1.0, %v1303
        %v1305 = vxor.u32 %v1226, 2147483648
        %v1306 = vmul.f32 %v1305, 1.442695
        %v1307 = vpow.pop %v1306
        %v1308 = vadd.f32 %v1307, 1.0
        %v1309 = vrcp.pop %v1308
        %v1310 = vmul.f32 1.0, %v1309
        %v1311 = vtanh.pop %v1295
        %v1312 = vxor.u32 %v1297, 2147483648
        %v1313 = vmul.f32 %v1312, 1.442695
        %v1314 = vpow.pop %v1313
        %v1315 = vadd.f32 %v1314, 1.0
        %v1316 = vrcp.pop %v1315
        %v1317 = vmul.f32 1.0, %v1316
        %v1318 = vld [vmem:[#allocation4] sm:$0xff]
        %v1319 = vmul.f32 %v1310, %v1318
        %v1320 = vmul.f32 %v1304, %v1311
        %v1321 = vadd.f32 %v1319, %v1320
        %v1322 = vtanh.pop %v1321
        %v1323 = vmul.f32 %v1317, %v1322
        %1324 = vst [vmem:[#allocation4] sm:$0xff] %v1321
        %1325 = vst [vmem:[#allocation3] sm:$0xff] %v1323
        %1326 = vst [vmem:[%s1154] sm:$0xff] %v1323
        %s1327 = scalar_lea.vmem [#allocation2], 40
        %v1328 = vld [vmem:[%s1327] sm:$0xff]
        %v1329 = vld [vmem:[#allocation3] sm:$0xff]
        %1330 = vmatprep.subr.mxu0 %v314
        %1331 = vmatpush1.msra.mxu0 %v313
        %1332 = vmatprep.subr.mxu0 %v318
        %1333 = vmatpush1.msra.mxu0 %v317
        %1334 = vmatprep.subr.mxu0 %v322
        %1335 = vmatpush1.msra.mxu0 %v321
        %1336 = vmatprep.subr.mxu0 %v326
        %1337 = vmatpush1.msra.mxu0 %v325
        %1338 = vmatprep.subr.mxu0 %v330
        %1339 = vmatpush1.msra.mxu0 %v329
        %1340 = vmatprep.subr.mxu0 %v334
        %1341 = vmatpush1.msra.mxu0 %v333
        %1342 = vmatprep.subr.mxu0 %v338
        %1343 = vmatpush1.msra.mxu0 %v337
        %1344 = vmatprep.subr.mxu0 %v342
        %1345 = vmatpush1.msra.mxu0 %v341
        %1346 = vmatprep.subr.mxu0 %v346
        %1347 = vmatpush1.msra.mxu0 %v345
        %1348 = vmatprep.subr.mxu0 %v350
        %1349 = vmatpush1.msra.mxu0 %v349
        %1350 = vmatprep.subr.mxu0 %v354
        %1351 = vmatpush1.msra.mxu0 %v353
        %1352 = vmatprep.subr.mxu0 %v358
        %1353 = vmatpush1.msra.mxu0 %v357
        %1354 = vmatprep.subr.mxu0 %v362
        %1355 = vmatpush1.msra.mxu0 %v361
        %1356 = vmatprep.subr.mxu0 %v366
        %1357 = vmatpush1.msra.mxu0 %v365
        %1358 = vmatprep.subr.mxu0 %v370
        %1359 = vmatpush1.msra.mxu0 %v369
        %1360 = vmatprep.subr.mxu0 %v374
        %1361 = vmatpush1.msra.mxu0 %v373
        %1362 = vmatprep.subr.mxu0 %v378
        %1363 = vmatpush1.msra.mxu0 %v377
        %1364 = vmatprep.subr.mxu0 %v382
        %1365 = vmatpush1.msra.mxu0 %v381
        %1366 = vmatprep.subr.mxu0 %v386
        %1367 = vmatpush1.msra.mxu0 %v385
        %1368 = vmatprep.subr.mxu0 %v390
        %1369 = vmatpush1.msra.mxu0 %v389
        %1370 = vmatprep.subr.mxu0 %v394
        %1371 = vmatpush1.msra.mxu0 %v393
        %1372 = vmatprep.subr.mxu0 %v398
        %1373 = vmatpush1.msra.mxu0 %v397
        %1374 = vmatprep.subr.mxu0 %v402
        %1375 = vmatpush1.msra.mxu0 %v401
        %1376 = vmatprep.subr.mxu0 %v406
        %1377 = vmatpush1.msra.mxu0 %v405
        %1378 = vmatprep.subr.mxu0 %v410
        %1379 = vmatpush1.msra.mxu0 %v409
        %1380 = vmatprep.subr.mxu0 %v414
        %1381 = vmatpush1.msra.mxu0 %v413
        %1382 = vmatprep.subr.mxu0 %v418
        %1383 = vmatpush1.msra.mxu0 %v417
        %1384 = vmatprep.subr.mxu0 %v422
        %1385 = vmatpush1.msra.mxu0 %v421
        %1386 = vmatprep.subr.mxu0 %v426
        %1387 = vmatpush1.msra.mxu0 %v425
        %1388 = vmatprep.subr.mxu0 %v430
        %1389 = vmatpush1.msra.mxu0 %v429
        %1390 = vmatprep.subr.mxu0 %v434
        %1391 = vmatpush1.msra.mxu0 %v433
        %1392 = vmatprep.subr.mxu0 %v438
        %1393 = vmatpush1.msra.mxu0 %v437
        %1394 = vmatprep.mubr.f32.mxu0 %v1329
        %1395 = vmatmul.mubr.f32.gmra.mrb[0].mxu0 %v1328
        %v1396 = vpop.f32.mrb[0].mxu0
        %v1397 = vadd.f32 %v446, %v1396
        %v1398 = vpop.f32.mrb[0].mxu0
        %v1399 = vadd.f32 %v450, %v1398
        %1400 = vdwg.mxu0
        %1401 = vmatprep.subr.mxu0 %v316
        %1402 = vmatpush1.msra.mxu0 %v315
        %1403 = vmatprep.subr.mxu0 %v320
        %1404 = vmatpush1.msra.mxu0 %v319
        %1405 = vmatprep.subr.mxu0 %v324
        %1406 = vmatpush1.msra.mxu0 %v323
        %1407 = vmatprep.subr.mxu0 %v328
        %1408 = vmatpush1.msra.mxu0 %v327
        %1409 = vmatprep.subr.mxu0 %v332
        %1410 = vmatpush1.msra.mxu0 %v331
        %1411 = vmatprep.subr.mxu0 %v336
        %1412 = vmatpush1.msra.mxu0 %v335
        %1413 = vmatprep.subr.mxu0 %v340
        %1414 = vmatpush1.msra.mxu0 %v339
        %1415 = vmatprep.subr.mxu0 %v344
        %1416 = vmatpush1.msra.mxu0 %v343
        %1417 = vmatprep.subr.mxu0 %v348
        %1418 = vmatpush1.msra.mxu0 %v347
        %1419 = vmatprep.subr.mxu0 %v352
        %1420 = vmatpush1.msra.mxu0 %v351
        %1421 = vmatprep.subr.mxu0 %v356
        %1422 = vmatpush1.msra.mxu0 %v355
        %1423 = vmatprep.subr.mxu0 %v360
        %1424 = vmatpush1.msra.mxu0 %v359
        %1425 = vmatprep.subr.mxu0 %v364
        %1426 = vmatpush1.msra.mxu0 %v363
        %1427 = vmatprep.subr.mxu0 %v368
        %1428 = vmatpush1.msra.mxu0 %v367
        %1429 = vmatprep.subr.mxu0 %v372
        %1430 = vmatpush1.msra.mxu0 %v371
        %1431 = vmatprep.subr.mxu0 %v376
        %1432 = vmatpush1.msra.mxu0 %v375
        %1433 = vmatprep.subr.mxu0 %v380
        %1434 = vmatpush1.msra.mxu0 %v379
        %1435 = vmatprep.subr.mxu0 %v384
        %1436 = vmatpush1.msra.mxu0 %v383
        %1437 = vmatprep.subr.mxu0 %v388
        %1438 = vmatpush1.msra.mxu0 %v387
        %1439 = vmatprep.subr.mxu0 %v392
        %1440 = vmatpush1.msra.mxu0 %v391
        %1441 = vmatprep.subr.mxu0 %v396
        %1442 = vmatpush1.msra.mxu0 %v395
        %1443 = vmatprep.subr.mxu0 %v400
        %1444 = vmatpush1.msra.mxu0 %v399
        %1445 = vmatprep.subr.mxu0 %v404
        %1446 = vmatpush1.msra.mxu0 %v403
        %1447 = vmatprep.subr.mxu0 %v408
        %1448 = vmatpush1.msra.mxu0 %v407
        %1449 = vmatprep.subr.mxu0 %v412
        %1450 = vmatpush1.msra.mxu0 %v411
        %1451 = vmatprep.subr.mxu0 %v416
        %1452 = vmatpush1.msra.mxu0 %v415
        %1453 = vmatprep.subr.mxu0 %v420
        %1454 = vmatpush1.msra.mxu0 %v419
        %1455 = vmatprep.subr.mxu0 %v424
        %1456 = vmatpush1.msra.mxu0 %v423
        %1457 = vmatprep.subr.mxu0 %v428
        %1458 = vmatpush1.msra.mxu0 %v427
        %1459 = vmatprep.subr.mxu0 %v432
        %1460 = vmatpush1.msra.mxu0 %v431
        %1461 = vmatprep.subr.mxu0 %v436
        %1462 = vmatpush1.msra.mxu0 %v435
        %1463 = vmatprep.subr.mxu0 %v440
        %1464 = vmatpush1.msra.mxu0 %v439
        %1465 = vmatprep.mubr.f32.mxu0 %v1329
        %1466 = vmatmul.mubr.f32.gmra.mrb[0].mxu0 %v1328
        %v1467 = vpop.f32.mrb[0].mxu0
        %v1468 = vadd.f32 %v454, %v1467
        %v1469 = vpop.f32.mrb[0].mxu0
        %v1470 = vadd.f32 %v458, %v1469
        %1471 = vdwg.mxu0
        %v1472 = vxor.u32 %v1397, 2147483648
        %v1473 = vmul.f32 %v1472, 1.442695
        %v1474 = vpow.pop %v1473
        %v1475 = vadd.f32 %v1474, 1.0
        %v1476 = vrcp.pop %v1475
        %v1477 = vmul.f32 1.0, %v1476
        %v1478 = vxor.u32 %v1399, 2147483648
        %v1479 = vmul.f32 %v1478, 1.442695
        %v1480 = vpow.pop %v1479
        %v1481 = vadd.f32 %v1480, 1.0
        %v1482 = vrcp.pop %v1481
        %v1483 = vmul.f32 1.0, %v1482
        %v1484 = vtanh.pop %v1468
        %v1485 = vxor.u32 %v1470, 2147483648
        %v1486 = vmul.f32 %v1485, 1.442695
        %v1487 = vpow.pop %v1486
        %v1488 = vadd.f32 %v1487, 1.0
        %v1489 = vrcp.pop %v1488
        %v1490 = vmul.f32 1.0, %v1489
        %v1491 = vld [vmem:[#allocation4] sm:$0xff]
        %v1492 = vmul.f32 %v1483, %v1491
        %v1493 = vmul.f32 %v1477, %v1484
        %v1494 = vadd.f32 %v1492, %v1493
        %v1495 = vtanh.pop %v1494
        %v1496 = vmul.f32 %v1490, %v1495
        %1497 = vst [vmem:[#allocation4] sm:$0xff] %v1494
        %1498 = vst [vmem:[#allocation3] sm:$0xff] %v1496
        %1499 = vst [vmem:[%s1327] sm:$0xff] %v1496
        %s1500 = scalar_lea.vmem [#allocation2], 48
        %v1501 = vld [vmem:[%s1500] sm:$0xff]
        %v1502 = vld [vmem:[#allocation3] sm:$0xff]
        %1503 = vmatprep.subr.mxu0 %v314
        %1504 = vmatpush1.msra.mxu0 %v313
        %1505 = vmatprep.subr.mxu0 %v318
        %1506 = vmatpush1.msra.mxu0 %v317
        %1507 = vmatprep.subr.mxu0 %v322
        %1508 = vmatpush1.msra.mxu0 %v321
        %1509 = vmatprep.subr.mxu0 %v326
        %1510 = vmatpush1.msra.mxu0 %v325
        %1511 = vmatprep.subr.mxu0 %v330
        %1512 = vmatpush1.msra.mxu0 %v329
        %1513 = vmatprep.subr.mxu0 %v334
        %1514 = vmatpush1.msra.mxu0 %v333
        %1515 = vmatprep.subr.mxu0 %v338
        %1516 = vmatpush1.msra.mxu0 %v337
        %1517 = vmatprep.subr.mxu0 %v342
        %1518 = vmatpush1.msra.mxu0 %v341
        %1519 = vmatprep.subr.mxu0 %v346
        %1520 = vmatpush1.msra.mxu0 %v345
        %1521 = vmatprep.subr.mxu0 %v350
        %1522 = vmatpush1.msra.mxu0 %v349
        %1523 = vmatprep.subr.mxu0 %v354
        %1524 = vmatpush1.msra.mxu0 %v353
        %1525 = vmatprep.subr.mxu0 %v358
        %1526 = vmatpush1.msra.mxu0 %v357
        %1527 = vmatprep.subr.mxu0 %v362
        %1528 = vmatpush1.msra.mxu0 %v361
        %1529 = vmatprep.subr.mxu0 %v366
        %1530 = vmatpush1.msra.mxu0 %v365
        %1531 = vmatprep.subr.mxu0 %v370
        %1532 = vmatpush1.msra.mxu0 %v369
        %1533 = vmatprep.subr.mxu0 %v374
        %1534 = vmatpush1.msra.mxu0 %v373
        %1535 = vmatprep.subr.mxu0 %v378
        %1536 = vmatpush1.msra.mxu0 %v377
        %1537 = vmatprep.subr.mxu0 %v382
        %1538 = vmatpush1.msra.mxu0 %v381
        %1539 = vmatprep.subr.mxu0 %v386
        %1540 = vmatpush1.msra.mxu0 %v385
        %1541 = vmatprep.subr.mxu0 %v390
        %1542 = vmatpush1.msra.mxu0 %v389
        %1543 = vmatprep.subr.mxu0 %v394
        %1544 = vmatpush1.msra.mxu0 %v393
        %1545 = vmatprep.subr.mxu0 %v398
        %1546 = vmatpush1.msra.mxu0 %v397
        %1547 = vmatprep.subr.mxu0 %v402
        %1548 = vmatpush1.msra.mxu0 %v401
        %1549 = vmatprep.subr.mxu0 %v406
        %1550 = vmatpush1.msra.mxu0 %v405
        %1551 = vmatprep.subr.mxu0 %v410
        %1552 = vmatpush1.msra.mxu0 %v409
        %1553 = vmatprep.subr.mxu0 %v414
        %1554 = vmatpush1.msra.mxu0 %v413
        %1555 = vmatprep.subr.mxu0 %v418
        %1556 = vmatpush1.msra.mxu0 %v417
        %1557 = vmatprep.subr.mxu0 %v422
        %1558 = vmatpush1.msra.mxu0 %v421
        %1559 = vmatprep.subr.mxu0 %v426
        %1560 = vmatpush1.msra.mxu0 %v425
        %1561 = vmatprep.subr.mxu0 %v430
        %1562 = vmatpush1.msra.mxu0 %v429
        %1563 = vmatprep.subr.mxu0 %v434
        %1564 = vmatpush1.msra.mxu0 %v433
        %1565 = vmatprep.subr.mxu0 %v438
        %1566 = vmatpush1.msra.mxu0 %v437
        %1567 = vmatprep.mubr.f32.mxu0 %v1502
        %1568 = vmatmul.mubr.f32.gmra.mrb[0].mxu0 %v1501
        %v1569 = vpop.f32.mrb[0].mxu0
        %v1570 = vadd.f32 %v446, %v1569
        %v1571 = vpop.f32.mrb[0].mxu0
        %v1572 = vadd.f32 %v450, %v1571
        %1573 = vdwg.mxu0
        %1574 = vmatprep.subr.mxu0 %v316
        %1575 = vmatpush1.msra.mxu0 %v315
        %1576 = vmatprep.subr.mxu0 %v320
        %1577 = vmatpush1.msra.mxu0 %v319
        %1578 = vmatprep.subr.mxu0 %v324
        %1579 = vmatpush1.msra.mxu0 %v323
        %1580 = vmatprep.subr.mxu0 %v328
        %1581 = vmatpush1.msra.mxu0 %v327
        %1582 = vmatprep.subr.mxu0 %v332
        %1583 = vmatpush1.msra.mxu0 %v331
        %1584 = vmatprep.subr.mxu0 %v336
        %1585 = vmatpush1.msra.mxu0 %v335
        %1586 = vmatprep.subr.mxu0 %v340
        %1587 = vmatpush1.msra.mxu0 %v339
        %1588 = vmatprep.subr.mxu0 %v344
        %1589 = vmatpush1.msra.mxu0 %v343
        %1590 = vmatprep.subr.mxu0 %v348
        %1591 = vmatpush1.msra.mxu0 %v347
        %1592 = vmatprep.subr.mxu0 %v352
        %1593 = vmatpush1.msra.mxu0 %v351
        %1594 = vmatprep.subr.mxu0 %v356
        %1595 = vmatpush1.msra.mxu0 %v355
        %1596 = vmatprep.subr.mxu0 %v360
        %1597 = vmatpush1.msra.mxu0 %v359
        %1598 = vmatprep.subr.mxu0 %v364
        %1599 = vmatpush1.msra.mxu0 %v363
        %1600 = vmatprep.subr.mxu0 %v368
        %1601 = vmatpush1.msra.mxu0 %v367
        %1602 = vmatprep.subr.mxu0 %v372
        %1603 = vmatpush1.msra.mxu0 %v371
        %1604 = vmatprep.subr.mxu0 %v376
        %1605 = vmatpush1.msra.mxu0 %v375
        %1606 = vmatprep.subr.mxu0 %v380
        %1607 = vmatpush1.msra.mxu0 %v379
        %1608 = vmatprep.subr.mxu0 %v384
        %1609 = vmatpush1.msra.mxu0 %v383
        %1610 = vmatprep.subr.mxu0 %v388
        %1611 = vmatpush1.msra.mxu0 %v387
        %1612 = vmatprep.subr.mxu0 %v392
        %1613 = vmatpush1.msra.mxu0 %v391
        %1614 = vmatprep.subr.mxu0 %v396
        %1615 = vmatpush1.msra.mxu0 %v395
        %1616 = vmatprep.subr.mxu0 %v400
        %1617 = vmatpush1.msra.mxu0 %v399
        %1618 = vmatprep.subr.mxu0 %v404
        %1619 = vmatpush1.msra.mxu0 %v403
        %1620 = vmatprep.subr.mxu0 %v408
        %1621 = vmatpush1.msra.mxu0 %v407
        %1622 = vmatprep.subr.mxu0 %v412
        %1623 = vmatpush1.msra.mxu0 %v411
        %1624 = vmatprep.subr.mxu0 %v416
        %1625 = vmatpush1.msra.mxu0 %v415
        %1626 = vmatprep.subr.mxu0 %v420
        %1627 = vmatpush1.msra.mxu0 %v419
        %1628 = vmatprep.subr.mxu0 %v424
        %1629 = vmatpush1.msra.mxu0 %v423
        %1630 = vmatprep.subr.mxu0 %v428
        %1631 = vmatpush1.msra.mxu0 %v427
        %1632 = vmatprep.subr.mxu0 %v432
        %1633 = vmatpush1.msra.mxu0 %v431
        %1634 = vmatprep.subr.mxu0 %v436
        %1635 = vmatpush1.msra.mxu0 %v435
        %1636 = vmatprep.subr.mxu0 %v440
        %1637 = vmatpush1.msra.mxu0 %v439
        %1638 = vmatprep.mubr.f32.mxu0 %v1502
        %1639 = vmatmul.mubr.f32.gmra.mrb[0].mxu0 %v1501
        %v1640 = vpop.f32.mrb[0].mxu0
        %v1641 = vadd.f32 %v454, %v1640
        %v1642 = vpop.f32.mrb[0].mxu0
        %v1643 = vadd.f32 %v458, %v1642
        %1644 = vdwg.mxu0
        %v1645 = vxor.u32 %v1570, 2147483648
        %v1646 = vmul.f32 %v1645, 1.442695
        %v1647 = vpow.pop %v1646
        %v1648 = vadd.f32 %v1647, 1.0
        %v1649 = vrcp.pop %v1648
        %v1650 = vmul.f32 1.0, %v1649
        %v1651 = vxor.u32 %v1572, 2147483648
        %v1652 = vmul.f32 %v1651, 1.442695
        %v1653 = vpow.pop %v1652
        %v1654 = vadd.f32 %v1653, 1.0
        %v1655 = vrcp.pop %v1654
        %v1656 = vmul.f32 1.0, %v1655
        %v1657 = vtanh.pop %v1641
        %v1658 = vxor.u32 %v1643, 2147483648
        %v1659 = vmul.f32 %v1658, 1.442695
        %v1660 = vpow.pop %v1659
        %v1661 = vadd.f32 %v1660, 1.0
        %v1662 = vrcp.pop %v1661
        %v1663 = vmul.f32 1.0, %v1662
        %v1664 = vld [vmem:[#allocation4] sm:$0xff]
        %v1665 = vmul.f32 %v1656, %v1664
        %v1666 = vmul.f32 %v1650, %v1657
        %v1667 = vadd.f32 %v1665, %v1666
        %v1668 = vtanh.pop %v1667
        %v1669 = vmul.f32 %v1663, %v1668
        %1670 = vst [vmem:[#allocation4] sm:$0xff] %v1667
        %1671 = vst [vmem:[#allocation3] sm:$0xff] %v1669
        %1672 = vst [vmem:[%s1500] sm:$0xff] %v1669
        %s1673 = scalar_lea.vmem [#allocation2], 56
        %v1674 = vld [vmem:[%s1673] sm:$0xff]
        %v1675 = vld [vmem:[#allocation3] sm:$0xff]
        %1676 = vmatprep.subr.mxu0 %v314
        %1677 = vmatpush1.msra.mxu0 %v313
        %1678 = vmatprep.subr.mxu0 %v318
        %1679 = vmatpush1.msra.mxu0 %v317
        %1680 = vmatprep.subr.mxu0 %v322
        %1681 = vmatpush1.msra.mxu0 %v321
        %1682 = vmatprep.subr.mxu0 %v326
        %1683 = vmatpush1.msra.mxu0 %v325
        %1684 = vmatprep.subr.mxu0 %v330
        %1685 = vmatpush1.msra.mxu0 %v329
        %1686 = vmatprep.subr.mxu0 %v334
        %1687 = vmatpush1.msra.mxu0 %v333
        %1688 = vmatprep.subr.mxu0 %v338
        %1689 = vmatpush1.msra.mxu0 %v337
        %1690 = vmatprep.subr.mxu0 %v342
        %1691 = vmatpush1.msra.mxu0 %v341
        %1692 = vmatprep.subr.mxu0 %v346
        %1693 = vmatpush1.msra.mxu0 %v345
        %1694 = vmatprep.subr.mxu0 %v350
        %1695 = vmatpush1.msra.mxu0 %v349
        %1696 = vmatprep.subr.mxu0 %v354
        %1697 = vmatpush1.msra.mxu0 %v353
        %1698 = vmatprep.subr.mxu0 %v358
        %1699 = vmatpush1.msra.mxu0 %v357
        %1700 = vmatprep.subr.mxu0 %v362
        %1701 = vmatpush1.msra.mxu0 %v361
        %1702 = vmatprep.subr.mxu0 %v366
        %1703 = vmatpush1.msra.mxu0 %v365
        %1704 = vmatprep.subr.mxu0 %v370
        %1705 = vmatpush1.msra.mxu0 %v369
        %1706 = vmatprep.subr.mxu0 %v374
        %1707 = vmatpush1.msra.mxu0 %v373
        %1708 = vmatprep.subr.mxu0 %v378
        %1709 = vmatpush1.msra.mxu0 %v377
        %1710 = vmatprep.subr.mxu0 %v382
        %1711 = vmatpush1.msra.mxu0 %v381
        %1712 = vmatprep.subr.mxu0 %v386
        %1713 = vmatpush1.msra.mxu0 %v385
        %1714 = vmatprep.subr.mxu0 %v390
        %1715 = vmatpush1.msra.mxu0 %v389
        %1716 = vmatprep.subr.mxu0 %v394
        %1717 = vmatpush1.msra.mxu0 %v393
        %1718 = vmatprep.subr.mxu0 %v398
        %1719 = vmatpush1.msra.mxu0 %v397
        %1720 = vmatprep.subr.mxu0 %v402
        %1721 = vmatpush1.msra.mxu0 %v401
        %1722 = vmatprep.subr.mxu0 %v406
        %1723 = vmatpush1.msra.mxu0 %v405
        %1724 = vmatprep.subr.mxu0 %v410
        %1725 = vmatpush1.msra.mxu0 %v409
        %1726 = vmatprep.subr.mxu0 %v414
        %1727 = vmatpush1.msra.mxu0 %v413
        %1728 = vmatprep.subr.mxu0 %v418
        %1729 = vmatpush1.msra.mxu0 %v417
        %1730 = vmatprep.subr.mxu0 %v422
        %1731 = vmatpush1.msra.mxu0 %v421
        %1732 = vmatprep.subr.mxu0 %v426
        %1733 = vmatpush1.msra.mxu0 %v425
        %1734 = vmatprep.subr.mxu0 %v430
        %1735 = vmatpush1.msra.mxu0 %v429
        %1736 = vmatprep.subr.mxu0 %v434
        %1737 = vmatpush1.msra.mxu0 %v433
        %1738 = vmatprep.subr.mxu0 %v438
        %1739 = vmatpush1.msra.mxu0 %v437
        %1740 = vmatprep.mubr.f32.mxu0 %v1675
        %1741 = vmatmul.mubr.f32.gmra.mrb[0].mxu0 %v1674
        %v1742 = vpop.f32.mrb[0].mxu0
        %v1743 = vadd.f32 %v446, %v1742
        %v1744 = vpop.f32.mrb[0].mxu0
        %v1745 = vadd.f32 %v450, %v1744
        %1746 = vdwg.mxu0
        %1747 = vmatprep.subr.mxu0 %v316
        %1748 = vmatpush1.msra.mxu0 %v315
        %1749 = vmatprep.subr.mxu0 %v320
        %1750 = vmatpush1.msra.mxu0 %v319
        %1751 = vmatprep.subr.mxu0 %v324
        %1752 = vmatpush1.msra.mxu0 %v323
        %1753 = vmatprep.subr.mxu0 %v328
        %1754 = vmatpush1.msra.mxu0 %v327
        %1755 = vmatprep.subr.mxu0 %v332
        %1756 = vmatpush1.msra.mxu0 %v331
        %1757 = vmatprep.subr.mxu0 %v336
        %1758 = vmatpush1.msra.mxu0 %v335
        %1759 = vmatprep.subr.mxu0 %v340
        %1760 = vmatpush1.msra.mxu0 %v339
        %1761 = vmatprep.subr.mxu0 %v344
        %1762 = vmatpush1.msra.mxu0 %v343
        %1763 = vmatprep.subr.mxu0 %v348
        %1764 = vmatpush1.msra.mxu0 %v347
        %1765 = vmatprep.subr.mxu0 %v352
        %1766 = vmatpush1.msra.mxu0 %v351
        %1767 = vmatprep.subr.mxu0 %v356
        %1768 = vmatpush1.msra.mxu0 %v355
        %1769 = vmatprep.subr.mxu0 %v360
        %1770 = vmatpush1.msra.mxu0 %v359
        %1771 = vmatprep.subr.mxu0 %v364
        %1772 = vmatpush1.msra.mxu0 %v363
        %1773 = vmatprep.subr.mxu0 %v368
        %1774 = vmatpush1.msra.mxu0 %v367
        %1775 = vmatprep.subr.mxu0 %v372
        %1776 = vmatpush1.msra.mxu0 %v371
        %1777 = vmatprep.subr.mxu0 %v376
        %1778 = vmatpush1.msra.mxu0 %v375
        %1779 = vmatprep.subr.mxu0 %v380
        %1780 = vmatpush1.msra.mxu0 %v379
        %1781 = vmatprep.subr.mxu0 %v384
        %1782 = vmatpush1.msra.mxu0 %v383
        %1783 = vmatprep.subr.mxu0 %v388
        %1784 = vmatpush1.msra.mxu0 %v387
        %1785 = vmatprep.subr.mxu0 %v392
        %1786 = vmatpush1.msra.mxu0 %v391
        %1787 = vmatprep.subr.mxu0 %v396
        %1788 = vmatpush1.msra.mxu0 %v395
        %1789 = vmatprep.subr.mxu0 %v400
        %1790 = vmatpush1.msra.mxu0 %v399
        %1791 = vmatprep.subr.mxu0 %v404
        %1792 = vmatpush1.msra.mxu0 %v403
        %1793 = vmatprep.subr.mxu0 %v408
        %1794 = vmatpush1.msra.mxu0 %v407
        %1795 = vmatprep.subr.mxu0 %v412
        %1796 = vmatpush1.msra.mxu0 %v411
        %1797 = vmatprep.subr.mxu0 %v416
        %1798 = vmatpush1.msra.mxu0 %v415
        %1799 = vmatprep.subr.mxu0 %v420
        %1800 = vmatpush1.msra.mxu0 %v419
        %1801 = vmatprep.subr.mxu0 %v424
        %1802 = vmatpush1.msra.mxu0 %v423
        %1803 = vmatprep.subr.mxu0 %v428
        %1804 = vmatpush1.msra.mxu0 %v427
        %1805 = vmatprep.subr.mxu0 %v432
        %1806 = vmatpush1.msra.mxu0 %v431
        %1807 = vmatprep.subr.mxu0 %v436
        %1808 = vmatpush1.msra.mxu0 %v435
        %1809 = vmatprep.subr.mxu0 %v440
        %1810 = vmatpush1.msra.mxu0 %v439
        %1811 = vmatprep.mubr.f32.mxu0 %v1675
        %1812 = vmatmul.mubr.f32.gmra.mrb[0].mxu0 %v1674
        %v1813 = vpop.f32.mrb[0].mxu0
        %v1814 = vadd.f32 %v454, %v1813
        %v1815 = vpop.f32.mrb[0].mxu0
        %v1816 = vadd.f32 %v458, %v1815
        %1817 = vdwg.mxu0
        %v1818 = vxor.u32 %v1743, 2147483648
        %v1819 = vmul.f32 %v1818, 1.442695
        %v1820 = vpow.pop %v1819
        %v1821 = vadd.f32 %v1820, 1.0
        %v1822 = vrcp.pop %v1821
        %v1823 = vmul.f32 1.0, %v1822
        %v1824 = vxor.u32 %v1745, 2147483648
        %v1825 = vmul.f32 %v1824, 1.442695
        %v1826 = vpow.pop %v1825
        %v1827 = vadd.f32 %v1826, 1.0
        %v1828 = vrcp.pop %v1827
        %v1829 = vmul.f32 1.0, %v1828
        %v1830 = vtanh.pop %v1814
        %v1831 = vxor.u32 %v1816, 2147483648
        %v1832 = vmul.f32 %v1831, 1.442695
        %v1833 = vpow.pop %v1832
        %v1834 = vadd.f32 %v1833, 1.0
        %v1835 = vrcp.pop %v1834
        %v1836 = vmul.f32 1.0, %v1835
        %v1837 = vld [vmem:[#allocation4] sm:$0xff]
        %v1838 = vmul.f32 %v1829, %v1837
        %v1839 = vmul.f32 %v1823, %v1830
        %v1840 = vadd.f32 %v1838, %v1839
        %v1841 = vtanh.pop %v1840
        %v1842 = vmul.f32 %v1836, %v1841
        %1843 = vst [vmem:[#allocation4] sm:$0xff] %v1840
        %1844 = vst [vmem:[#allocation3] sm:$0xff] %v1842
        %1845 = vst [vmem:[%s1673] sm:$0xff] %v1842
        %s1846 = scalar_lea.vmem [#allocation8], 1024
        %v1847 = vld [vmem:[%s1846] sm:$0xff]
        %v1848 = vld [vmem:[%s1846 + $0x8] sm:$0xff]
        %v1849 = vld [vmem:[%s1846 + $0x10] sm:$0xff]
        %v1850 = vld [vmem:[%s1846 + $0x18] sm:$0xff]
        %v1851 = vld [vmem:[%s1846 + $0x20] sm:$0xff]
        %v1852 = vld [vmem:[%s1846 + $0x28] sm:$0xff]
        %v1853 = vld [vmem:[%s1846 + $0x30] sm:$0xff]
        %v1854 = vld [vmem:[%s1846 + $0x38] sm:$0xff]
        %v1855 = vld [vmem:[%s1846 + $0x40] sm:$0xff]
        %v1856 = vld [vmem:[%s1846 + $0x48] sm:$0xff]
        %v1857 = vld [vmem:[%s1846 + $0x50] sm:$0xff]
        %v1858 = vld [vmem:[%s1846 + $0x58] sm:$0xff]
        %v1859 = vld [vmem:[%s1846 + $0x60] sm:$0xff]
        %v1860 = vld [vmem:[%s1846 + $0x68] sm:$0xff]
        %v1861 = vld [vmem:[%s1846 + $0x70] sm:$0xff]
        %v1862 = vld [vmem:[%s1846 + $0x78] sm:$0xff]
        %v1863 = vld [vmem:[%s1846 + $0x80] sm:$0xff]
        %v1864 = vld [vmem:[%s1846 + $0x88] sm:$0xff]
        %v1865 = vld [vmem:[%s1846 + $0x90] sm:$0xff]
        %v1866 = vld [vmem:[%s1846 + $0x98] sm:$0xff]
        %v1867 = vld [vmem:[%s1846 + $0xa0] sm:$0xff]
        %v1868 = vld [vmem:[%s1846 + $0xa8] sm:$0xff]
        %v1869 = vld [vmem:[%s1846 + $0xb0] sm:$0xff]
        %v1870 = vld [vmem:[%s1846 + $0xb8] sm:$0xff]
        %v1871 = vld [vmem:[%s1846 + $0xc0] sm:$0xff]
        %v1872 = vld [vmem:[%s1846 + $0xc8] sm:$0xff]
        %v1873 = vld [vmem:[%s1846 + $0xd0] sm:$0xff]
        %v1874 = vld [vmem:[%s1846 + $0xd8] sm:$0xff]
        %v1875 = vld [vmem:[%s1846 + $0xe0] sm:$0xff]
        %v1876 = vld [vmem:[%s1846 + $0xe8] sm:$0xff]
        %v1877 = vld [vmem:[%s1846 + $0xf0] sm:$0xff]
        %v1878 = vld [vmem:[%s1846 + $0xf8] sm:$0xff]
        %v1879 = vld [vmem:[%s1846 + $0x100] sm:$0xff]
        %v1880 = vld [vmem:[%s1846 + $0x108] sm:$0xff]
        %v1881 = vld [vmem:[%s1846 + $0x110] sm:$0xff]
        %v1882 = vld [vmem:[%s1846 + $0x118] sm:$0xff]
        %v1883 = vld [vmem:[%s1846 + $0x120] sm:$0xff]
        %v1884 = vld [vmem:[%s1846 + $0x128] sm:$0xff]
        %v1885 = vld [vmem:[%s1846 + $0x130] sm:$0xff]
        %v1886 = vld [vmem:[%s1846 + $0x138] sm:$0xff]
        %v1887 = vld [vmem:[%s1846 + $0x140] sm:$0xff]
        %v1888 = vld [vmem:[%s1846 + $0x148] sm:$0xff]
        %v1889 = vld [vmem:[%s1846 + $0x150] sm:$0xff]
        %v1890 = vld [vmem:[%s1846 + $0x158] sm:$0xff]
        %v1891 = vld [vmem:[%s1846 + $0x160] sm:$0xff]
        %v1892 = vld [vmem:[%s1846 + $0x168] sm:$0xff]
        %v1893 = vld [vmem:[%s1846 + $0x170] sm:$0xff]
        %v1894 = vld [vmem:[%s1846 + $0x178] sm:$0xff]
        %v1895 = vld [vmem:[%s1846 + $0x180] sm:$0xff]
        %v1896 = vld [vmem:[%s1846 + $0x188] sm:$0xff]
        %v1897 = vld [vmem:[%s1846 + $0x190] sm:$0xff]
        %v1898 = vld [vmem:[%s1846 + $0x198] sm:$0xff]
        %v1899 = vld [vmem:[%s1846 + $0x1a0] sm:$0xff]
        %v1900 = vld [vmem:[%s1846 + $0x1a8] sm:$0xff]
        %v1901 = vld [vmem:[%s1846 + $0x1b0] sm:$0xff]
        %v1902 = vld [vmem:[%s1846 + $0x1b8] sm:$0xff]
        %v1903 = vld [vmem:[%s1846 + $0x1c0] sm:$0xff]
        %v1904 = vld [vmem:[%s1846 + $0x1c8] sm:$0xff]
        %v1905 = vld [vmem:[%s1846 + $0x1d0] sm:$0xff]
        %v1906 = vld [vmem:[%s1846 + $0x1d8] sm:$0xff]
        %v1907 = vld [vmem:[%s1846 + $0x1e0] sm:$0xff]
        %v1908 = vld [vmem:[%s1846 + $0x1e8] sm:$0xff]
        %v1909 = vld [vmem:[%s1846 + $0x1f0] sm:$0xff]
        %v1910 = vld [vmem:[%s1846 + $0x1f8] sm:$0xff]
        %v1911 = vld [vmem:[%s1846 + $0x200] sm:$0xff]
        %v1912 = vld [vmem:[%s1846 + $0x208] sm:$0xff]
        %v1913 = vld [vmem:[%s1846 + $0x210] sm:$0xff]
        %v1914 = vld [vmem:[%s1846 + $0x218] sm:$0xff]
        %v1915 = vld [vmem:[%s1846 + $0x220] sm:$0xff]
        %v1916 = vld [vmem:[%s1846 + $0x228] sm:$0xff]
        %v1917 = vld [vmem:[%s1846 + $0x230] sm:$0xff]
        %v1918 = vld [vmem:[%s1846 + $0x238] sm:$0xff]
        %v1919 = vld [vmem:[%s1846 + $0x240] sm:$0xff]
        %v1920 = vld [vmem:[%s1846 + $0x248] sm:$0xff]
        %v1921 = vld [vmem:[%s1846 + $0x250] sm:$0xff]
        %v1922 = vld [vmem:[%s1846 + $0x258] sm:$0xff]
        %v1923 = vld [vmem:[%s1846 + $0x260] sm:$0xff]
        %v1924 = vld [vmem:[%s1846 + $0x268] sm:$0xff]
        %v1925 = vld [vmem:[%s1846 + $0x270] sm:$0xff]
        %v1926 = vld [vmem:[%s1846 + $0x278] sm:$0xff]
        %v1927 = vld [vmem:[%s1846 + $0x280] sm:$0xff]
        %v1928 = vld [vmem:[%s1846 + $0x288] sm:$0xff]
        %v1929 = vld [vmem:[%s1846 + $0x290] sm:$0xff]
        %v1930 = vld [vmem:[%s1846 + $0x298] sm:$0xff]
        %v1931 = vld [vmem:[%s1846 + $0x2a0] sm:$0xff]
        %v1932 = vld [vmem:[%s1846 + $0x2a8] sm:$0xff]
        %v1933 = vld [vmem:[%s1846 + $0x2b0] sm:$0xff]
        %v1934 = vld [vmem:[%s1846 + $0x2b8] sm:$0xff]
        %v1935 = vld [vmem:[%s1846 + $0x2c0] sm:$0xff]
        %v1936 = vld [vmem:[%s1846 + $0x2c8] sm:$0xff]
        %v1937 = vld [vmem:[%s1846 + $0x2d0] sm:$0xff]
        %v1938 = vld [vmem:[%s1846 + $0x2d8] sm:$0xff]
        %v1939 = vld [vmem:[%s1846 + $0x2e0] sm:$0xff]
        %v1940 = vld [vmem:[%s1846 + $0x2e8] sm:$0xff]
        %v1941 = vld [vmem:[%s1846 + $0x2f0] sm:$0xff]
        %v1942 = vld [vmem:[%s1846 + $0x2f8] sm:$0xff]
        %v1943 = vld [vmem:[%s1846 + $0x300] sm:$0xff]
        %v1944 = vld [vmem:[%s1846 + $0x308] sm:$0xff]
        %v1945 = vld [vmem:[%s1846 + $0x310] sm:$0xff]
        %v1946 = vld [vmem:[%s1846 + $0x318] sm:$0xff]
        %v1947 = vld [vmem:[%s1846 + $0x320] sm:$0xff]
        %v1948 = vld [vmem:[%s1846 + $0x328] sm:$0xff]
        %v1949 = vld [vmem:[%s1846 + $0x330] sm:$0xff]
        %v1950 = vld [vmem:[%s1846 + $0x338] sm:$0xff]
        %v1951 = vld [vmem:[%s1846 + $0x340] sm:$0xff]
        %v1952 = vld [vmem:[%s1846 + $0x348] sm:$0xff]
        %v1953 = vld [vmem:[%s1846 + $0x350] sm:$0xff]
        %v1954 = vld [vmem:[%s1846 + $0x358] sm:$0xff]
        %v1955 = vld [vmem:[%s1846 + $0x360] sm:$0xff]
        %v1956 = vld [vmem:[%s1846 + $0x368] sm:$0xff]
        %v1957 = vld [vmem:[%s1846 + $0x370] sm:$0xff]
        %v1958 = vld [vmem:[%s1846 + $0x378] sm:$0xff]
        %v1959 = vld [vmem:[%s1846 + $0x380] sm:$0xff]
        %v1960 = vld [vmem:[%s1846 + $0x388] sm:$0xff]
        %v1961 = vld [vmem:[%s1846 + $0x390] sm:$0xff]
        %v1962 = vld [vmem:[%s1846 + $0x398] sm:$0xff]
        %v1963 = vld [vmem:[%s1846 + $0x3a0] sm:$0xff]
        %v1964 = vld [vmem:[%s1846 + $0x3a8] sm:$0xff]
        %v1965 = vld [vmem:[%s1846 + $0x3b0] sm:$0xff]
        %v1966 = vld [vmem:[%s1846 + $0x3b8] sm:$0xff]
        %v1967 = vld [vmem:[%s1846 + $0x3c0] sm:$0xff]
        %v1968 = vld [vmem:[%s1846 + $0x3c8] sm:$0xff]
        %v1969 = vld [vmem:[%s1846 + $0x3d0] sm:$0xff]
        %v1970 = vld [vmem:[%s1846 + $0x3d8] sm:$0xff]
        %v1971 = vld [vmem:[%s1846 + $0x3e0] sm:$0xff]
        %v1972 = vld [vmem:[%s1846 + $0x3e8] sm:$0xff]
        %v1973 = vld [vmem:[%s1846 + $0x3f0] sm:$0xff]
        %v1974 = vld [vmem:[%s1846 + $0x3f8] sm:$0xff]
        %s1975 = scalar_lea.vmem [#allocation10], 4
        %v1976 = vld [vmem:[%s1975] sm:$0xf]
        %v1978 = vlaneseq
        %v1979 = vshrl.u32 %v1978, 7
        %v1980 = vsub.s32 0, %v1979
        %v1981 = vrot.slane %v1976, %v1980
        %v1982 = vlaneseq
        %v1983 = vshrl.u32 %v1982, 7
        %v1984 = vsub.s32 1, %v1983
        %v1985 = vrot.slane %v1976, %v1984
        %v1986 = vlaneseq
        %v1987 = vshrl.u32 %v1986, 7
        %v1988 = vsub.s32 2, %v1987
        %v1989 = vrot.slane %v1976, %v1988
        %v1990 = vlaneseq
        %v1991 = vshrl.u32 %v1990, 7
        %v1992 = vsub.s32 3, %v1991
        %v1993 = vrot.slane %v1976, %v1992
        %v1998 = vld [vmem:[#allocation2] sm:$0xff]
        %s1999 = scalar_lea.vmem [#allocation3], 8
        %v2000 = vld [vmem:[%s1999] sm:$0xff]
        %2001 = vmatprep.subr.mxu0 %v1848
        %2002 = vmatpush1.msra.mxu0 %v1847
        %2003 = vmatprep.subr.mxu0 %v1852
        %2004 = vmatpush1.msra.mxu0 %v1851
        %2005 = vmatprep.subr.mxu0 %v1856
        %2006 = vmatpush1.msra.mxu0 %v1855
        %2007 = vmatprep.subr.mxu0 %v1860
        %2008 = vmatpush1.msra.mxu0 %v1859
        %2009 = vmatprep.subr.mxu0 %v1864
        %2010 = vmatpush1.msra.mxu0 %v1863
        %2011 = vmatprep.subr.mxu0 %v1868
        %2012 = vmatpush1.msra.mxu0 %v1867
        %2013 = vmatprep.subr.mxu0 %v1872
        %2014 = vmatpush1.msra.mxu0 %v1871
        %2015 = vmatprep.subr.mxu0 %v1876
        %2016 = vmatpush1.msra.mxu0 %v1875
        %2017 = vmatprep.subr.mxu0 %v1880
        %2018 = vmatpush1.msra.mxu0 %v1879
        %2019 = vmatprep.subr.mxu0 %v1884
        %2020 = vmatpush1.msra.mxu0 %v1883
        %2021 = vmatprep.subr.mxu0 %v1888
        %2022 = vmatpush1.msra.mxu0 %v1887
        %2023 = vmatprep.subr.mxu0 %v1892
        %2024 = vmatpush1.msra.mxu0 %v1891
        %2025 = vmatprep.subr.mxu0 %v1896
        %2026 = vmatpush1.msra.mxu0 %v1895
        %2027 = vmatprep.subr.mxu0 %v1900
        %2028 = vmatpush1.msra.mxu0 %v1899
        %2029 = vmatprep.subr.mxu0 %v1904
        %2030 = vmatpush1.msra.mxu0 %v1903
        %2031 = vmatprep.subr.mxu0 %v1908
        %2032 = vmatpush1.msra.mxu0 %v1907
        %2033 = vmatprep.subr.mxu0 %v1912
        %2034 = vmatpush1.msra.mxu0 %v1911
        %2035 = vmatprep.subr.mxu0 %v1916
        %2036 = vmatpush1.msra.mxu0 %v1915
        %2037 = vmatprep.subr.mxu0 %v1920
        %2038 = vmatpush1.msra.mxu0 %v1919
        %2039 = vmatprep.subr.mxu0 %v1924
        %2040 = vmatpush1.msra.mxu0 %v1923
        %2041 = vmatprep.subr.mxu0 %v1928
        %2042 = vmatpush1.msra.mxu0 %v1927
        %2043 = vmatprep.subr.mxu0 %v1932
        %2044 = vmatpush1.msra.mxu0 %v1931
        %2045 = vmatprep.subr.mxu0 %v1936
        %2046 = vmatpush1.msra.mxu0 %v1935
        %2047 = vmatprep.subr.mxu0 %v1940
        %2048 = vmatpush1.msra.mxu0 %v1939
        %2049 = vmatprep.subr.mxu0 %v1944
        %2050 = vmatpush1.msra.mxu0 %v1943
        %2051 = vmatprep.subr.mxu0 %v1948
        %2052 = vmatpush1.msra.mxu0 %v1947
        %2053 = vmatprep.subr.mxu0 %v1952
        %2054 = vmatpush1.msra.mxu0 %v1951
        %2055 = vmatprep.subr.mxu0 %v1956
        %2056 = vmatpush1.msra.mxu0 %v1955
        %2057 = vmatprep.subr.mxu0 %v1960
        %2058 = vmatpush1.msra.mxu0 %v1959
        %2059 = vmatprep.subr.mxu0 %v1964
        %2060 = vmatpush1.msra.mxu0 %v1963
        %2061 = vmatprep.subr.mxu0 %v1968
        %2062 = vmatpush1.msra.mxu0 %v1967
        %2063 = vmatprep.subr.mxu0 %v1972
        %2064 = vmatpush1.msra.mxu0 %v1971
        %2065 = vmatprep.mubr.f32.mxu0 %v2000
        %2066 = vmatmul.mubr.f32.gmra.mrb[0].mxu0 %v1998
        %v2067 = vpop.f32.mrb[0].mxu0
        %v2068 = vadd.f32 %v1981, %v2067
        %v2069 = vpop.f32.mrb[0].mxu0
        %v2070 = vadd.f32 %v1985, %v2069
        %2071 = vdwg.mxu0
        %2072 = vmatprep.subr.mxu0 %v1850
        %2073 = vmatpush1.msra.mxu0 %v1849
        %2074 = vmatprep.subr.mxu0 %v1854
        %2075 = vmatpush1.msra.mxu0 %v1853
        %2076 = vmatprep.subr.mxu0 %v1858
        %2077 = vmatpush1.msra.mxu0 %v1857
        %2078 = vmatprep.subr.mxu0 %v1862
        %2079 = vmatpush1.msra.mxu0 %v1861
        %2080 = vmatprep.subr.mxu0 %v1866
        %2081 = vmatpush1.msra.mxu0 %v1865
        %2082 = vmatprep.subr.mxu0 %v1870
        %2083 = vmatpush1.msra.mxu0 %v1869
        %2084 = vmatprep.subr.mxu0 %v1874
        %2085 = vmatpush1.msra.mxu0 %v1873
        %2086 = vmatprep.subr.mxu0 %v1878
        %2087 = vmatpush1.msra.mxu0 %v1877
        %2088 = vmatprep.subr.mxu0 %v1882
        %2089 = vmatpush1.msra.mxu0 %v1881
        %2090 = vmatprep.subr.mxu0 %v1886
        %2091 = vmatpush1.msra.mxu0 %v1885
        %2092 = vmatprep.subr.mxu0 %v1890
        %2093 = vmatpush1.msra.mxu0 %v1889
        %2094 = vmatprep.subr.mxu0 %v1894
        %2095 = vmatpush1.msra.mxu0 %v1893
        %2096 = vmatprep.subr.mxu0 %v1898
        %2097 = vmatpush1.msra.mxu0 %v1897
        %2098 = vmatprep.subr.mxu0 %v1902
        %2099 = vmatpush1.msra.mxu0 %v1901
        %2100 = vmatprep.subr.mxu0 %v1906
        %2101 = vmatpush1.msra.mxu0 %v1905
        %2102 = vmatprep.subr.mxu0 %v1910
        %2103 = vmatpush1.msra.mxu0 %v1909
        %2104 = vmatprep.subr.mxu0 %v1914
        %2105 = vmatpush1.msra.mxu0 %v1913
        %2106 = vmatprep.subr.mxu0 %v1918
        %2107 = vmatpush1.msra.mxu0 %v1917
        %2108 = vmatprep.subr.mxu0 %v1922
        %2109 = vmatpush1.msra.mxu0 %v1921
        %2110 = vmatprep.subr.mxu0 %v1926
        %2111 = vmatpush1.msra.mxu0 %v1925
        %2112 = vmatprep.subr.mxu0 %v1930
        %2113 = vmatpush1.msra.mxu0 %v1929
        %2114 = vmatprep.subr.mxu0 %v1934
        %2115 = vmatpush1.msra.mxu0 %v1933
        %2116 = vmatprep.subr.mxu0 %v1938
        %2117 = vmatpush1.msra.mxu0 %v1937
        %2118 = vmatprep.subr.mxu0 %v1942
        %2119 = vmatpush1.msra.mxu0 %v1941
        %2120 = vmatprep.subr.mxu0 %v1946
        %2121 = vmatpush1.msra.mxu0 %v1945
        %2122 = vmatprep.subr.mxu0 %v1950
        %2123 = vmatpush1.msra.mxu0 %v1949
        %2124 = vmatprep.subr.mxu0 %v1954
        %2125 = vmatpush1.msra.mxu0 %v1953
        %2126 = vmatprep.subr.mxu0 %v1958
        %2127 = vmatpush1.msra.mxu0 %v1957
        %2128 = vmatprep.subr.mxu0 %v1962
        %2129 = vmatpush1.msra.mxu0 %v1961
        %2130 = vmatprep.subr.mxu0 %v1966
        %2131 = vmatpush1.msra.mxu0 %v1965
        %2132 = vmatprep.subr.mxu0 %v1970
        %2133 = vmatpush1.msra.mxu0 %v1969
        %2134 = vmatprep.subr.mxu0 %v1974
        %2135 = vmatpush1.msra.mxu0 %v1973
        %2136 = vmatprep.mubr.f32.mxu0 %v2000
        %2137 = vmatmul.mubr.f32.gmra.mrb[0].mxu0 %v1998
        %v2138 = vpop.f32.mrb[0].mxu0
        %v2139 = vadd.f32 %v1989, %v2138
        %v2140 = vpop.f32.mrb[0].mxu0
        %v2141 = vadd.f32 %v1993, %v2140
        %2142 = vdwg.mxu0
        %v2143 = vxor.u32 %v2068, 2147483648
        %v2144 = vmul.f32 %v2143, 1.442695
        %v2145 = vpow.pop %v2144
        %v2146 = vadd.f32 %v2145, 1.0
        %v2147 = vrcp.pop %v2146
        %v2148 = vmul.f32 1.0, %v2147
        %v2149 = vxor.u32 %v2070, 2147483648
        %v2150 = vmul.f32 %v2149, 1.442695
        %v2151 = vpow.pop %v2150
        %v2152 = vadd.f32 %v2151, 1.0
        %v2153 = vrcp.pop %v2152
        %v2154 = vmul.f32 1.0, %v2153
        %v2155 = vtanh.pop %v2139
        %v2156 = vxor.u32 %v2141, 2147483648
        %v2157 = vmul.f32 %v2156, 1.442695
        %v2158 = vpow.pop %v2157
        %v2159 = vadd.f32 %v2158, 1.0
        %v2160 = vrcp.pop %v2159
        %v2161 = vmul.f32 1.0, %v2160
        %s2162 = scalar_lea.vmem [#allocation4], 8
        %v2163 = vld [vmem:[%s2162] sm:$0xff]
        %v2164 = vmul.f32 %v2154, %v2163
        %v2165 = vmul.f32 %v2148, %v2155
        %v2166 = vadd.f32 %v2164, %v2165
        %v2167 = vtanh.pop %v2166
        %v2168 = vmul.f32 %v2161, %v2167
        %2169 = vst [vmem:[%s2162] sm:$0xff] %v2166
        %2170 = vst [vmem:[%s1999] sm:$0xff] %v2168
        %2171 = vst [vmem:[#allocation2] sm:$0xff] %v2168
        %v2172 = vld [vmem:[%s635] sm:$0xff]
        %v2173 = vld [vmem:[%s1999] sm:$0xff]
        %2174 = vmatprep.subr.mxu0 %v1848
        %2175 = vmatpush1.msra.mxu0 %v1847
        %2176 = vmatprep.subr.mxu0 %v1852
        %2177 = vmatpush1.msra.mxu0 %v1851
        %2178 = vmatprep.subr.mxu0 %v1856
        %2179 = vmatpush1.msra.mxu0 %v1855
        %2180 = vmatprep.subr.mxu0 %v1860
        %2181 = vmatpush1.msra.mxu0 %v1859
        %2182 = vmatprep.subr.mxu0 %v1864
        %2183 = vmatpush1.msra.mxu0 %v1863
        %2184 = vmatprep.subr.mxu0 %v1868
        %2185 = vmatpush1.msra.mxu0 %v1867
        %2186 = vmatprep.subr.mxu0 %v1872
        %2187 = vmatpush1.msra.mxu0 %v1871
        %2188 = vmatprep.subr.mxu0 %v1876
        %2189 = vmatpush1.msra.mxu0 %v1875
        %2190 = vmatprep.subr.mxu0 %v1880
        %2191 = vmatpush1.msra.mxu0 %v1879
        %2192 = vmatprep.subr.mxu0 %v1884
        %2193 = vmatpush1.msra.mxu0 %v1883
        %2194 = vmatprep.subr.mxu0 %v1888
        %2195 = vmatpush1.msra.mxu0 %v1887
        %2196 = vmatprep.subr.mxu0 %v1892
        %2197 = vmatpush1.msra.mxu0 %v1891
        %2198 = vmatprep.subr.mxu0 %v1896
        %2199 = vmatpush1.msra.mxu0 %v1895
        %2200 = vmatprep.subr.mxu0 %v1900
        %2201 = vmatpush1.msra.mxu0 %v1899
        %2202 = vmatprep.subr.mxu0 %v1904
        %2203 = vmatpush1.msra.mxu0 %v1903
        %2204 = vmatprep.subr.mxu0 %v1908
        %2205 = vmatpush1.msra.mxu0 %v1907
        %2206 = vmatprep.subr.mxu0 %v1912
        %2207 = vmatpush1.msra.mxu0 %v1911
        %2208 = vmatprep.subr.mxu0 %v1916
        %2209 = vmatpush1.msra.mxu0 %v1915
        %2210 = vmatprep.subr.mxu0 %v1920
        %2211 = vmatpush1.msra.mxu0 %v1919
        %2212 = vmatprep.subr.mxu0 %v1924
        %2213 = vmatpush1.msra.mxu0 %v1923
        %2214 = vmatprep.subr.mxu0 %v1928
        %2215 = vmatpush1.msra.mxu0 %v1927
        %2216 = vmatprep.subr.mxu0 %v1932
        %2217 = vmatpush1.msra.mxu0 %v1931
        %2218 = vmatprep.subr.mxu0 %v1936
        %2219 = vmatpush1.msra.mxu0 %v1935
        %2220 = vmatprep.subr.mxu0 %v1940
        %2221 = vmatpush1.msra.mxu0 %v1939
        %2222 = vmatprep.subr.mxu0 %v1944
        %2223 = vmatpush1.msra.mxu0 %v1943
        %2224 = vmatprep.subr.mxu0 %v1948
        %2225 = vmatpush1.msra.mxu0 %v1947
        %2226 = vmatprep.subr.mxu0 %v1952
        %2227 = vmatpush1.msra.mxu0 %v1951
        %2228 = vmatprep.subr.mxu0 %v1956
        %2229 = vmatpush1.msra.mxu0 %v1955
        %2230 = vmatprep.subr.mxu0 %v1960
        %2231 = vmatpush1.msra.mxu0 %v1959
        %2232 = vmatprep.subr.mxu0 %v1964
        %2233 = vmatpush1.msra.mxu0 %v1963
        %2234 = vmatprep.subr.mxu0 %v1968
        %2235 = vmatpush1.msra.mxu0 %v1967
        %2236 = vmatprep.subr.mxu0 %v1972
        %2237 = vmatpush1.msra.mxu0 %v1971
        %2238 = vmatprep.mubr.f32.mxu0 %v2173
        %2239 = vmatmul.mubr.f32.gmra.mrb[0].mxu0 %v2172
        %v2240 = vpop.f32.mrb[0].mxu0
        %v2241 = vadd.f32 %v1981, %v2240
        %v2242 = vpop.f32.mrb[0].mxu0
        %v2243 = vadd.f32 %v1985, %v2242
        %2244 = vdwg.mxu0
        %2245 = vmatprep.subr.mxu0 %v1850
        %2246 = vmatpush1.msra.mxu0 %v1849
        %2247 = vmatprep.subr.mxu0 %v1854
        %2248 = vmatpush1.msra.mxu0 %v1853
        %2249 = vmatprep.subr.mxu0 %v1858
        %2250 = vmatpush1.msra.mxu0 %v1857
        %2251 = vmatprep.subr.mxu0 %v1862
        %2252 = vmatpush1.msra.mxu0 %v1861
        %2253 = vmatprep.subr.mxu0 %v1866
        %2254 = vmatpush1.msra.mxu0 %v1865
        %2255 = vmatprep.subr.mxu0 %v1870
        %2256 = vmatpush1.msra.mxu0 %v1869
        %2257 = vmatprep.subr.mxu0 %v1874
        %2258 = vmatpush1.msra.mxu0 %v1873
        %2259 = vmatprep.subr.mxu0 %v1878
        %2260 = vmatpush1.msra.mxu0 %v1877
        %2261 = vmatprep.subr.mxu0 %v1882
        %2262 = vmatpush1.msra.mxu0 %v1881
        %2263 = vmatprep.subr.mxu0 %v1886
        %2264 = vmatpush1.msra.mxu0 %v1885
        %2265 = vmatprep.subr.mxu0 %v1890
        %2266 = vmatpush1.msra.mxu0 %v1889
        %2267 = vmatprep.subr.mxu0 %v1894
        %2268 = vmatpush1.msra.mxu0 %v1893
        %2269 = vmatprep.subr.mxu0 %v1898
        %2270 = vmatpush1.msra.mxu0 %v1897
        %2271 = vmatprep.subr.mxu0 %v1902
        %2272 = vmatpush1.msra.mxu0 %v1901
        %2273 = vmatprep.subr.mxu0 %v1906
        %2274 = vmatpush1.msra.mxu0 %v1905
        %2275 = vmatprep.subr.mxu0 %v1910
        %2276 = vmatpush1.msra.mxu0 %v1909
        %2277 = vmatprep.subr.mxu0 %v1914
        %2278 = vmatpush1.msra.mxu0 %v1913
        %2279 = vmatprep.subr.mxu0 %v1918
        %2280 = vmatpush1.msra.mxu0 %v1917
        %2281 = vmatprep.subr.mxu0 %v1922
        %2282 = vmatpush1.msra.mxu0 %v1921
        %2283 = vmatprep.subr.mxu0 %v1926
        %2284 = vmatpush1.msra.mxu0 %v1925
        %2285 = vmatprep.subr.mxu0 %v1930
        %2286 = vmatpush1.msra.mxu0 %v1929
        %2287 = vmatprep.subr.mxu0 %v1934
        %2288 = vmatpush1.msra.mxu0 %v1933
        %2289 = vmatprep.subr.mxu0 %v1938
        %2290 = vmatpush1.msra.mxu0 %v1937
        %2291 = vmatprep.subr.mxu0 %v1942
        %2292 = vmatpush1.msra.mxu0 %v1941
        %2293 = vmatprep.subr.mxu0 %v1946
        %2294 = vmatpush1.msra.mxu0 %v1945
        %2295 = vmatprep.subr.mxu0 %v1950
        %2296 = vmatpush1.msra.mxu0 %v1949
        %2297 = vmatprep.subr.mxu0 %v1954
        %2298 = vmatpush1.msra.mxu0 %v1953
        %2299 = vmatprep.subr.mxu0 %v1958
        %2300 = vmatpush1.msra.mxu0 %v1957
        %2301 = vmatprep.subr.mxu0 %v1962
        %2302 = vmatpush1.msra.mxu0 %v1961
        %2303 = vmatprep.subr.mxu0 %v1966
        %2304 = vmatpush1.msra.mxu0 %v1965
        %2305 = vmatprep.subr.mxu0 %v1970
        %2306 = vmatpush1.msra.mxu0 %v1969
        %2307 = vmatprep.subr.mxu0 %v1974
        %2308 = vmatpush1.msra.mxu0 %v1973
        %2309 = vmatprep.mubr.f32.mxu0 %v2173
        %2310 = vmatmul.mubr.f32.gmra.mrb[0].mxu0 %v2172
        %v2311 = vpop.f32.mrb[0].mxu0
        %v2312 = vadd.f32 %v1989, %v2311
        %v2313 = vpop.f32.mrb[0].mxu0
        %v2314 = vadd.f32 %v1993, %v2313
        %2315 = vdwg.mxu0
        %v2316 = vxor.u32 %v2241, 2147483648
        %v2317 = vmul.f32 %v2316, 1.442695
        %v2318 = vpow.pop %v2317
        %v2319 = vadd.f32 %v2318, 1.0
        %v2320 = vrcp.pop %v2319
        %v2321 = vmul.f32 1.0, %v2320
        %v2322 = vxor.u32 %v2243, 2147483648
        %v2323 = vmul.f32 %v2322, 1.442695
        %v2324 = vpow.pop %v2323
        %v2325 = vadd.f32 %v2324, 1.0
        %v2326 = vrcp.pop %v2325
        %v2327 = vmul.f32 1.0, %v2326
        %v2328 = vtanh.pop %v2312
        %v2329 = vxor.u32 %v2314, 2147483648
        %v2330 = vmul.f32 %v2329, 1.442695
        %v2331 = vpow.pop %v2330
        %v2332 = vadd.f32 %v2331, 1.0
        %v2333 = vrcp.pop %v2332
        %v2334 = vmul.f32 1.0, %v2333
        %v2335 = vld [vmem:[%s2162] sm:$0xff]
        %v2336 = vmul.f32 %v2327, %v2335
        %v2337 = vmul.f32 %v2321, %v2328
        %v2338 = vadd.f32 %v2336, %v2337
        %v2339 = vtanh.pop %v2338
        %v2340 = vmul.f32 %v2334, %v2339
        %2341 = vst [vmem:[%s2162] sm:$0xff] %v2338
        %2342 = vst [vmem:[%s1999] sm:$0xff] %v2340
        %2343 = vst [vmem:[%s635] sm:$0xff] %v2340
        %v2344 = vld [vmem:[%s808] sm:$0xff]
        %v2345 = vld [vmem:[%s1999] sm:$0xff]
        %2346 = vmatprep.subr.mxu0 %v1848
        %2347 = vmatpush1.msra.mxu0 %v1847
        %2348 = vmatprep.subr.mxu0 %v1852
        %2349 = vmatpush1.msra.mxu0 %v1851
        %2350 = vmatprep.subr.mxu0 %v1856
        %2351 = vmatpush1.msra.mxu0 %v1855
        %2352 = vmatprep.subr.mxu0 %v1860
        %2353 = vmatpush1.msra.mxu0 %v1859
        %2354 = vmatprep.subr.mxu0 %v1864
        %2355 = vmatpush1.msra.mxu0 %v1863
        %2356 = vmatprep.subr.mxu0 %v1868
        %2357 = vmatpush1.msra.mxu0 %v1867
        %2358 = vmatprep.subr.mxu0 %v1872
        %2359 = vmatpush1.msra.mxu0 %v1871
        %2360 = vmatprep.subr.mxu0 %v1876
        %2361 = vmatpush1.msra.mxu0 %v1875
        %2362 = vmatprep.subr.mxu0 %v1880
        %2363 = vmatpush1.msra.mxu0 %v1879
        %2364 = vmatprep.subr.mxu0 %v1884
        %2365 = vmatpush1.msra.mxu0 %v1883
        %2366 = vmatprep.subr.mxu0 %v1888
        %2367 = vmatpush1.msra.mxu0 %v1887
        %2368 = vmatprep.subr.mxu0 %v1892
        %2369 = vmatpush1.msra.mxu0 %v1891
        %2370 = vmatprep.subr.mxu0 %v1896
        %2371 = vmatpush1.msra.mxu0 %v1895
        %2372 = vmatprep.subr.mxu0 %v1900
        %2373 = vmatpush1.msra.mxu0 %v1899
        %2374 = vmatprep.subr.mxu0 %v1904
        %2375 = vmatpush1.msra.mxu0 %v1903
        %2376 = vmatprep.subr.mxu0 %v1908
        %2377 = vmatpush1.msra.mxu0 %v1907
        %2378 = vmatprep.subr.mxu0 %v1912
        %2379 = vmatpush1.msra.mxu0 %v1911
        %2380 = vmatprep.subr.mxu0 %v1916
        %2381 = vmatpush1.msra.mxu0 %v1915
        %2382 = vmatprep.subr.mxu0 %v1920
        %2383 = vmatpush1.msra.mxu0 %v1919
        %2384 = vmatprep.subr.mxu0 %v1924
        %2385 = vmatpush1.msra.mxu0 %v1923
        %2386 = vmatprep.subr.mxu0 %v1928
        %2387 = vmatpush1.msra.mxu0 %v1927
        %2388 = vmatprep.subr.mxu0 %v1932
        %2389 = vmatpush1.msra.mxu0 %v1931
        %2390 = vmatprep.subr.mxu0 %v1936
        %2391 = vmatpush1.msra.mxu0 %v1935
        %2392 = vmatprep.subr.mxu0 %v1940
        %2393 = vmatpush1.msra.mxu0 %v1939
        %2394 = vmatprep.subr.mxu0 %v1944
        %2395 = vmatpush1.msra.mxu0 %v1943
        %2396 = vmatprep.subr.mxu0 %v1948
        %2397 = vmatpush1.msra.mxu0 %v1947
        %2398 = vmatprep.subr.mxu0 %v1952
        %2399 = vmatpush1.msra.mxu0 %v1951
        %2400 = vmatprep.subr.mxu0 %v1956
        %2401 = vmatpush1.msra.mxu0 %v1955
        %2402 = vmatprep.subr.mxu0 %v1960
        %2403 = vmatpush1.msra.mxu0 %v1959
        %2404 = vmatprep.subr.mxu0 %v1964
        %2405 = vmatpush1.msra.mxu0 %v1963
        %2406 = vmatprep.subr.mxu0 %v1968
        %2407 = vmatpush1.msra.mxu0 %v1967
        %2408 = vmatprep.subr.mxu0 %v1972
        %2409 = vmatpush1.msra.mxu0 %v1971
        %2410 = vmatprep.mubr.f32.mxu0 %v2345
        %2411 = vmatmul.mubr.f32.gmra.mrb[0].mxu0 %v2344
        %v2412 = vpop.f32.mrb[0].mxu0
        %v2413 = vadd.f32 %v1981, %v2412
        %v2414 = vpop.f32.mrb[0].mxu0
        %v2415 = vadd.f32 %v1985, %v2414
        %2416 = vdwg.mxu0
        %2417 = vmatprep.subr.mxu0 %v1850
        %2418 = vmatpush1.msra.mxu0 %v1849
        %2419 = vmatprep.subr.mxu0 %v1854
        %2420 = vmatpush1.msra.mxu0 %v1853
        %2421 = vmatprep.subr.mxu0 %v1858
        %2422 = vmatpush1.msra.mxu0 %v1857
        %2423 = vmatprep.subr.mxu0 %v1862
        %2424 = vmatpush1.msra.mxu0 %v1861
        %2425 = vmatprep.subr.mxu0 %v1866
        %2426 = vmatpush1.msra.mxu0 %v1865
        %2427 = vmatprep.subr.mxu0 %v1870
        %2428 = vmatpush1.msra.mxu0 %v1869
        %2429 = vmatprep.subr.mxu0 %v1874
        %2430 = vmatpush1.msra.mxu0 %v1873
        %2431 = vmatprep.subr.mxu0 %v1878
        %2432 = vmatpush1.msra.mxu0 %v1877
        %2433 = vmatprep.subr.mxu0 %v1882
        %2434 = vmatpush1.msra.mxu0 %v1881
        %2435 = vmatprep.subr.mxu0 %v1886
        %2436 = vmatpush1.msra.mxu0 %v1885
        %2437 = vmatprep.subr.mxu0 %v1890
        %2438 = vmatpush1.msra.mxu0 %v1889
        %2439 = vmatprep.subr.mxu0 %v1894
        %2440 = vmatpush1.msra.mxu0 %v1893
        %2441 = vmatprep.subr.mxu0 %v1898
        %2442 = vmatpush1.msra.mxu0 %v1897
        %2443 = vmatprep.subr.mxu0 %v1902
        %2444 = vmatpush1.msra.mxu0 %v1901
        %2445 = vmatprep.subr.mxu0 %v1906
        %2446 = vmatpush1.msra.mxu0 %v1905
        %2447 = vmatprep.subr.mxu0 %v1910
        %2448 = vmatpush1.msra.mxu0 %v1909
        %2449 = vmatprep.subr.mxu0 %v1914
        %2450 = vmatpush1.msra.mxu0 %v1913
        %2451 = vmatprep.subr.mxu0 %v1918
        %2452 = vmatpush1.msra.mxu0 %v1917
        %2453 = vmatprep.subr.mxu0 %v1922
        %2454 = vmatpush1.msra.mxu0 %v1921
        %2455 = vmatprep.subr.mxu0 %v1926
        %2456 = vmatpush1.msra.mxu0 %v1925
        %2457 = vmatprep.subr.mxu0 %v1930
        %2458 = vmatpush1.msra.mxu0 %v1929
        %2459 = vmatprep.subr.mxu0 %v1934
        %2460 = vmatpush1.msra.mxu0 %v1933
        %2461 = vmatprep.subr.mxu0 %v1938
        %2462 = vmatpush1.msra.mxu0 %v1937
        %2463 = vmatprep.subr.mxu0 %v1942
        %2464 = vmatpush1.msra.mxu0 %v1941
        %2465 = vmatprep.subr.mxu0 %v1946
        %2466 = vmatpush1.msra.mxu0 %v1945
        %2467 = vmatprep.subr.mxu0 %v1950
        %2468 = vmatpush1.msra.mxu0 %v1949
        %2469 = vmatprep.subr.mxu0 %v1954
        %2470 = vmatpush1.msra.mxu0 %v1953
        %2471 = vmatprep.subr.mxu0 %v1958
        %2472 = vmatpush1.msra.mxu0 %v1957
        %2473 = vmatprep.subr.mxu0 %v1962
        %2474 = vmatpush1.msra.mxu0 %v1961
        %2475 = vmatprep.subr.mxu0 %v1966
        %2476 = vmatpush1.msra.mxu0 %v1965
        %2477 = vmatprep.subr.mxu0 %v1970
        %2478 = vmatpush1.msra.mxu0 %v1969
        %2479 = vmatprep.subr.mxu0 %v1974
        %2480 = vmatpush1.msra.mxu0 %v1973
        %2481 = vmatprep.mubr.f32.mxu0 %v2345
        %2482 = vmatmul.mubr.f32.gmra.mrb[0].mxu0 %v2344
        %v2483 = vpop.f32.mrb[0].mxu0
        %v2484 = vadd.f32 %v1989, %v2483
        %v2485 = vpop.f32.mrb[0].mxu0
        %v2486 = vadd.f32 %v1993, %v2485
        %2487 = vdwg.mxu0
        %v2488 = vxor.u32 %v2413, 2147483648
        %v2489 = vmul.f32 %v2488, 1.442695
        %v2490 = vpow.pop %v2489
        %v2491 = vadd.f32 %v2490, 1.0
        %v2492 = vrcp.pop %v2491
        %v2493 = vmul.f32 1.0, %v2492
        %v2494 = vxor.u32 %v2415, 2147483648
        %v2495 = vmul.f32 %v2494, 1.442695
        %v2496 = vpow.pop %v2495
        %v2497 = vadd.f32 %v2496, 1.0
        %v2498 = vrcp.pop %v2497
        %v2499 = vmul.f32 1.0, %v2498
        %v2500 = vtanh.pop %v2484
        %v2501 = vxor.u32 %v2486, 2147483648
        %v2502 = vmul.f32 %v2501, 1.442695
        %v2503 = vpow.pop %v2502
        %v2504 = vadd.f32 %v2503, 1.0
        %v2505 = vrcp.pop %v2504
        %v2506 = vmul.f32 1.0, %v2505
        %v2507 = vld [vmem:[%s2162] sm:$0xff]
        %v2508 = vmul.f32 %v2499, %v2507
        %v2509 = vmul.f32 %v2493, %v2500
        %v2510 = vadd.f32 %v2508, %v2509
        %v2511 = vtanh.pop %v2510
        %v2512 = vmul.f32 %v2506, %v2511
        %2513 = vst [vmem:[%s2162] sm:$0xff] %v2510
        %2514 = vst [vmem:[%s1999] sm:$0xff] %v2512
        %2515 = vst [vmem:[%s808] sm:$0xff] %v2512
        %v2516 = vld [vmem:[%s981] sm:$0xff]
        %v2517 = vld [vmem:[%s1999] sm:$0xff]
        %2518 = vmatprep.subr.mxu0 %v1848
        %2519 = vmatpush1.msra.mxu0 %v1847
        %2520 = vmatprep.subr.mxu0 %v1852
        %2521 = vmatpush1.msra.mxu0 %v1851
        %2522 = vmatprep.subr.mxu0 %v1856
        %2523 = vmatpush1.msra.mxu0 %v1855
        %2524 = vmatprep.subr.mxu0 %v1860
        %2525 = vmatpush1.msra.mxu0 %v1859
        %2526 = vmatprep.subr.mxu0 %v1864
        %2527 = vmatpush1.msra.mxu0 %v1863
        %2528 = vmatprep.subr.mxu0 %v1868
        %2529 = vmatpush1.msra.mxu0 %v1867
        %2530 = vmatprep.subr.mxu0 %v1872
        %2531 = vmatpush1.msra.mxu0 %v1871
        %2532 = vmatprep.subr.mxu0 %v1876
        %2533 = vmatpush1.msra.mxu0 %v1875
        %2534 = vmatprep.subr.mxu0 %v1880
        %2535 = vmatpush1.msra.mxu0 %v1879
        %2536 = vmatprep.subr.mxu0 %v1884
        %2537 = vmatpush1.msra.mxu0 %v1883
        %2538 = vmatprep.subr.mxu0 %v1888
        %2539 = vmatpush1.msra.mxu0 %v1887
        %2540 = vmatprep.subr.mxu0 %v1892
        %2541 = vmatpush1.msra.mxu0 %v1891
        %2542 = vmatprep.subr.mxu0 %v1896
        %2543 = vmatpush1.msra.mxu0 %v1895
        %2544 = vmatprep.subr.mxu0 %v1900
        %2545 = vmatpush1.msra.mxu0 %v1899
        %2546 = vmatprep.subr.mxu0 %v1904
        %2547 = vmatpush1.msra.mxu0 %v1903
        %2548 = vmatprep.subr.mxu0 %v1908
        %2549 = vmatpush1.msra.mxu0 %v1907
        %2550 = vmatprep.subr.mxu0 %v1912
        %2551 = vmatpush1.msra.mxu0 %v1911
        %2552 = vmatprep.subr.mxu0 %v1916
        %2553 = vmatpush1.msra.mxu0 %v1915
        %2554 = vmatprep.subr.mxu0 %v1920
        %2555 = vmatpush1.msra.mxu0 %v1919
        %2556 = vmatprep.subr.mxu0 %v1924
        %2557 = vmatpush1.msra.mxu0 %v1923
        %2558 = vmatprep.subr.mxu0 %v1928
        %2559 = vmatpush1.msra.mxu0 %v1927
        %2560 = vmatprep.subr.mxu0 %v1932
        %2561 = vmatpush1.msra.mxu0 %v1931
        %2562 = vmatprep.subr.mxu0 %v1936
        %2563 = vmatpush1.msra.mxu0 %v1935
        %2564 = vmatprep.subr.mxu0 %v1940
        %2565 = vmatpush1.msra.mxu0 %v1939
        %2566 = vmatprep.subr.mxu0 %v1944
        %2567 = vmatpush1.msra.mxu0 %v1943
        %2568 = vmatprep.subr.mxu0 %v1948
        %2569 = vmatpush1.msra.mxu0 %v1947
        %2570 = vmatprep.subr.mxu0 %v1952
        %2571 = vmatpush1.msra.mxu0 %v1951
        %2572 = vmatprep.subr.mxu0 %v1956
        %2573 = vmatpush1.msra.mxu0 %v1955
        %2574 = vmatprep.subr.mxu0 %v1960
        %2575 = vmatpush1.msra.mxu0 %v1959
        %2576 = vmatprep.subr.mxu0 %v1964
        %2577 = vmatpush1.msra.mxu0 %v1963
        %2578 = vmatprep.subr.mxu0 %v1968
        %2579 = vmatpush1.msra.mxu0 %v1967
        %2580 = vmatprep.subr.mxu0 %v1972
        %2581 = vmatpush1.msra.mxu0 %v1971
        %2582 = vmatprep.mubr.f32.mxu0 %v2517
        %2583 = vmatmul.mubr.f32.gmra.mrb[0].mxu0 %v2516
        %v2584 = vpop.f32.mrb[0].mxu0
        %v2585 = vadd.f32 %v1981, %v2584
        %v2586 = vpop.f32.mrb[0].mxu0
        %v2587 = vadd.f32 %v1985, %v2586
        %2588 = vdwg.mxu0
        %2589 = vmatprep.subr.mxu0 %v1850
        %2590 = vmatpush1.msra.mxu0 %v1849
        %2591 = vmatprep.subr.mxu0 %v1854
        %2592 = vmatpush1.msra.mxu0 %v1853
        %2593 = vmatprep.subr.mxu0 %v1858
        %2594 = vmatpush1.msra.mxu0 %v1857
        %2595 = vmatprep.subr.mxu0 %v1862
        %2596 = vmatpush1.msra.mxu0 %v1861
        %2597 = vmatprep.subr.mxu0 %v1866
        %2598 = vmatpush1.msra.mxu0 %v1865
        %2599 = vmatprep.subr.mxu0 %v1870
        %2600 = vmatpush1.msra.mxu0 %v1869
        %2601 = vmatprep.subr.mxu0 %v1874
        %2602 = vmatpush1.msra.mxu0 %v1873
        %2603 = vmatprep.subr.mxu0 %v1878
        %2604 = vmatpush1.msra.mxu0 %v1877
        %2605 = vmatprep.subr.mxu0 %v1882
        %2606 = vmatpush1.msra.mxu0 %v1881
        %2607 = vmatprep.subr.mxu0 %v1886
        %2608 = vmatpush1.msra.mxu0 %v1885
        %2609 = vmatprep.subr.mxu0 %v1890
        %2610 = vmatpush1.msra.mxu0 %v1889
        %2611 = vmatprep.subr.mxu0 %v1894
        %2612 = vmatpush1.msra.mxu0 %v1893
        %2613 = vmatprep.subr.mxu0 %v1898
        %2614 = vmatpush1.msra.mxu0 %v1897
        %2615 = vmatprep.subr.mxu0 %v1902
        %2616 = vmatpush1.msra.mxu0 %v1901
        %2617 = vmatprep.subr.mxu0 %v1906
        %2618 = vmatpush1.msra.mxu0 %v1905
        %2619 = vmatprep.subr.mxu0 %v1910
        %2620 = vmatpush1.msra.mxu0 %v1909
        %2621 = vmatprep.subr.mxu0 %v1914
        %2622 = vmatpush1.msra.mxu0 %v1913
        %2623 = vmatprep.subr.mxu0 %v1918
        %2624 = vmatpush1.msra.mxu0 %v1917
        %2625 = vmatprep.subr.mxu0 %v1922
        %2626 = vmatpush1.msra.mxu0 %v1921
        %2627 = vmatprep.subr.mxu0 %v1926
        %2628 = vmatpush1.msra.mxu0 %v1925
        %2629 = vmatprep.subr.mxu0 %v1930
        %2630 = vmatpush1.msra.mxu0 %v1929
        %2631 = vmatprep.subr.mxu0 %v1934
        %2632 = vmatpush1.msra.mxu0 %v1933
        %2633 = vmatprep.subr.mxu0 %v1938
        %2634 = vmatpush1.msra.mxu0 %v1937
        %2635 = vmatprep.subr.mxu0 %v1942
        %2636 = vmatpush1.msra.mxu0 %v1941
        %2637 = vmatprep.subr.mxu0 %v1946
        %2638 = vmatpush1.msra.mxu0 %v1945
        %2639 = vmatprep.subr.mxu0 %v1950
        %2640 = vmatpush1.msra.mxu0 %v1949
        %2641 = vmatprep.subr.mxu0 %v1954
        %2642 = vmatpush1.msra.mxu0 %v1953
        %2643 = vmatprep.subr.mxu0 %v1958
        %2644 = vmatpush1.msra.mxu0 %v1957
        %2645 = vmatprep.subr.mxu0 %v1962
        %2646 = vmatpush1.msra.mxu0 %v1961
        %2647 = vmatprep.subr.mxu0 %v1966
        %2648 = vmatpush1.msra.mxu0 %v1965
        %2649 = vmatprep.subr.mxu0 %v1970
        %2650 = vmatpush1.msra.mxu0 %v1969
        %2651 = vmatprep.subr.mxu0 %v1974
        %2652 = vmatpush1.msra.mxu0 %v1973
        %2653 = vmatprep.mubr.f32.mxu0 %v2517
        %2654 = vmatmul.mubr.f32.gmra.mrb[0].mxu0 %v2516
        %v2655 = vpop.f32.mrb[0].mxu0
        %v2656 = vadd.f32 %v1989, %v2655
        %v2657 = vpop.f32.mrb[0].mxu0
        %v2658 = vadd.f32 %v1993, %v2657
        %2659 = vdwg.mxu0
        %v2660 = vxor.u32 %v2585, 2147483648
        %v2661 = vmul.f32 %v2660, 1.442695
        %v2662 = vpow.pop %v2661
        %v2663 = vadd.f32 %v2662, 1.0
        %v2664 = vrcp.pop %v2663
        %v2665 = vmul.f32 1.0, %v2664
        %v2666 = vxor.u32 %v2587, 2147483648
        %v2667 = vmul.f32 %v2666, 1.442695
        %v2668 = vpow.pop %v2667
        %v2669 = vadd.f32 %v2668, 1.0
        %v2670 = vrcp.pop %v2669
        %v2671 = vmul.f32 1.0, %v2670
        %v2672 = vtanh.pop %v2656
        %v2673 = vxor.u32 %v2658, 2147483648
        %v2674 = vmul.f32 %v2673, 1.442695
        %v2675 = vpow.pop %v2674
        %v2676 = vadd.f32 %v2675, 1.0
        %v2677 = vrcp.pop %v2676
        %v2678 = vmul.f32 1.0, %v2677
        %v2679 = vld [vmem:[%s2162] sm:$0xff]
        %v2680 = vmul.f32 %v2671, %v2679
        %v2681 = vmul.f32 %v2665, %v2672
        %v2682 = vadd.f32 %v2680, %v2681
        %v2683 = vtanh.pop %v2682
        %v2684 = vmul.f32 %v2678, %v2683
        %2685 = vst [vmem:[%s2162] sm:$0xff] %v2682
        %2686 = vst [vmem:[%s1999] sm:$0xff] %v2684
        %2687 = vst [vmem:[%s981] sm:$0xff] %v2684
        %v2688 = vld [vmem:[%s1154] sm:$0xff]
        %v2689 = vld [vmem:[%s1999] sm:$0xff]
        %2690 = vmatprep.subr.mxu0 %v1848
        %2691 = vmatpush1.msra.mxu0 %v1847
        %2692 = vmatprep.subr.mxu0 %v1852
        %2693 = vmatpush1.msra.mxu0 %v1851
        %2694 = vmatprep.subr.mxu0 %v1856
        %2695 = vmatpush1.msra.mxu0 %v1855
        %2696 = vmatprep.subr.mxu0 %v1860
        %2697 = vmatpush1.msra.mxu0 %v1859
        %2698 = vmatprep.subr.mxu0 %v1864
        %2699 = vmatpush1.msra.mxu0 %v1863
        %2700 = vmatprep.subr.mxu0 %v1868
        %2701 = vmatpush1.msra.mxu0 %v1867
        %2702 = vmatprep.subr.mxu0 %v1872
        %2703 = vmatpush1.msra.mxu0 %v1871
        %2704 = vmatprep.subr.mxu0 %v1876
        %2705 = vmatpush1.msra.mxu0 %v1875
        %2706 = vmatprep.subr.mxu0 %v1880
        %2707 = vmatpush1.msra.mxu0 %v1879
        %2708 = vmatprep.subr.mxu0 %v1884
        %2709 = vmatpush1.msra.mxu0 %v1883
        %2710 = vmatprep.subr.mxu0 %v1888
        %2711 = vmatpush1.msra.mxu0 %v1887
        %2712 = vmatprep.subr.mxu0 %v1892
        %2713 = vmatpush1.msra.mxu0 %v1891
        %2714 = vmatprep.subr.mxu0 %v1896
        %2715 = vmatpush1.msra.mxu0 %v1895
        %2716 = vmatprep.subr.mxu0 %v1900
        %2717 = vmatpush1.msra.mxu0 %v1899
        %2718 = vmatprep.subr.mxu0 %v1904
        %2719 = vmatpush1.msra.mxu0 %v1903
        %2720 = vmatprep.subr.mxu0 %v1908
        %2721 = vmatpush1.msra.mxu0 %v1907
        %2722 = vmatprep.subr.mxu0 %v1912
        %2723 = vmatpush1.msra.mxu0 %v1911
        %2724 = vmatprep.subr.mxu0 %v1916
        %2725 = vmatpush1.msra.mxu0 %v1915
        %2726 = vmatprep.subr.mxu0 %v1920
        %2727 = vmatpush1.msra.mxu0 %v1919
        %2728 = vmatprep.subr.mxu0 %v1924
        %2729 = vmatpush1.msra.mxu0 %v1923
        %2730 = vmatprep.subr.mxu0 %v1928
        %2731 = vmatpush1.msra.mxu0 %v1927
        %2732 = vmatprep.subr.mxu0 %v1932
        %2733 = vmatpush1.msra.mxu0 %v1931
        %2734 = vmatprep.subr.mxu0 %v1936
        %2735 = vmatpush1.msra.mxu0 %v1935
        %2736 = vmatprep.subr.mxu0 %v1940
        %2737 = vmatpush1.msra.mxu0 %v1939
        %2738 = vmatprep.subr.mxu0 %v1944
        %2739 = vmatpush1.msra.mxu0 %v1943
        %2740 = vmatprep.subr.mxu0 %v1948
        %2741 = vmatpush1.msra.mxu0 %v1947
        %2742 = vmatprep.subr.mxu0 %v1952
        %2743 = vmatpush1.msra.mxu0 %v1951
        %2744 = vmatprep.subr.mxu0 %v1956
        %2745 = vmatpush1.msra.mxu0 %v1955
        %2746 = vmatprep.subr.mxu0 %v1960
        %2747 = vmatpush1.msra.mxu0 %v1959
        %2748 = vmatprep.subr.mxu0 %v1964
        %2749 = vmatpush1.msra.mxu0 %v1963
        %2750 = vmatprep.subr.mxu0 %v1968
        %2751 = vmatpush1.msra.mxu0 %v1967
        %2752 = vmatprep.subr.mxu0 %v1972
        %2753 = vmatpush1.msra.mxu0 %v1971
        %2754 = vmatprep.mubr.f32.mxu0 %v2689
        %2755 = vmatmul.mubr.f32.gmra.mrb[0].mxu0 %v2688
        %v2756 = vpop.f32.mrb[0].mxu0
        %v2757 = vadd.f32 %v1981, %v2756
        %v2758 = vpop.f32.mrb[0].mxu0
        %v2759 = vadd.f32 %v1985, %v2758
        %2760 = vdwg.mxu0
        %2761 = vmatprep.subr.mxu0 %v1850
        %2762 = vmatpush1.msra.mxu0 %v1849
        %2763 = vmatprep.subr.mxu0 %v1854
        %2764 = vmatpush1.msra.mxu0 %v1853
        %2765 = vmatprep.subr.mxu0 %v1858
        %2766 = vmatpush1.msra.mxu0 %v1857
        %2767 = vmatprep.subr.mxu0 %v1862
        %2768 = vmatpush1.msra.mxu0 %v1861
        %2769 = vmatprep.subr.mxu0 %v1866
        %2770 = vmatpush1.msra.mxu0 %v1865
        %2771 = vmatprep.subr.mxu0 %v1870
        %2772 = vmatpush1.msra.mxu0 %v1869
        %2773 = vmatprep.subr.mxu0 %v1874
        %2774 = vmatpush1.msra.mxu0 %v1873
        %2775 = vmatprep.subr.mxu0 %v1878
        %2776 = vmatpush1.msra.mxu0 %v1877
        %2777 = vmatprep.subr.mxu0 %v1882
        %2778 = vmatpush1.msra.mxu0 %v1881
        %2779 = vmatprep.subr.mxu0 %v1886
        %2780 = vmatpush1.msra.mxu0 %v1885
        %2781 = vmatprep.subr.mxu0 %v1890
        %2782 = vmatpush1.msra.mxu0 %v1889
        %2783 = vmatprep.subr.mxu0 %v1894
        %2784 = vmatpush1.msra.mxu0 %v1893
        %2785 = vmatprep.subr.mxu0 %v1898
        %2786 = vmatpush1.msra.mxu0 %v1897
        %2787 = vmatprep.subr.mxu0 %v1902
        %2788 = vmatpush1.msra.mxu0 %v1901
        %2789 = vmatprep.subr.mxu0 %v1906
        %2790 = vmatpush1.msra.mxu0 %v1905
        %2791 = vmatprep.subr.mxu0 %v1910
        %2792 = vmatpush1.msra.mxu0 %v1909
        %2793 = vmatprep.subr.mxu0 %v1914
        %2794 = vmatpush1.msra.mxu0 %v1913
        %2795 = vmatprep.subr.mxu0 %v1918
        %2796 = vmatpush1.msra.mxu0 %v1917
        %2797 = vmatprep.subr.mxu0 %v1922
        %2798 = vmatpush1.msra.mxu0 %v1921
        %2799 = vmatprep.subr.mxu0 %v1926
        %2800 = vmatpush1.msra.mxu0 %v1925
        %2801 = vmatprep.subr.mxu0 %v1930
        %2802 = vmatpush1.msra.mxu0 %v1929
        %2803 = vmatprep.subr.mxu0 %v1934
        %2804 = vmatpush1.msra.mxu0 %v1933
        %2805 = vmatprep.subr.mxu0 %v1938
        %2806 = vmatpush1.msra.mxu0 %v1937
        %2807 = vmatprep.subr.mxu0 %v1942
        %2808 = vmatpush1.msra.mxu0 %v1941
        %2809 = vmatprep.subr.mxu0 %v1946
        %2810 = vmatpush1.msra.mxu0 %v1945
        %2811 = vmatprep.subr.mxu0 %v1950
        %2812 = vmatpush1.msra.mxu0 %v1949
        %2813 = vmatprep.subr.mxu0 %v1954
        %2814 = vmatpush1.msra.mxu0 %v1953
        %2815 = vmatprep.subr.mxu0 %v1958
        %2816 = vmatpush1.msra.mxu0 %v1957
        %2817 = vmatprep.subr.mxu0 %v1962
        %2818 = vmatpush1.msra.mxu0 %v1961
        %2819 = vmatprep.subr.mxu0 %v1966
        %2820 = vmatpush1.msra.mxu0 %v1965
        %2821 = vmatprep.subr.mxu0 %v1970
        %2822 = vmatpush1.msra.mxu0 %v1969
        %2823 = vmatprep.subr.mxu0 %v1974
        %2824 = vmatpush1.msra.mxu0 %v1973
        %2825 = vmatprep.mubr.f32.mxu0 %v2689
        %2826 = vmatmul.mubr.f32.gmra.mrb[0].mxu0 %v2688
        %v2827 = vpop.f32.mrb[0].mxu0
        %v2828 = vadd.f32 %v1989, %v2827
        %v2829 = vpop.f32.mrb[0].mxu0
        %v2830 = vadd.f32 %v1993, %v2829
        %2831 = vdwg.mxu0
        %v2832 = vxor.u32 %v2757, 2147483648
        %v2833 = vmul.f32 %v2832, 1.442695
        %v2834 = vpow.pop %v2833
        %v2835 = vadd.f32 %v2834, 1.0
        %v2836 = vrcp.pop %v2835
        %v2837 = vmul.f32 1.0, %v2836
        %v2838 = vxor.u32 %v2759, 2147483648
        %v2839 = vmul.f32 %v2838, 1.442695
        %v2840 = vpow.pop %v2839
        %v2841 = vadd.f32 %v2840, 1.0
        %v2842 = vrcp.pop %v2841
        %v2843 = vmul.f32 1.0, %v2842
        %v2844 = vtanh.pop %v2828
        %v2845 = vxor.u32 %v2830, 2147483648
        %v2846 = vmul.f32 %v2845, 1.442695
        %v2847 = vpow.pop %v2846
        %v2848 = vadd.f32 %v2847, 1.0
        %v2849 = vrcp.pop %v2848
        %v2850 = vmul.f32 1.0, %v2849
        %v2851 = vld [vmem:[%s2162] sm:$0xff]
        %v2852 = vmul.f32 %v2843, %v2851
        %v2853 = vmul.f32 %v2837, %v2844
        %v2854 = vadd.f32 %v2852, %v2853
        %v2855 = vtanh.pop %v2854
        %v2856 = vmul.f32 %v2850, %v2855
        %2857 = vst [vmem:[%s2162] sm:$0xff] %v2854
        %2858 = vst [vmem:[%s1999] sm:$0xff] %v2856
        %2859 = vst [vmem:[%s1154] sm:$0xff] %v2856
        %v2860 = vld [vmem:[%s1327] sm:$0xff]
        %v2861 = vld [vmem:[%s1999] sm:$0xff]
        %2862 = vmatprep.subr.mxu0 %v1848
        %2863 = vmatpush1.msra.mxu0 %v1847
        %2864 = vmatprep.subr.mxu0 %v1852
        %2865 = vmatpush1.msra.mxu0 %v1851
        %2866 = vmatprep.subr.mxu0 %v1856
        %2867 = vmatpush1.msra.mxu0 %v1855
        %2868 = vmatprep.subr.mxu0 %v1860
        %2869 = vmatpush1.msra.mxu0 %v1859
        %2870 = vmatprep.subr.mxu0 %v1864
        %2871 = vmatpush1.msra.mxu0 %v1863
        %2872 = vmatprep.subr.mxu0 %v1868
        %2873 = vmatpush1.msra.mxu0 %v1867
        %2874 = vmatprep.subr.mxu0 %v1872
        %2875 = vmatpush1.msra.mxu0 %v1871
        %2876 = vmatprep.subr.mxu0 %v1876
        %2877 = vmatpush1.msra.mxu0 %v1875
        %2878 = vmatprep.subr.mxu0 %v1880
        %2879 = vmatpush1.msra.mxu0 %v1879
        %2880 = vmatprep.subr.mxu0 %v1884
        %2881 = vmatpush1.msra.mxu0 %v1883
        %2882 = vmatprep.subr.mxu0 %v1888
        %2883 = vmatpush1.msra.mxu0 %v1887
        %2884 = vmatprep.subr.mxu0 %v1892
        %2885 = vmatpush1.msra.mxu0 %v1891
        %2886 = vmatprep.subr.mxu0 %v1896
        %2887 = vmatpush1.msra.mxu0 %v1895
        %2888 = vmatprep.subr.mxu0 %v1900
        %2889 = vmatpush1.msra.mxu0 %v1899
        %2890 = vmatprep.subr.mxu0 %v1904
        %2891 = vmatpush1.msra.mxu0 %v1903
        %2892 = vmatprep.subr.mxu0 %v1908
        %2893 = vmatpush1.msra.mxu0 %v1907
        %2894 = vmatprep.subr.mxu0 %v1912
        %2895 = vmatpush1.msra.mxu0 %v1911
        %2896 = vmatprep.subr.mxu0 %v1916
        %2897 = vmatpush1.msra.mxu0 %v1915
        %2898 = vmatprep.subr.mxu0 %v1920
        %2899 = vmatpush1.msra.mxu0 %v1919
        %2900 = vmatprep.subr.mxu0 %v1924
        %2901 = vmatpush1.msra.mxu0 %v1923
        %2902 = vmatprep.subr.mxu0 %v1928
        %2903 = vmatpush1.msra.mxu0 %v1927
        %2904 = vmatprep.subr.mxu0 %v1932
        %2905 = vmatpush1.msra.mxu0 %v1931
        %2906 = vmatprep.subr.mxu0 %v1936
        %2907 = vmatpush1.msra.mxu0 %v1935
        %2908 = vmatprep.subr.mxu0 %v1940
        %2909 = vmatpush1.msra.mxu0 %v1939
        %2910 = vmatprep.subr.mxu0 %v1944
        %2911 = vmatpush1.msra.mxu0 %v1943
        %2912 = vmatprep.subr.mxu0 %v1948
        %2913 = vmatpush1.msra.mxu0 %v1947
        %2914 = vmatprep.subr.mxu0 %v1952
        %2915 = vmatpush1.msra.mxu0 %v1951
        %2916 = vmatprep.subr.mxu0 %v1956
        %2917 = vmatpush1.msra.mxu0 %v1955
        %2918 = vmatprep.subr.mxu0 %v1960
        %2919 = vmatpush1.msra.mxu0 %v1959
        %2920 = vmatprep.subr.mxu0 %v1964
        %2921 = vmatpush1.msra.mxu0 %v1963
        %2922 = vmatprep.subr.mxu0 %v1968
        %2923 = vmatpush1.msra.mxu0 %v1967
        %2924 = vmatprep.subr.mxu0 %v1972
        %2925 = vmatpush1.msra.mxu0 %v1971
        %2926 = vmatprep.mubr.f32.mxu0 %v2861
        %2927 = vmatmul.mubr.f32.gmra.mrb[0].mxu0 %v2860
        %v2928 = vpop.f32.mrb[0].mxu0
        %v2929 = vadd.f32 %v1981, %v2928
        %v2930 = vpop.f32.mrb[0].mxu0
        %v2931 = vadd.f32 %v1985, %v2930
        %2932 = vdwg.mxu0
        %2933 = vmatprep.subr.mxu0 %v1850
        %2934 = vmatpush1.msra.mxu0 %v1849
        %2935 = vmatprep.subr.mxu0 %v1854
        %2936 = vmatpush1.msra.mxu0 %v1853
        %2937 = vmatprep.subr.mxu0 %v1858
        %2938 = vmatpush1.msra.mxu0 %v1857
        %2939 = vmatprep.subr.mxu0 %v1862
        %2940 = vmatpush1.msra.mxu0 %v1861
        %2941 = vmatprep.subr.mxu0 %v1866
        %2942 = vmatpush1.msra.mxu0 %v1865
        %2943 = vmatprep.subr.mxu0 %v1870
        %2944 = vmatpush1.msra.mxu0 %v1869
        %2945 = vmatprep.subr.mxu0 %v1874
        %2946 = vmatpush1.msra.mxu0 %v1873
        %2947 = vmatprep.subr.mxu0 %v1878
        %2948 = vmatpush1.msra.mxu0 %v1877
        %2949 = vmatprep.subr.mxu0 %v1882
        %2950 = vmatpush1.msra.mxu0 %v1881
        %2951 = vmatprep.subr.mxu0 %v1886
        %2952 = vmatpush1.msra.mxu0 %v1885
        %2953 = vmatprep.subr.mxu0 %v1890
        %2954 = vmatpush1.msra.mxu0 %v1889
        %2955 = vmatprep.subr.mxu0 %v1894
        %2956 = vmatpush1.msra.mxu0 %v1893
        %2957 = vmatprep.subr.mxu0 %v1898
        %2958 = vmatpush1.msra.mxu0 %v1897
        %2959 = vmatprep.subr.mxu0 %v1902
        %2960 = vmatpush1.msra.mxu0 %v1901
        %2961 = vmatprep.subr.mxu0 %v1906
        %2962 = vmatpush1.msra.mxu0 %v1905
        %2963 = vmatprep.subr.mxu0 %v1910
        %2964 = vmatpush1.msra.mxu0 %v1909
        %2965 = vmatprep.subr.mxu0 %v1914
        %2966 = vmatpush1.msra.mxu0 %v1913
        %2967 = vmatprep.subr.mxu0 %v1918
        %2968 = vmatpush1.msra.mxu0 %v1917
        %2969 = vmatprep.subr.mxu0 %v1922
        %2970 = vmatpush1.msra.mxu0 %v1921
        %2971 = vmatprep.subr.mxu0 %v1926
        %2972 = vmatpush1.msra.mxu0 %v1925
        %2973 = vmatprep.subr.mxu0 %v1930
        %2974 = vmatpush1.msra.mxu0 %v1929
        %2975 = vmatprep.subr.mxu0 %v1934
        %2976 = vmatpush1.msra.mxu0 %v1933
        %2977 = vmatprep.subr.mxu0 %v1938
        %2978 = vmatpush1.msra.mxu0 %v1937
        %2979 = vmatprep.subr.mxu0 %v1942
        %2980 = vmatpush1.msra.mxu0 %v1941
        %2981 = vmatprep.subr.mxu0 %v1946
        %2982 = vmatpush1.msra.mxu0 %v1945
        %2983 = vmatprep.subr.mxu0 %v1950
        %2984 = vmatpush1.msra.mxu0 %v1949
        %2985 = vmatprep.subr.mxu0 %v1954
        %2986 = vmatpush1.msra.mxu0 %v1953
        %2987 = vmatprep.subr.mxu0 %v1958
        %2988 = vmatpush1.msra.mxu0 %v1957
        %2989 = vmatprep.subr.mxu0 %v1962
        %2990 = vmatpush1.msra.mxu0 %v1961
        %2991 = vmatprep.subr.mxu0 %v1966
        %2992 = vmatpush1.msra.mxu0 %v1965
        %2993 = vmatprep.subr.mxu0 %v1970
        %2994 = vmatpush1.msra.mxu0 %v1969
        %2995 = vmatprep.subr.mxu0 %v1974
        %2996 = vmatpush1.msra.mxu0 %v1973
        %2997 = vmatprep.mubr.f32.mxu0 %v2861
        %2998 = vmatmul.mubr.f32.gmra.mrb[0].mxu0 %v2860
        %v2999 = vpop.f32.mrb[0].mxu0
        %v3000 = vadd.f32 %v1989, %v2999
        %v3001 = vpop.f32.mrb[0].mxu0
        %v3002 = vadd.f32 %v1993, %v3001
        %3003 = vdwg.mxu0
        %v3004 = vxor.u32 %v2929, 2147483648
        %v3005 = vmul.f32 %v3004, 1.442695
        %v3006 = vpow.pop %v3005
        %v3007 = vadd.f32 %v3006, 1.0
        %v3008 = vrcp.pop %v3007
        %v3009 = vmul.f32 1.0, %v3008
        %v3010 = vxor.u32 %v2931, 2147483648
        %v3011 = vmul.f32 %v3010, 1.442695
        %v3012 = vpow.pop %v3011
        %v3013 = vadd.f32 %v3012, 1.0
        %v3014 = vrcp.pop %v3013
        %v3015 = vmul.f32 1.0, %v3014
        %v3016 = vtanh.pop %v3000
        %v3017 = vxor.u32 %v3002, 2147483648
        %v3018 = vmul.f32 %v3017, 1.442695
        %v3019 = vpow.pop %v3018
        %v3020 = vadd.f32 %v3019, 1.0
        %v3021 = vrcp.pop %v3020
        %v3022 = vmul.f32 1.0, %v3021
        %v3023 = vld [vmem:[%s2162] sm:$0xff]
        %v3024 = vmul.f32 %v3015, %v3023
        %v3025 = vmul.f32 %v3009, %v3016
        %v3026 = vadd.f32 %v3024, %v3025
        %v3027 = vtanh.pop %v3026
        %v3028 = vmul.f32 %v3022, %v3027
        %3029 = vst [vmem:[%s2162] sm:$0xff] %v3026
        %3030 = vst [vmem:[%s1999] sm:$0xff] %v3028
        %3031 = vst [vmem:[%s1327] sm:$0xff] %v3028
        %v3032 = vld [vmem:[%s1500] sm:$0xff]
        %v3033 = vld [vmem:[%s1999] sm:$0xff]
        %3034 = vmatprep.subr.mxu0 %v1848
        %3035 = vmatpush1.msra.mxu0 %v1847
        %3036 = vmatprep.subr.mxu0 %v1852
        %3037 = vmatpush1.msra.mxu0 %v1851
        %3038 = vmatprep.subr.mxu0 %v1856
        %3039 = vmatpush1.msra.mxu0 %v1855
        %3040 = vmatprep.subr.mxu0 %v1860
        %3041 = vmatpush1.msra.mxu0 %v1859
        %3042 = vmatprep.subr.mxu0 %v1864
        %3043 = vmatpush1.msra.mxu0 %v1863
        %3044 = vmatprep.subr.mxu0 %v1868
        %3045 = vmatpush1.msra.mxu0 %v1867
        %3046 = vmatprep.subr.mxu0 %v1872
        %3047 = vmatpush1.msra.mxu0 %v1871
        %3048 = vmatprep.subr.mxu0 %v1876
        %3049 = vmatpush1.msra.mxu0 %v1875
        %3050 = vmatprep.subr.mxu0 %v1880
        %3051 = vmatpush1.msra.mxu0 %v1879
        %3052 = vmatprep.subr.mxu0 %v1884
        %3053 = vmatpush1.msra.mxu0 %v1883
        %3054 = vmatprep.subr.mxu0 %v1888
        %3055 = vmatpush1.msra.mxu0 %v1887
        %3056 = vmatprep.subr.mxu0 %v1892
        %3057 = vmatpush1.msra.mxu0 %v1891
        %3058 = vmatprep.subr.mxu0 %v1896
        %3059 = vmatpush1.msra.mxu0 %v1895
        %3060 = vmatprep.subr.mxu0 %v1900
        %3061 = vmatpush1.msra.mxu0 %v1899
        %3062 = vmatprep.subr.mxu0 %v1904
        %3063 = vmatpush1.msra.mxu0 %v1903
        %3064 = vmatprep.subr.mxu0 %v1908
        %3065 = vmatpush1.msra.mxu0 %v1907
        %3066 = vmatprep.subr.mxu0 %v1912
        %3067 = vmatpush1.msra.mxu0 %v1911
        %3068 = vmatprep.subr.mxu0 %v1916
        %3069 = vmatpush1.msra.mxu0 %v1915
        %3070 = vmatprep.subr.mxu0 %v1920
        %3071 = vmatpush1.msra.mxu0 %v1919
        %3072 = vmatprep.subr.mxu0 %v1924
        %3073 = vmatpush1.msra.mxu0 %v1923
        %3074 = vmatprep.subr.mxu0 %v1928
        %3075 = vmatpush1.msra.mxu0 %v1927
        %3076 = vmatprep.subr.mxu0 %v1932
        %3077 = vmatpush1.msra.mxu0 %v1931
        %3078 = vmatprep.subr.mxu0 %v1936
        %3079 = vmatpush1.msra.mxu0 %v1935
        %3080 = vmatprep.subr.mxu0 %v1940
        %3081 = vmatpush1.msra.mxu0 %v1939
        %3082 = vmatprep.subr.mxu0 %v1944
        %3083 = vmatpush1.msra.mxu0 %v1943
        %3084 = vmatprep.subr.mxu0 %v1948
        %3085 = vmatpush1.msra.mxu0 %v1947
        %3086 = vmatprep.subr.mxu0 %v1952
        %3087 = vmatpush1.msra.mxu0 %v1951
        %3088 = vmatprep.subr.mxu0 %v1956
        %3089 = vmatpush1.msra.mxu0 %v1955
        %3090 = vmatprep.subr.mxu0 %v1960
        %3091 = vmatpush1.msra.mxu0 %v1959
        %3092 = vmatprep.subr.mxu0 %v1964
        %3093 = vmatpush1.msra.mxu0 %v1963
        %3094 = vmatprep.subr.mxu0 %v1968
        %3095 = vmatpush1.msra.mxu0 %v1967
        %3096 = vmatprep.subr.mxu0 %v1972
        %3097 = vmatpush1.msra.mxu0 %v1971
        %3098 = vmatprep.mubr.f32.mxu0 %v3033
        %3099 = vmatmul.mubr.f32.gmra.mrb[0].mxu0 %v3032
        %v3100 = vpop.f32.mrb[0].mxu0
        %v3101 = vadd.f32 %v1981, %v3100
        %v3102 = vpop.f32.mrb[0].mxu0
        %v3103 = vadd.f32 %v1985, %v3102
        %3104 = vdwg.mxu0
        %3105 = vmatprep.subr.mxu0 %v1850
        %3106 = vmatpush1.msra.mxu0 %v1849
        %3107 = vmatprep.subr.mxu0 %v1854
        %3108 = vmatpush1.msra.mxu0 %v1853
        %3109 = vmatprep.subr.mxu0 %v1858
        %3110 = vmatpush1.msra.mxu0 %v1857
        %3111 = vmatprep.subr.mxu0 %v1862
        %3112 = vmatpush1.msra.mxu0 %v1861
        %3113 = vmatprep.subr.mxu0 %v1866
        %3114 = vmatpush1.msra.mxu0 %v1865
        %3115 = vmatprep.subr.mxu0 %v1870
        %3116 = vmatpush1.msra.mxu0 %v1869
        %3117 = vmatprep.subr.mxu0 %v1874
        %3118 = vmatpush1.msra.mxu0 %v1873
        %3119 = vmatprep.subr.mxu0 %v1878
        %3120 = vmatpush1.msra.mxu0 %v1877
        %3121 = vmatprep.subr.mxu0 %v1882
        %3122 = vmatpush1.msra.mxu0 %v1881
        %3123 = vmatprep.subr.mxu0 %v1886
        %3124 = vmatpush1.msra.mxu0 %v1885
        %3125 = vmatprep.subr.mxu0 %v1890
        %3126 = vmatpush1.msra.mxu0 %v1889
        %3127 = vmatprep.subr.mxu0 %v1894
        %3128 = vmatpush1.msra.mxu0 %v1893
        %3129 = vmatprep.subr.mxu0 %v1898
        %3130 = vmatpush1.msra.mxu0 %v1897
        %3131 = vmatprep.subr.mxu0 %v1902
        %3132 = vmatpush1.msra.mxu0 %v1901
        %3133 = vmatprep.subr.mxu0 %v1906
        %3134 = vmatpush1.msra.mxu0 %v1905
        %3135 = vmatprep.subr.mxu0 %v1910
        %3136 = vmatpush1.msra.mxu0 %v1909
        %3137 = vmatprep.subr.mxu0 %v1914
        %3138 = vmatpush1.msra.mxu0 %v1913
        %3139 = vmatprep.subr.mxu0 %v1918
        %3140 = vmatpush1.msra.mxu0 %v1917
        %3141 = vmatprep.subr.mxu0 %v1922
        %3142 = vmatpush1.msra.mxu0 %v1921
        %3143 = vmatprep.subr.mxu0 %v1926
        %3144 = vmatpush1.msra.mxu0 %v1925
        %3145 = vmatprep.subr.mxu0 %v1930
        %3146 = vmatpush1.msra.mxu0 %v1929
        %3147 = vmatprep.subr.mxu0 %v1934
        %3148 = vmatpush1.msra.mxu0 %v1933
        %3149 = vmatprep.subr.mxu0 %v1938
        %3150 = vmatpush1.msra.mxu0 %v1937
        %3151 = vmatprep.subr.mxu0 %v1942
        %3152 = vmatpush1.msra.mxu0 %v1941
        %3153 = vmatprep.subr.mxu0 %v1946
        %3154 = vmatpush1.msra.mxu0 %v1945
        %3155 = vmatprep.subr.mxu0 %v1950
        %3156 = vmatpush1.msra.mxu0 %v1949
        %3157 = vmatprep.subr.mxu0 %v1954
        %3158 = vmatpush1.msra.mxu0 %v1953
        %3159 = vmatprep.subr.mxu0 %v1958
        %3160 = vmatpush1.msra.mxu0 %v1957
        %3161 = vmatprep.subr.mxu0 %v1962
        %3162 = vmatpush1.msra.mxu0 %v1961
        %3163 = vmatprep.subr.mxu0 %v1966
        %3164 = vmatpush1.msra.mxu0 %v1965
        %3165 = vmatprep.subr.mxu0 %v1970
        %3166 = vmatpush1.msra.mxu0 %v1969
        %3167 = vmatprep.subr.mxu0 %v1974
        %3168 = vmatpush1.msra.mxu0 %v1973
        %3169 = vmatprep.mubr.f32.mxu0 %v3033
        %3170 = vmatmul.mubr.f32.gmra.mrb[0].mxu0 %v3032
        %v3171 = vpop.f32.mrb[0].mxu0
        %v3172 = vadd.f32 %v1989, %v3171
        %v3173 = vpop.f32.mrb[0].mxu0
        %v3174 = vadd.f32 %v1993, %v3173
        %3175 = vdwg.mxu0
        %v3176 = vxor.u32 %v3101, 2147483648
        %v3177 = vmul.f32 %v3176, 1.442695
        %v3178 = vpow.pop %v3177
        %v3179 = vadd.f32 %v3178, 1.0
        %v3180 = vrcp.pop %v3179
        %v3181 = vmul.f32 1.0, %v3180
        %v3182 = vxor.u32 %v3103, 2147483648
        %v3183 = vmul.f32 %v3182, 1.442695
        %v3184 = vpow.pop %v3183
        %v3185 = vadd.f32 %v3184, 1.0
        %v3186 = vrcp.pop %v3185
        %v3187 = vmul.f32 1.0, %v3186
        %v3188 = vtanh.pop %v3172
        %v3189 = vxor.u32 %v3174, 2147483648
        %v3190 = vmul.f32 %v3189, 1.442695
        %v3191 = vpow.pop %v3190
        %v3192 = vadd.f32 %v3191, 1.0
        %v3193 = vrcp.pop %v3192
        %v3194 = vmul.f32 1.0, %v3193
        %v3195 = vld [vmem:[%s2162] sm:$0xff]
        %v3196 = vmul.f32 %v3187, %v3195
        %v3197 = vmul.f32 %v3181, %v3188
        %v3198 = vadd.f32 %v3196, %v3197
        %v3199 = vtanh.pop %v3198
        %v3200 = vmul.f32 %v3194, %v3199
        %3201 = vst [vmem:[%s2162] sm:$0xff] %v3198
        %3202 = vst [vmem:[%s1999] sm:$0xff] %v3200
        %3203 = vst [vmem:[%s1500] sm:$0xff] %v3200
        %v3204 = vld [vmem:[%s1673] sm:$0xff]
        %v3205 = vld [vmem:[%s1999] sm:$0xff]
        %3206 = vmatprep.subr.mxu0 %v1848
        %3207 = vmatpush1.msra.mxu0 %v1847
        %3208 = vmatprep.subr.mxu0 %v1852
        %3209 = vmatpush1.msra.mxu0 %v1851
        %3210 = vmatprep.subr.mxu0 %v1856
        %3211 = vmatpush1.msra.mxu0 %v1855
        %3212 = vmatprep.subr.mxu0 %v1860
        %3213 = vmatpush1.msra.mxu0 %v1859
        %3214 = vmatprep.subr.mxu0 %v1864
        %3215 = vmatpush1.msra.mxu0 %v1863
        %3216 = vmatprep.subr.mxu0 %v1868
        %3217 = vmatpush1.msra.mxu0 %v1867
        %3218 = vmatprep.subr.mxu0 %v1872
        %3219 = vmatpush1.msra.mxu0 %v1871
        %3220 = vmatprep.subr.mxu0 %v1876
        %3221 = vmatpush1.msra.mxu0 %v1875
        %3222 = vmatprep.subr.mxu0 %v1880
        %3223 = vmatpush1.msra.mxu0 %v1879
        %3224 = vmatprep.subr.mxu0 %v1884
        %3225 = vmatpush1.msra.mxu0 %v1883
        %3226 = vmatprep.subr.mxu0 %v1888
        %3227 = vmatpush1.msra.mxu0 %v1887
        %3228 = vmatprep.subr.mxu0 %v1892
        %3229 = vmatpush1.msra.mxu0 %v1891
        %3230 = vmatprep.subr.mxu0 %v1896
        %3231 = vmatpush1.msra.mxu0 %v1895
        %3232 = vmatprep.subr.mxu0 %v1900
        %3233 = vmatpush1.msra.mxu0 %v1899
        %3234 = vmatprep.subr.mxu0 %v1904
        %3235 = vmatpush1.msra.mxu0 %v1903
        %3236 = vmatprep.subr.mxu0 %v1908
        %3237 = vmatpush1.msra.mxu0 %v1907
        %3238 = vmatprep.subr.mxu0 %v1912
        %3239 = vmatpush1.msra.mxu0 %v1911
        %3240 = vmatprep.subr.mxu0 %v1916
        %3241 = vmatpush1.msra.mxu0 %v1915
        %3242 = vmatprep.subr.mxu0 %v1920
        %3243 = vmatpush1.msra.mxu0 %v1919
        %3244 = vmatprep.subr.mxu0 %v1924
        %3245 = vmatpush1.msra.mxu0 %v1923
        %3246 = vmatprep.subr.mxu0 %v1928
        %3247 = vmatpush1.msra.mxu0 %v1927
        %3248 = vmatprep.subr.mxu0 %v1932
        %3249 = vmatpush1.msra.mxu0 %v1931
        %3250 = vmatprep.subr.mxu0 %v1936
        %3251 = vmatpush1.msra.mxu0 %v1935
        %3252 = vmatprep.subr.mxu0 %v1940
        %3253 = vmatpush1.msra.mxu0 %v1939
        %3254 = vmatprep.subr.mxu0 %v1944
        %3255 = vmatpush1.msra.mxu0 %v1943
        %3256 = vmatprep.subr.mxu0 %v1948
        %3257 = vmatpush1.msra.mxu0 %v1947
        %3258 = vmatprep.subr.mxu0 %v1952
        %3259 = vmatpush1.msra.mxu0 %v1951
        %3260 = vmatprep.subr.mxu0 %v1956
        %3261 = vmatpush1.msra.mxu0 %v1955
        %3262 = vmatprep.subr.mxu0 %v1960
        %3263 = vmatpush1.msra.mxu0 %v1959
        %3264 = vmatprep.subr.mxu0 %v1964
        %3265 = vmatpush1.msra.mxu0 %v1963
        %3266 = vmatprep.subr.mxu0 %v1968
        %3267 = vmatpush1.msra.mxu0 %v1967
        %3268 = vmatprep.subr.mxu0 %v1972
        %3269 = vmatpush1.msra.mxu0 %v1971
        %3270 = vmatprep.mubr.f32.mxu0 %v3205
        %3271 = vmatmul.mubr.f32.gmra.mrb[0].mxu0 %v3204
        %v3272 = vpop.f32.mrb[0].mxu0
        %v3273 = vadd.f32 %v1981, %v3272
        %v3274 = vpop.f32.mrb[0].mxu0
        %v3275 = vadd.f32 %v1985, %v3274
        %3276 = vdwg.mxu0
        %3277 = vmatprep.subr.mxu0 %v1850
        %3278 = vmatpush1.msra.mxu0 %v1849
        %3279 = vmatprep.subr.mxu0 %v1854
        %3280 = vmatpush1.msra.mxu0 %v1853
        %3281 = vmatprep.subr.mxu0 %v1858
        %3282 = vmatpush1.msra.mxu0 %v1857
        %3283 = vmatprep.subr.mxu0 %v1862
        %3284 = vmatpush1.msra.mxu0 %v1861
        %3285 = vmatprep.subr.mxu0 %v1866
        %3286 = vmatpush1.msra.mxu0 %v1865
        %3287 = vmatprep.subr.mxu0 %v1870
        %3288 = vmatpush1.msra.mxu0 %v1869
        %3289 = vmatprep.subr.mxu0 %v1874
        %3290 = vmatpush1.msra.mxu0 %v1873
        %3291 = vmatprep.subr.mxu0 %v1878
        %3292 = vmatpush1.msra.mxu0 %v1877
        %3293 = vmatprep.subr.mxu0 %v1882
        %3294 = vmatpush1.msra.mxu0 %v1881
        %3295 = vmatprep.subr.mxu0 %v1886
        %3296 = vmatpush1.msra.mxu0 %v1885
        %3297 = vmatprep.subr.mxu0 %v1890
        %3298 = vmatpush1.msra.mxu0 %v1889
        %3299 = vmatprep.subr.mxu0 %v1894
        %3300 = vmatpush1.msra.mxu0 %v1893
        %3301 = vmatprep.subr.mxu0 %v1898
        %3302 = vmatpush1.msra.mxu0 %v1897
        %3303 = vmatprep.subr.mxu0 %v1902
        %3304 = vmatpush1.msra.mxu0 %v1901
        %3305 = vmatprep.subr.mxu0 %v1906
        %3306 = vmatpush1.msra.mxu0 %v1905
        %3307 = vmatprep.subr.mxu0 %v1910
        %3308 = vmatpush1.msra.mxu0 %v1909
        %3309 = vmatprep.subr.mxu0 %v1914
        %3310 = vmatpush1.msra.mxu0 %v1913
        %3311 = vmatprep.subr.mxu0 %v1918
        %3312 = vmatpush1.msra.mxu0 %v1917
        %3313 = vmatprep.subr.mxu0 %v1922
        %3314 = vmatpush1.msra.mxu0 %v1921
        %3315 = vmatprep.subr.mxu0 %v1926
        %3316 = vmatpush1.msra.mxu0 %v1925
        %3317 = vmatprep.subr.mxu0 %v1930
        %3318 = vmatpush1.msra.mxu0 %v1929
        %3319 = vmatprep.subr.mxu0 %v1934
        %3320 = vmatpush1.msra.mxu0 %v1933
        %3321 = vmatprep.subr.mxu0 %v1938
        %3322 = vmatpush1.msra.mxu0 %v1937
        %3323 = vmatprep.subr.mxu0 %v1942
        %3324 = vmatpush1.msra.mxu0 %v1941
        %3325 = vmatprep.subr.mxu0 %v1946
        %3326 = vmatpush1.msra.mxu0 %v1945
        %3327 = vmatprep.subr.mxu0 %v1950
        %3328 = vmatpush1.msra.mxu0 %v1949
        %3329 = vmatprep.subr.mxu0 %v1954
        %3330 = vmatpush1.msra.mxu0 %v1953
        %3331 = vmatprep.subr.mxu0 %v1958
        %3332 = vmatpush1.msra.mxu0 %v1957
        %3333 = vmatprep.subr.mxu0 %v1962
        %3334 = vmatpush1.msra.mxu0 %v1961
        %3335 = vmatprep.subr.mxu0 %v1966
        %3336 = vmatpush1.msra.mxu0 %v1965
        %3337 = vmatprep.subr.mxu0 %v1970
        %3338 = vmatpush1.msra.mxu0 %v1969
        %3339 = vmatprep.subr.mxu0 %v1974
        %3340 = vmatpush1.msra.mxu0 %v1973
        %3341 = vmatprep.mubr.f32.mxu0 %v3205
        %3342 = vmatmul.mubr.f32.gmra.mrb[0].mxu0 %v3204
        %v3343 = vpop.f32.mrb[0].mxu0
        %v3344 = vadd.f32 %v1989, %v3343
        %v3345 = vpop.f32.mrb[0].mxu0
        %v3346 = vadd.f32 %v1993, %v3345
        %3347 = vdwg.mxu0
        %v3348 = vxor.u32 %v3273, 2147483648
        %v3349 = vmul.f32 %v3348, 1.442695
        %v3350 = vpow.pop %v3349
        %v3351 = vadd.f32 %v3350, 1.0
        %v3352 = vrcp.pop %v3351
        %v3353 = vmul.f32 1.0, %v3352
        %v3354 = vxor.u32 %v3275, 2147483648
        %v3355 = vmul.f32 %v3354, 1.442695
        %v3356 = vpow.pop %v3355
        %v3357 = vadd.f32 %v3356, 1.0
        %v3358 = vrcp.pop %v3357
        %v3359 = vmul.f32 1.0, %v3358
        %v3360 = vtanh.pop %v3344
        %v3361 = vxor.u32 %v3346, 2147483648
        %v3362 = vmul.f32 %v3361, 1.442695
        %v3363 = vpow.pop %v3362
        %v3364 = vadd.f32 %v3363, 1.0
        %v3365 = vrcp.pop %v3364
        %v3366 = vmul.f32 1.0, %v3365
        %v3367 = vld [vmem:[%s2162] sm:$0xff]
        %v3368 = vmul.f32 %v3359, %v3367
        %v3369 = vmul.f32 %v3353, %v3360
        %v3370 = vadd.f32 %v3368, %v3369
        %v3371 = vtanh.pop %v3370
        %v3372 = vmul.f32 %v3366, %v3371
        %3373 = vst [vmem:[%s2162] sm:$0xff] %v3370
        %3374 = vst [vmem:[%s1999] sm:$0xff] %v3372
        %3375 = vst [vmem:[%s1673] sm:$0xff] %v3372
        %v3376 = vld [vmem:[#allocation2] sm:$0xff]
        %v3377 = vld [vmem:[#allocation2 + $0x8] sm:$0xff]
        %v3378 = vld [vmem:[#allocation2 + $0x10] sm:$0xff]
        %v3379 = vld [vmem:[#allocation2 + $0x18] sm:$0xff]
        %v3380 = vld [vmem:[#allocation2 + $0x20] sm:$0xff]
        %v3381 = vld [vmem:[#allocation2 + $0x28] sm:$0xff]
        %v3382 = vld [vmem:[#allocation2 + $0x30] sm:$0xff]
        %v3383 = vld [vmem:[#allocation2 + $0x38] sm:$0xff]
        %v3384 = vld [vmem:[#allocation11] sm:$0xff]
        %v3385 = vld [vmem:[#allocation11 + $0x8] sm:$0xff]
        %v3386 = vld [vmem:[#allocation11 + $0x10] sm:$0xff]
        %v3387 = vld [vmem:[#allocation11 + $0x18] sm:$0xff]
        %v3388 = vld [vmem:[#allocation11 + $0x20] sm:$0xff]
        %v3389 = vld [vmem:[#allocation11 + $0x28] sm:$0xff]
        %v3390 = vld [vmem:[#allocation11 + $0x30] sm:$0xff]
        %v3391 = vld [vmem:[#allocation11 + $0x38] sm:$0xff]
        %v3392 = vld [vmem:[#allocation11 + $0x40] sm:$0xff]
        %v3393 = vld [vmem:[#allocation11 + $0x48] sm:$0xff]
        %v3394 = vld [vmem:[#allocation11 + $0x50] sm:$0xff]
        %v3395 = vld [vmem:[#allocation11 + $0x58] sm:$0xff]
        %v3396 = vld [vmem:[#allocation11 + $0x60] sm:$0xff]
        %v3397 = vld [vmem:[#allocation11 + $0x68] sm:$0xff]
        %v3398 = vld [vmem:[#allocation11 + $0x70] sm:$0xff]
        %v3399 = vld [vmem:[#allocation11 + $0x78] sm:$0xff]
        %v3400 = vld [vmem:[%s4] sm:$0x1]
        %v3402 = vlaneseq
        %v3403 = vshrl.u32 %v3402, 7
        %v3404 = vsub.s32 0, %v3403
        %v3405 = vrot.slane %v3400, %v3404
        %3407 = vmatprep.subr.mxu0 0.0
        %3408 = vmatpush1.msra.mxu0 %v3384
        %3409 = vmatprep.subr.mxu0 0.0
        %3410 = vmatpush1.msra.mxu0 %v3385
        %3411 = vmatprep.subr.mxu0 0.0
        %3412 = vmatpush1.msra.mxu0 %v3386
        %3413 = vmatprep.subr.mxu0 0.0
        %3414 = vmatpush1.msra.mxu0 %v3387
        %3415 = vmatprep.subr.mxu0 0.0
        %3416 = vmatpush1.msra.mxu0 %v3388
        %3417 = vmatprep.subr.mxu0 0.0
        %3418 = vmatpush1.msra.mxu0 %v3389
        %3419 = vmatprep.subr.mxu0 0.0
        %3420 = vmatpush1.msra.mxu0 %v3390
        %3421 = vmatprep.subr.mxu0 0.0
        %3422 = vmatpush1.msra.mxu0 %v3391
        %3423 = vmatprep.subr.mxu0 0.0
        %3424 = vmatpush1.msra.mxu0 %v3392
        %3425 = vmatprep.subr.mxu0 0.0
        %3426 = vmatpush1.msra.mxu0 %v3393
        %3427 = vmatprep.subr.mxu0 0.0
        %3428 = vmatpush1.msra.mxu0 %v3394
        %3429 = vmatprep.subr.mxu0 0.0
        %3430 = vmatpush1.msra.mxu0 %v3395
        %3431 = vmatprep.subr.mxu0 0.0
        %3432 = vmatpush1.msra.mxu0 %v3396
        %3433 = vmatprep.subr.mxu0 0.0
        %3434 = vmatpush1.msra.mxu0 %v3397
        %3435 = vmatprep.subr.mxu0 0.0
        %3436 = vmatpush1.msra.mxu0 %v3398
        %3437 = vmatprep.subr.mxu0 0.0
        %3438 = vmatpush1.msra.mxu0 %v3399
        %3439 = vmatprep.subr.mxu0 0.0
        %3440 = vmatpush1.msra.mxu0 0.0
        %3441 = vmatprep.subr.mxu0 0.0
        %3442 = vmatpush1.msra.mxu0 0.0
        %3443 = vmatprep.subr.mxu0 0.0
        %3444 = vmatpush1.msra.mxu0 0.0
        %3445 = vmatprep.subr.mxu0 0.0
        %3446 = vmatpush1.msra.mxu0 0.0
        %3447 = vmatprep.subr.mxu0 0.0
        %3448 = vmatpush1.msra.mxu0 0.0
        %3449 = vmatprep.subr.mxu0 0.0
        %3450 = vmatpush1.msra.mxu0 0.0
        %3451 = vmatprep.subr.mxu0 0.0
        %3452 = vmatpush1.msra.mxu0 0.0
        %3453 = vmatprep.subr.mxu0 0.0
        %3454 = vmatpush1.msra.mxu0 0.0
        %3455 = vmatprep.subr.mxu0 0.0
        %3456 = vmatpush1.msra.mxu0 0.0
        %3457 = vmatprep.subr.mxu0 0.0
        %3458 = vmatpush1.msra.mxu0 0.0
        %3459 = vmatprep.subr.mxu0 0.0
        %3460 = vmatpush1.msra.mxu0 0.0
        %3461 = vmatprep.subr.mxu0 0.0
        %3462 = vmatpush1.msra.mxu0 0.0
        %3463 = vmatprep.subr.mxu0 0.0
        %3464 = vmatpush1.msra.mxu0 0.0
        %3465 = vmatprep.subr.mxu0 0.0
        %3466 = vmatpush1.msra.mxu0 0.0
        %3467 = vmatprep.subr.mxu0 0.0
        %3468 = vmatpush1.msra.mxu0 0.0
        %3469 = vmatprep.subr.mxu0 0.0
        %3470 = vmatpush1.msra.mxu0 0.0
        %3471 = vmatprep.mubr.f32.mxu0 0.0
        %3472 = vmatmul.mubr.f32.gmra.mrb[0].mxu0 %v3376
        %v3473 = vpop.f32.mrb[0].mxu0
        %v3474 = vadd.f32 %v3405, %v3473
        %v3475 = vpop.f32.mrb[0].mxu0
        %3476 = vmatprep.mubr.f32.mxu0 0.0
        %3477 = vmatmul.mubr.f32.gmra.mrb[0].mxu0 %v3377
        %v3478 = vpop.f32.mrb[0].mxu0
        %v3479 = vadd.f32 %v3405, %v3478
        %v3480 = vpop.f32.mrb[0].mxu0
        %3481 = vmatprep.mubr.f32.mxu0 0.0
        %3482 = vmatmul.mubr.f32.gmra.mrb[0].mxu0 %v3378
        %v3483 = vpop.f32.mrb[0].mxu0
        %v3484 = vadd.f32 %v3405, %v3483
        %v3485 = vpop.f32.mrb[0].mxu0
        %3486 = vmatprep.mubr.f32.mxu0 0.0
        %3487 = vmatmul.mubr.f32.gmra.mrb[0].mxu0 %v3379
        %v3488 = vpop.f32.mrb[0].mxu0
        %v3489 = vadd.f32 %v3405, %v3488
        %v3490 = vpop.f32.mrb[0].mxu0
        %3491 = vmatprep.mubr.f32.mxu0 0.0
        %3492 = vmatmul.mubr.f32.gmra.mrb[0].mxu0 %v3380
        %v3493 = vpop.f32.mrb[0].mxu0
        %v3494 = vadd.f32 %v3405, %v3493
        %v3495 = vpop.f32.mrb[0].mxu0
        %3496 = vmatprep.mubr.f32.mxu0 0.0
        %3497 = vmatmul.mubr.f32.gmra.mrb[0].mxu0 %v3381
        %v3498 = vpop.f32.mrb[0].mxu0
        %v3499 = vadd.f32 %v3405, %v3498
        %v3500 = vpop.f32.mrb[0].mxu0
        %3501 = vmatprep.mubr.f32.mxu0 0.0
        %3502 = vmatmul.mubr.f32.gmra.mrb[0].mxu0 %v3382
        %v3503 = vpop.f32.mrb[0].mxu0
        %v3504 = vadd.f32 %v3405, %v3503
        %v3505 = vpop.f32.mrb[0].mxu0
        %3506 = vmatprep.mubr.f32.mxu0 0.0
        %3507 = vmatmul.mubr.f32.gmra.mrb[0].mxu0 %v3383
        %v3508 = vpop.f32.mrb[0].mxu0
        %v3509 = vadd.f32 %v3405, %v3508
        %v3510 = vpop.f32.mrb[0].mxu0
        %3511 = vdwg.mxu0
        %3512 = vst [vmem:[%s286] sm:$0xff] %v3474
        %3513 = vst [vmem:[%s286 + $0x8] sm:$0xff] %v3479
        %3514 = vst [vmem:[%s286 + $0x10] sm:$0xff] %v3484
        %3515 = vst [vmem:[%s286 + $0x18] sm:$0xff] %v3489
        %3516 = vst [vmem:[%s286 + $0x20] sm:$0xff] %v3494
        %3517 = vst [vmem:[%s286 + $0x28] sm:$0xff] %v3499
        %3518 = vst [vmem:[%s286 + $0x30] sm:$0xff] %v3504
        %3519 = vst [vmem:[%s286 + $0x38] sm:$0xff] %v3509
        %s3520 = sand.u32 %s142, 1
        %s3521 = scalar_lea.sflag [#allocation7], %s3520
        %s3522 = sand.u32 %s142, 1
        %s3523 = smul.addr %s3522, 64
        %s3524 = scalar_lea.vmem [#allocation13], %s3523
        // Predicated region
        $region61: #{tpu_custom_call.1} parent=39 // pred_check
          %p3525 = pneg %p152
        $region62: #{tpu_custom_call.1} parent=39 // pred_check_branch
          %3527 = sbr.rel (%p3525) target = $region64
        $region63: #{tpu_custom_call.1} parent=39 // pred_region
          %s3528 = smul.u32 8, %s24
          %s3530 = ssub.s32 1024, 1024
          %3531 = vsyncadd %s3521, %s3530
          %s3532 = smul.addr %s3528, 128
          %s3533 = scalar_lea.hbm %s5, %s3532
          %s3534 = sshll.u32 %s3524, 4
          %s3535 = int_to_ptr.vmem [resolvable:$true] %s3534
          %3540 = dma.vmem_to_hbm [thread:$0]  %s3535, 1024, %s3533, %s3521, 128, 128, 8
        $region64: #{tpu_custom_call.1} parent=39 // pred_fallthru
          _
      $region40: #{tpu_custom_call.1} parent=5 // pred_fallthru
        _
      %p3541 = scmp.le.s32.totalorder 2, %s19
      // Predicated region
      $region65: #{tpu_custom_call.1} parent=5 // pred_check
        %p3542 = pneg %p3541
      $region66: #{tpu_custom_call.1} parent=5 // pred_check_branch
        %3544 = sbr.rel (%p3542) target = $region68
      $region67: #{tpu_custom_call.1} parent=5 // pred_region
        %s3545 = ssub.s32 %s19, 2
        // Predicated region
        $region69: #{tpu_custom_call.1} parent=67 // pred_check
          %p3546 = pneg %p158
        $region70: #{tpu_custom_call.1} parent=67 // pred_check_branch
          %3548 = sbr.rel (%p3546) target = $region72
        $region71: #{tpu_custom_call.1} parent=67 // pred_region
          %s3549 = sand.u32 %s143, 1
          %s3550 = scalar_lea.sflag [#allocation7], %s3549
          %s3551 = sand.u32 %s143, 1
          %s3552 = smul.addr %s3551, 64
          %s3553 = scalar_lea.vmem [#allocation13], %s3552
          %3554 = dma.done %s3550, 1024
        $region72: #{tpu_custom_call.1} parent=67 // pred_fallthru
          _
      $region68: #{tpu_custom_call.1} parent=5 // pred_fallthru
        _
    $region6: #{tpu_custom_call.1} parent=1 // loop_footer
      %s23 = sadd.s32 1, %s19
    $region7: #{tpu_custom_call.1} parent=1 // loop_footer_branch
      %18 = sbr.rel target = $region3
    $region8: #{tpu_custom_call.1} parent=1 // loop_exit
      _
    %3555 = vsyncpa [#allocation6], 1
    %s3556 = scalar_lea.sflag [#allocation6], 1
    %3557 = vsyncpa %s3556, 1
    %3558 = vsyncpa [#allocation9], 1
    %3559 = vsyncpa [#allocation12], 1
    %3560 = vsyncpa [#allocation7], 1
    %s3561 = scalar_lea.sflag [#allocation7], 1
    %3562 = vsyncpa %s3561, 1

</llo_original>
